<compile_context>
chip_gen: v7x
topology: tpu7x:2x2x1
jax: 0.10.0
libtpu: 0.0.40
codegen_flags: <defaults>
</compile_context>

<pallas_src>
import functools

import jax
import jax.numpy as jnp
from jax.experimental import pallas as pl
from jax.experimental.pallas import tpu as pltpu


def _round_up(n, m):
    return ((n + m - 1) // m) * m


def fused_gru_kernel(x_ref, wih_ref, whh_ref, bih_ref, bhh_ref, out_ref,
                     h_ref, gi_ref):
    """All GRU layers + all timesteps in one kernel invocation.

    x_ref:   (T, Bp, P)   time-major, zero-padded input
    wih_ref: (L, P, 3P)   per-layer W_ih^T, gate blocks at 128-aligned offsets
    whh_ref: (L, P, 3P)   per-layer W_hh^T
    bih_ref: (L, 1, 3P)   per-layer input bias
    bhh_ref: (L, 1, 3P)   per-layer hidden bias
    out_ref: (T, Bp, P)   last-layer output; also reused (VMEM-resident) as the
                          intermediate input between layers
    h_ref:   (Bp, P)      hidden-state scratch
    gi_ref:  (T, Bp, 3P)  hoisted input->hidden pre-activations scratch
    """
    T, Bp, P = x_ref.shape
    L = wih_ref.shape[0]

    for layer in range(L):  # static unroll over layers
        wih = wih_ref[layer]   # (P, 3P)
        whh = whh_ref[layer]   # (P, 3P)
        bih = bih_ref[layer]   # (1, 3P)
        bhh = bhh_ref[layer]   # (1, 3P)

        # ---- Hoisted, non-recurrent part: gi = X @ W_ih^T + b_ih for all t
        # as one big MXU matmul (off the serial critical path).  For layer > 0
        # the previous layer's output (still resident in out_ref) is the input;
        # it is fully consumed here before the recurrence overwrites out_ref.
        layer_in = x_ref[...] if layer == 0 else out_ref[...]     # (T, Bp, P)
        gi_flat = jnp.dot(layer_in.reshape(T * Bp, P), wih,
                          preferred_element_type=jnp.float32) + bih
        gi_ref[...] = gi_flat.reshape(T, Bp, 3 * P)

        # ---- Serial recurrence: only h @ W_hh^T + gate math per step.
        h_ref[...] = jnp.zeros_like(h_ref)                        # h0 = 0

        def step(t, carry):
            h_prev = h_ref[...]                                   # (Bp, P)
            gi = gi_ref[t]                                        # (Bp, 3P)
            gh = jnp.dot(h_prev, whh,
                         preferred_element_type=jnp.float32) + bhh
            # PyTorch gate order: r, z, n — each in its own 128-lane slot.
            r = jax.nn.sigmoid(gi[:, 0:P] + gh[:, 0:P])
            z = jax.nn.sigmoid(gi[:, P:2 * P] + gh[:, P:2 * P])
            n = jnp.tanh(gi[:, 2 * P:3 * P] + r * gh[:, 2 * P:3 * P])
            h_new = (1.0 - z) * n + z * h_prev
            h_ref[...] = h_new
            out_ref[t] = h_new
            return carry

        jax.lax.fori_loop(0, T, step, 0, unroll=True)


def fused_gru_forward(x_tbp, wih_p, whh_p, bih_p, bhh_p):
    T, Bp, P = x_tbp.shape
    return pl.pallas_call(
        fused_gru_kernel,
        out_shape=jax.ShapeDtypeStruct((T, Bp, P), jnp.float32),
        in_specs=[pl.BlockSpec(memory_space=pltpu.MemorySpace.VMEM)] * 5,
        out_specs=pl.BlockSpec(memory_space=pltpu.MemorySpace.VMEM),
        scratch_shapes=[
            pltpu.VMEM((Bp, P), jnp.float32),          # hidden state
            pltpu.VMEM((T, Bp, 3 * P), jnp.float32),   # hoisted gi for all t
        ],
    )(x_tbp, wih_p, whh_p, bih_p, bhh_p)


@functools.partial(jax.jit, static_argnames=("hidden_size", "P"))
def _gru_apply(x_bti, wih_p, whh_p, bih_p, bhh_p, hidden_size, P):
    B, T, I = x_bti.shape
    Bp = _round_up(max(B, 8), 8)
    # Pad batch to a full sublane group and features to 128 lanes; go
    # time-major for clean leading-axis indexing inside the kernel.
    x_p = jnp.zeros((T, Bp, P), jnp.float32)
    x_p = x_p.at[:, :B, :I].set(
        jnp.transpose(x_bti.astype(jnp.float32), (1, 0, 2)))
    out_p = fused_gru_forward(x_p, wih_p, whh_p, bih_p, bhh_p)  # (T, Bp, P)
    # Back to PyTorch batch_first layout, dropping the zero padding.
    return jnp.transpose(out_p[:, :B, :hidden_size], (1, 0, 2))


class GRUModelPallas:
    """Mirrors GRUModel.forward: multi-layer GRU, returns (B, T, hidden)."""

    def __init__(self, input_size, hidden_size, num_layers, num_classes, key):
        self.input_size = input_size
        self.hidden_size = hidden_size
        self.num_layers = num_layers
        k = 1.0 / (hidden_size ** 0.5)

        # Common lane-padded width for the input dim, hidden dim and each gate
        # slot (keeps stacked per-layer weights a single uniform array).
        self.P = max(_round_up(input_size, 128), _round_up(hidden_size, 128))
        P, H, L = self.P, hidden_size, num_layers

        wih_p = jnp.zeros((L, P, 3 * P), jnp.float32)
        whh_p = jnp.zeros((L, P, 3 * P), jnp.float32)
        bih_p = jnp.zeros((L, 1, 3 * P), jnp.float32)
        bhh_p = jnp.zeros((L, 1, 3 * P), jnp.float32)

        self.raw_params = []
        for layer in range(num_layers):
            in_sz = input_size if layer == 0 else hidden_size
            key, k1, k2, k3, k4 = jax.random.split(key, 5)
            w_ih = jax.random.uniform(k1, (3 * H, in_sz), jnp.float32, -k, k)
            w_hh = jax.random.uniform(k2, (3 * H, H), jnp.float32, -k, k)
            b_ih = jax.random.uniform(k3, (3 * H,), jnp.float32, -k, k)
            b_hh = jax.random.uniform(k4, (3 * H,), jnp.float32, -k, k)
            self.raw_params.append((w_ih, w_hh, b_ih, b_hh))

            wih_t = w_ih.T   # (in_sz, 3H), columns ordered [r | z | n]
            whh_t = w_hh.T   # (H, 3H)
            # Place each gate's H columns at a 128-aligned slot; padded
            # lanes/rows stay zero so padded hidden units remain exactly 0.
            for g in range(3):
                wih_p = wih_p.at[layer, :in_sz, g * P:g * P + H].set(
                    wih_t[:, g * H:(g + 1) * H])
                whh_p = whh_p.at[layer, :H, g * P:g * P + H].set(
                    whh_t[:, g * H:(g + 1) * H])
                bih_p = bih_p.at[layer, 0, g * P:g * P + H].set(
                    b_ih[g * H:(g + 1) * H])
                bhh_p = bhh_p.at[layer, 0, g * P:g * P + H].set(
                    b_hh[g * H:(g + 1) * H])

        self.wih_p, self.whh_p = wih_p, whh_p
        self.bih_p, self.bhh_p = bih_p, bhh_p
        # TODO(synk): self.fc (nn.Linear(hidden, num_classes)) is defined in the
        # PyTorch __init__ but never used in forward(), so it is omitted.

    def __call__(self, x_bti):
        return _gru_apply(x_bti, self.wih_p, self.whh_p, self.bih_p,
                          self.bhh_p, self.hidden_size, self.P)


def _reference_gru(x_bti, params, hidden_size):
    """Pure-JAX reference (lax.scan) matching torch.nn.GRU semantics."""
    B = x_bti.shape[0]
    out = jnp.transpose(x_bti, (1, 0, 2))  # (T, B, I)
    H = hidden_size
    for (w_ih, w_hh, b_ih, b_hh) in params:
        def step(h, x_t):
            gi = x_t @ w_ih.T + b_ih
            gh = h @ w_hh.T + b_hh
            r = jax.nn.sigmoid(gi[:, :H] + gh[:, :H])
            z = jax.nn.sigmoid(gi[:, H:2 * H] + gh[:, H:2 * H])
            n = jnp.tanh(gi[:, 2 * H:] + r * gh[:, 2 * H:])
            h_new = (1.0 - z) * n + z * h
            return h_new, h_new
        _, out = jax.lax.scan(step, jnp.zeros((B, H), jnp.float32), out)
    return jnp.transpose(out, (1, 0, 2))


if __name__ == "__main__":
    key = jax.random.PRNGKey(0)
    key, xkey, pkey = jax.random.split(key, 3)

    batch, seq = 2, 8
    input_size, hidden_size, num_layers, num_classes = 16, 32, 2, 4

    x = jax.random.normal(xkey, (batch, seq, input_size), dtype=jnp.float32)
    model = GRUModelPallas(input_size, hidden_size, num_layers, num_classes,
                           pkey)

    out = jax.block_until_ready(model(x))
    assert out.shape == (batch, seq, hidden_size), out.shape
    assert bool(jnp.all(jnp.isfinite(out)))

    ref = _reference_gru(x, model.raw_params, hidden_size)
    assert jnp.allclose(out, ref, rtol=1e-4, atol=1e-4), float(
        jnp.max(jnp.abs(out - ref)))

    print("KERNEL_OK")
</pallas_src>

<mosaic_0001>
module attributes {stable_mosaic.version = 11 : i64} {
  func.func @fused_gru_kernel(%arg0: memref<8x8x128xf32, #tpu.memory_space<vmem>>, %arg1: memref<2x128x384xf32, #tpu.memory_space<vmem>>, %arg2: memref<2x128x384xf32, #tpu.memory_space<vmem>>, %arg3: memref<2x1x384xf32, #tpu.memory_space<vmem>>, %arg4: memref<2x1x384xf32, #tpu.memory_space<vmem>>, %arg5: memref<8x8x128xf32, #tpu.memory_space<vmem>>, %arg6: memref<8x128xf32, #tpu.memory_space<vmem>>, %arg7: memref<8x8x384xf32, #tpu.memory_space<vmem>>) attributes {dimension_semantics = [], scalar_prefetch = 0 : i64, scratch_operands = 2 : i64, tpu.core_type = #tpu.core_type<tc>} {
    %c0 = arith.constant 0 : index
    %c0_0 = arith.constant 0 : index
    %c0_1 = arith.constant 0 : index
    %0 = vector.load %arg1[%c0, %c0_0, %c0_1] : memref<2x128x384xf32, #tpu.memory_space<vmem>>, vector<1x128x384xf32>
    %1 = vector.shape_cast %0 : vector<1x128x384xf32> to vector<128x384xf32>
    %c0_2 = arith.constant 0 : index
    %c0_3 = arith.constant 0 : index
    %c0_4 = arith.constant 0 : index
    %2 = vector.load %arg2[%c0_2, %c0_3, %c0_4] : memref<2x128x384xf32, #tpu.memory_space<vmem>>, vector<1x128x384xf32>
    %3 = vector.shape_cast %2 : vector<1x128x384xf32> to vector<128x384xf32>
    %c0_5 = arith.constant 0 : index
    %c0_6 = arith.constant 0 : index
    %c0_7 = arith.constant 0 : index
    %4 = vector.load %arg3[%c0_5, %c0_6, %c0_7] : memref<2x1x384xf32, #tpu.memory_space<vmem>>, vector<1x1x384xf32>
    %5 = vector.shape_cast %4 : vector<1x1x384xf32> to vector<1x384xf32>
    %c0_8 = arith.constant 0 : index
    %c0_9 = arith.constant 0 : index
    %c0_10 = arith.constant 0 : index
    %6 = vector.load %arg4[%c0_8, %c0_9, %c0_10] : memref<2x1x384xf32, #tpu.memory_space<vmem>>, vector<1x1x384xf32>
    %7 = vector.shape_cast %6 : vector<1x1x384xf32> to vector<1x384xf32>
    %c0_11 = arith.constant 0 : index
    %c0_12 = arith.constant 0 : index
    %c0_13 = arith.constant 0 : index
    %8 = vector.load %arg0[%c0_11, %c0_12, %c0_13] : memref<8x8x128xf32, #tpu.memory_space<vmem>>, vector<8x8x128xf32>
    %9 = vector.shape_cast %8 : vector<8x8x128xf32> to vector<64x128xf32>
    %cst = arith.constant dense<0.000000e+00> : vector<64x384xf32>
    %10 = tpu.matmul %9, %1, %cst {dimension_numbers = #tpu.dot_dimension_numbers<[1], [0], [0], [1], [0, 0, 1, 1], [], []>} : vector<64x128xf32>, vector<128x384xf32>, vector<64x384xf32> -> vector<64x384xf32>
    %11 = vector.broadcast %5 : vector<1x384xf32> to vector<64x384xf32>
    %12 = arith.addf %10, %11 : vector<64x384xf32>
    %13 = vector.shape_cast %12 : vector<64x384xf32> to vector<8x8x384xf32>
    %c0_14 = arith.constant 0 : index
    %c0_15 = arith.constant 0 : index
    %c0_16 = arith.constant 0 : index
    %14 = vector.load %arg7[%c0_14, %c0_15, %c0_16] : memref<8x8x384xf32, #tpu.memory_space<vmem>>, vector<8x8x384xf32>
    tpu.vector_store %arg7[%c0_14, %c0_15, %c0_16], %13 {strides = array<i32>} : memref<8x8x384xf32, #tpu.memory_space<vmem>>, vector<8x8x384xf32>,
    %cst_17 = arith.constant 0.000000e+00 : f32
    %15 = vector.broadcast %cst_17 : f32 to vector<8x128xf32>
    %c0_18 = arith.constant 0 : index
    %c0_19 = arith.constant 0 : index
    %16 = vector.load %arg6[%c0_18, %c0_19] : memref<8x128xf32, #tpu.memory_space<vmem>>, vector<8x128xf32>
    tpu.vector_store %arg6[%c0_18, %c0_19], %15 {strides = array<i32>} : memref<8x128xf32, #tpu.memory_space<vmem>>, vector<8x128xf32>,
    %c0_i32 = arith.constant 0 : i32
    %c0_20 = arith.constant 0 : index
    %c0_21 = arith.constant 0 : index
    %17 = vector.load %arg6[%c0_20, %c0_21] : memref<8x128xf32, #tpu.memory_space<vmem>>, vector<8x128xf32>
    %18 = arith.index_cast %c0_i32 : i32 to index
    %c0_22 = arith.constant 0 : index
    %c0_23 = arith.constant 0 : index
    %19 = vector.load %arg7[%18, %c0_22, %c0_23] : memref<8x8x384xf32, #tpu.memory_space<vmem>>, vector<1x8x384xf32>
    %20 = vector.shape_cast %19 : vector<1x8x384xf32> to vector<8x384xf32>
    %cst_24 = arith.constant dense<0.000000e+00> : vector<8x384xf32>
    %21 = tpu.matmul %17, %3, %cst_24 {dimension_numbers = #tpu.dot_dimension_numbers<[1], [0], [0], [1], [0, 0, 1, 1], [], []>} : vector<8x128xf32>, vector<128x384xf32>, vector<8x384xf32> -> vector<8x384xf32>
    %22 = vector.broadcast %7 : vector<1x384xf32> to vector<8x384xf32>
    %23 = arith.addf %21, %22 : vector<8x384xf32>
    %24 = vector.extract_strided_slice %20 {offsets = [0, 0], sizes = [8, 128], strides = [1, 1]} : vector<8x384xf32> to vector<8x128xf32>
    %25 = vector.extract_strided_slice %23 {offsets = [0, 0], sizes = [8, 128], strides = [1, 1]} : vector<8x384xf32> to vector<8x128xf32>
    %26 = arith.addf %24, %25 : vector<8x128xf32>
    %27 = arith.negf %26 : vector<8x128xf32>
    %28 = math.exp %27 : vector<8x128xf32>
    %cst_25 = arith.constant 1.000000e+00 : f32
    %29 = vector.broadcast %cst_25 : f32 to vector<8x128xf32>
    %30 = arith.addf %29, %28 : vector<8x128xf32>
    %31 = arith.divf %29, %30 : vector<8x128xf32>
    %32 = vector.extract_strided_slice %20 {offsets = [0, 128], sizes = [8, 128], strides = [1, 1]} : vector<8x384xf32> to vector<8x128xf32>
    %33 = vector.extract_strided_slice %23 {offsets = [0, 128], sizes = [8, 128], strides = [1, 1]} : vector<8x384xf32> to vector<8x128xf32>
    %34 = arith.addf %32, %33 : vector<8x128xf32>
    %35 = arith.negf %34 : vector<8x128xf32>
    %36 = math.exp %35 : vector<8x128xf32>
    %cst_26 = arith.constant 1.000000e+00 : f32
    %37 = vector.broadcast %cst_26 : f32 to vector<8x128xf32>
    %38 = arith.addf %37, %36 : vector<8x128xf32>
    %39 = arith.divf %37, %38 : vector<8x128xf32>
    %40 = vector.extract_strided_slice %20 {offsets = [0, 256], sizes = [8, 128], strides = [1, 1]} : vector<8x384xf32> to vector<8x128xf32>
    %41 = vector.extract_strided_slice %23 {offsets = [0, 256], sizes = [8, 128], strides = [1, 1]} : vector<8x384xf32> to vector<8x128xf32>
    %42 = arith.mulf %31, %41 : vector<8x128xf32>
    %43 = arith.addf %40, %42 : vector<8x128xf32>
    %44 = math.tanh %43 : vector<8x128xf32>
    %cst_27 = arith.constant 1.000000e+00 : f32
    %45 = vector.broadcast %cst_27 : f32 to vector<8x128xf32>
    %46 = arith.subf %45, %39 : vector<8x128xf32>
    %47 = arith.mulf %46, %44 : vector<8x128xf32>
    %48 = arith.mulf %39, %17 : vector<8x128xf32>
    %49 = arith.addf %47, %48 : vector<8x128xf32>
    %c0_28 = arith.constant 0 : index
    %c0_29 = arith.constant 0 : index
    %50 = vector.load %arg6[%c0_28, %c0_29] : memref<8x128xf32, #tpu.memory_space<vmem>>, vector<8x128xf32>
    tpu.vector_store %arg6[%c0_28, %c0_29], %49 {strides = array<i32>} : memref<8x128xf32, #tpu.memory_space<vmem>>, vector<8x128xf32>,
    %51 = arith.index_cast %c0_i32 : i32 to index
    %c0_30 = arith.constant 0 : index
    %c0_31 = arith.constant 0 : index
    %52 = vector.load %arg5[%51, %c0_30, %c0_31] : memref<8x8x128xf32, #tpu.memory_space<vmem>>, vector<1x8x128xf32>
    %53 = vector.shape_cast %52 : vector<1x8x128xf32> to vector<8x128xf32>
    %54 = vector.shape_cast %49 : vector<8x128xf32> to vector<1x8x128xf32>
    tpu.vector_store %arg5[%51, %c0_30, %c0_31], %54 {strides = array<i32>} : memref<8x8x128xf32, #tpu.memory_space<vmem>>, vector<1x8x128xf32>,
    %c1_i32 = arith.constant 1 : i32
    %c0_32 = arith.constant 0 : index
    %c0_33 = arith.constant 0 : index
    %55 = vector.load %arg6[%c0_32, %c0_33] : memref<8x128xf32, #tpu.memory_space<vmem>>, vector<8x128xf32>
    %56 = arith.index_cast %c1_i32 : i32 to index
    %c0_34 = arith.constant 0 : index
    %c0_35 = arith.constant 0 : index
    %57 = vector.load %arg7[%56, %c0_34, %c0_35] : memref<8x8x384xf32, #tpu.memory_space<vmem>>, vector<1x8x384xf32>
    %58 = vector.shape_cast %57 : vector<1x8x384xf32> to vector<8x384xf32>
    %cst_36 = arith.constant dense<0.000000e+00> : vector<8x384xf32>
    %59 = tpu.matmul %55, %3, %cst_36 {dimension_numbers = #tpu.dot_dimension_numbers<[1], [0], [0], [1], [0, 0, 1, 1], [], []>} : vector<8x128xf32>, vector<128x384xf32>, vector<8x384xf32> -> vector<8x384xf32>
    %60 = vector.broadcast %7 : vector<1x384xf32> to vector<8x384xf32>
    %61 = arith.addf %59, %60 : vector<8x384xf32>
    %62 = vector.extract_strided_slice %58 {offsets = [0, 0], sizes = [8, 128], strides = [1, 1]} : vector<8x384xf32> to vector<8x128xf32>
    %63 = vector.extract_strided_slice %61 {offsets = [0, 0], sizes = [8, 128], strides = [1, 1]} : vector<8x384xf32> to vector<8x128xf32>
    %64 = arith.addf %62, %63 : vector<8x128xf32>
    %65 = arith.negf %64 : vector<8x128xf32>
    %66 = math.exp %65 : vector<8x128xf32>
    %cst_37 = arith.constant 1.000000e+00 : f32
    %67 = vector.broadcast %cst_37 : f32 to vector<8x128xf32>
    %68 = arith.addf %67, %66 : vector<8x128xf32>
    %69 = arith.divf %67, %68 : vector<8x128xf32>
    %70 = vector.extract_strided_slice %58 {offsets = [0, 128], sizes = [8, 128], strides = [1, 1]} : vector<8x384xf32> to vector<8x128xf32>
    %71 = vector.extract_strided_slice %61 {offsets = [0, 128], sizes = [8, 128], strides = [1, 1]} : vector<8x384xf32> to vector<8x128xf32>
    %72 = arith.addf %70, %71 : vector<8x128xf32>
    %73 = arith.negf %72 : vector<8x128xf32>
    %74 = math.exp %73 : vector<8x128xf32>
    %cst_38 = arith.constant 1.000000e+00 : f32
    %75 = vector.broadcast %cst_38 : f32 to vector<8x128xf32>
    %76 = arith.addf %75, %74 : vector<8x128xf32>
    %77 = arith.divf %75, %76 : vector<8x128xf32>
    %78 = vector.extract_strided_slice %58 {offsets = [0, 256], sizes = [8, 128], strides = [1, 1]} : vector<8x384xf32> to vector<8x128xf32>
    %79 = vector.extract_strided_slice %61 {offsets = [0, 256], sizes = [8, 128], strides = [1, 1]} : vector<8x384xf32> to vector<8x128xf32>
    %80 = arith.mulf %69, %79 : vector<8x128xf32>
    %81 = arith.addf %78, %80 : vector<8x128xf32>
    %82 = math.tanh %81 : vector<8x128xf32>
    %cst_39 = arith.constant 1.000000e+00 : f32
    %83 = vector.broadcast %cst_39 : f32 to vector<8x128xf32>
    %84 = arith.subf %83, %77 : vector<8x128xf32>
    %85 = arith.mulf %84, %82 : vector<8x128xf32>
    %86 = arith.mulf %77, %55 : vector<8x128xf32>
    %87 = arith.addf %85, %86 : vector<8x128xf32>
    %c0_40 = arith.constant 0 : index
    %c0_41 = arith.constant 0 : index
    %88 = vector.load %arg6[%c0_40, %c0_41] : memref<8x128xf32, #tpu.memory_space<vmem>>, vector<8x128xf32>
    tpu.vector_store %arg6[%c0_40, %c0_41], %87 {strides = array<i32>} : memref<8x128xf32, #tpu.memory_space<vmem>>, vector<8x128xf32>,
    %89 = arith.index_cast %c1_i32 : i32 to index
    %c0_42 = arith.constant 0 : index
    %c0_43 = arith.constant 0 : index
    %90 = vector.load %arg5[%89, %c0_42, %c0_43] : memref<8x8x128xf32, #tpu.memory_space<vmem>>, vector<1x8x128xf32>
    %91 = vector.shape_cast %90 : vector<1x8x128xf32> to vector<8x128xf32>
    %92 = vector.shape_cast %87 : vector<8x128xf32> to vector<1x8x128xf32>
    tpu.vector_store %arg5[%89, %c0_42, %c0_43], %92 {strides = array<i32>} : memref<8x8x128xf32, #tpu.memory_space<vmem>>, vector<1x8x128xf32>,
    %c2_i32 = arith.constant 2 : i32
    %c0_44 = arith.constant 0 : index
    %c0_45 = arith.constant 0 : index
    %93 = vector.load %arg6[%c0_44, %c0_45] : memref<8x128xf32, #tpu.memory_space<vmem>>, vector<8x128xf32>
    %94 = arith.index_cast %c2_i32 : i32 to index
    %c0_46 = arith.constant 0 : index
    %c0_47 = arith.constant 0 : index
    %95 = vector.load %arg7[%94, %c0_46, %c0_47] : memref<8x8x384xf32, #tpu.memory_space<vmem>>, vector<1x8x384xf32>
    %96 = vector.shape_cast %95 : vector<1x8x384xf32> to vector<8x384xf32>
    %cst_48 = arith.constant dense<0.000000e+00> : vector<8x384xf32>
    %97 = tpu.matmul %93, %3, %cst_48 {dimension_numbers = #tpu.dot_dimension_numbers<[1], [0], [0], [1], [0, 0, 1, 1], [], []>} : vector<8x128xf32>, vector<128x384xf32>, vector<8x384xf32> -> vector<8x384xf32>
    %98 = vector.broadcast %7 : vector<1x384xf32> to vector<8x384xf32>
    %99 = arith.addf %97, %98 : vector<8x384xf32>
    %100 = vector.extract_strided_slice %96 {offsets = [0, 0], sizes = [8, 128], strides = [1, 1]} : vector<8x384xf32> to vector<8x128xf32>
    %101 = vector.extract_strided_slice %99 {offsets = [0, 0], sizes = [8, 128], strides = [1, 1]} : vector<8x384xf32> to vector<8x128xf32>
    %102 = arith.addf %100, %101 : vector<8x128xf32>
    %103 = arith.negf %102 : vector<8x128xf32>
    %104 = math.exp %103 : vector<8x128xf32>
    %cst_49 = arith.constant 1.000000e+00 : f32
    %105 = vector.broadcast %cst_49 : f32 to vector<8x128xf32>
    %106 = arith.addf %105, %104 : vector<8x128xf32>
    %107 = arith.divf %105, %106 : vector<8x128xf32>
    %108 = vector.extract_strided_slice %96 {offsets = [0, 128], sizes = [8, 128], strides = [1, 1]} : vector<8x384xf32> to vector<8x128xf32>
    %109 = vector.extract_strided_slice %99 {offsets = [0, 128], sizes = [8, 128], strides = [1, 1]} : vector<8x384xf32> to vector<8x128xf32>
    %110 = arith.addf %108, %109 : vector<8x128xf32>
    %111 = arith.negf %110 : vector<8x128xf32>
    %112 = math.exp %111 : vector<8x128xf32>
    %cst_50 = arith.constant 1.000000e+00 : f32
    %113 = vector.broadcast %cst_50 : f32 to vector<8x128xf32>
    %114 = arith.addf %113, %112 : vector<8x128xf32>
    %115 = arith.divf %113, %114 : vector<8x128xf32>
    %116 = vector.extract_strided_slice %96 {offsets = [0, 256], sizes = [8, 128], strides = [1, 1]} : vector<8x384xf32> to vector<8x128xf32>
    %117 = vector.extract_strided_slice %99 {offsets = [0, 256], sizes = [8, 128], strides = [1, 1]} : vector<8x384xf32> to vector<8x128xf32>
    %118 = arith.mulf %107, %117 : vector<8x128xf32>
    %119 = arith.addf %116, %118 : vector<8x128xf32>
    %120 = math.tanh %119 : vector<8x128xf32>
    %cst_51 = arith.constant 1.000000e+00 : f32
    %121 = vector.broadcast %cst_51 : f32 to vector<8x128xf32>
    %122 = arith.subf %121, %115 : vector<8x128xf32>
    %123 = arith.mulf %122, %120 : vector<8x128xf32>
    %124 = arith.mulf %115, %93 : vector<8x128xf32>
    %125 = arith.addf %123, %124 : vector<8x128xf32>
    %c0_52 = arith.constant 0 : index
    %c0_53 = arith.constant 0 : index
    %126 = vector.load %arg6[%c0_52, %c0_53] : memref<8x128xf32, #tpu.memory_space<vmem>>, vector<8x128xf32>
    tpu.vector_store %arg6[%c0_52, %c0_53], %125 {strides = array<i32>} : memref<8x128xf32, #tpu.memory_space<vmem>>, vector<8x128xf32>,
    %127 = arith.index_cast %c2_i32 : i32 to index
    %c0_54 = arith.constant 0 : index
    %c0_55 = arith.constant 0 : index
    %128 = vector.load %arg5[%127, %c0_54, %c0_55] : memref<8x8x128xf32, #tpu.memory_space<vmem>>, vector<1x8x128xf32>
    %129 = vector.shape_cast %128 : vector<1x8x128xf32> to vector<8x128xf32>
    %130 = vector.shape_cast %125 : vector<8x128xf32> to vector<1x8x128xf32>
    tpu.vector_store %arg5[%127, %c0_54, %c0_55], %130 {strides = array<i32>} : memref<8x8x128xf32, #tpu.memory_space<vmem>>, vector<1x8x128xf32>,
    %c3_i32 = arith.constant 3 : i32
    %c0_56 = arith.constant 0 : index
    %c0_57 = arith.constant 0 : index
    %131 = vector.load %arg6[%c0_56, %c0_57] : memref<8x128xf32, #tpu.memory_space<vmem>>, vector<8x128xf32>
    %132 = arith.index_cast %c3_i32 : i32 to index
    %c0_58 = arith.constant 0 : index
    %c0_59 = arith.constant 0 : index
    %133 = vector.load %arg7[%132, %c0_58, %c0_59] : memref<8x8x384xf32, #tpu.memory_space<vmem>>, vector<1x8x384xf32>
    %134 = vector.shape_cast %133 : vector<1x8x384xf32> to vector<8x384xf32>
    %cst_60 = arith.constant dense<0.000000e+00> : vector<8x384xf32>
    %135 = tpu.matmul %131, %3, %cst_60 {dimension_numbers = #tpu.dot_dimension_numbers<[1], [0], [0], [1], [0, 0, 1, 1], [], []>} : vector<8x128xf32>, vector<128x384xf32>, vector<8x384xf32> -> vector<8x384xf32>
    %136 = vector.broadcast %7 : vector<1x384xf32> to vector<8x384xf32>
    %137 = arith.addf %135, %136 : vector<8x384xf32>
    %138 = vector.extract_strided_slice %134 {offsets = [0, 0], sizes = [8, 128], strides = [1, 1]} : vector<8x384xf32> to vector<8x128xf32>
    %139 = vector.extract_strided_slice %137 {offsets = [0, 0], sizes = [8, 128], strides = [1, 1]} : vector<8x384xf32> to vector<8x128xf32>
    %140 = arith.addf %138, %139 : vector<8x128xf32>
    %141 = arith.negf %140 : vector<8x128xf32>
    %142 = math.exp %141 : vector<8x128xf32>
    %cst_61 = arith.constant 1.000000e+00 : f32
    %143 = vector.broadcast %cst_61 : f32 to vector<8x128xf32>
    %144 = arith.addf %143, %142 : vector<8x128xf32>
    %145 = arith.divf %143, %144 : vector<8x128xf32>
    %146 = vector.extract_strided_slice %134 {offsets = [0, 128], sizes = [8, 128], strides = [1, 1]} : vector<8x384xf32> to vector<8x128xf32>
    %147 = vector.extract_strided_slice %137 {offsets = [0, 128], sizes = [8, 128], strides = [1, 1]} : vector<8x384xf32> to vector<8x128xf32>
    %148 = arith.addf %146, %147 : vector<8x128xf32>
    %149 = arith.negf %148 : vector<8x128xf32>
    %150 = math.exp %149 : vector<8x128xf32>
    %cst_62 = arith.constant 1.000000e+00 : f32
    %151 = vector.broadcast %cst_62 : f32 to vector<8x128xf32>
    %152 = arith.addf %151, %150 : vector<8x128xf32>
    %153 = arith.divf %151, %152 : vector<8x128xf32>
    %154 = vector.extract_strided_slice %134 {offsets = [0, 256], sizes = [8, 128], strides = [1, 1]} : vector<8x384xf32> to vector<8x128xf32>
    %155 = vector.extract_strided_slice %137 {offsets = [0, 256], sizes = [8, 128], strides = [1, 1]} : vector<8x384xf32> to vector<8x128xf32>
    %156 = arith.mulf %145, %155 : vector<8x128xf32>
    %157 = arith.addf %154, %156 : vector<8x128xf32>
    %158 = math.tanh %157 : vector<8x128xf32>
    %cst_63 = arith.constant 1.000000e+00 : f32
    %159 = vector.broadcast %cst_63 : f32 to vector<8x128xf32>
    %160 = arith.subf %159, %153 : vector<8x128xf32>
    %161 = arith.mulf %160, %158 : vector<8x128xf32>
    %162 = arith.mulf %153, %131 : vector<8x128xf32>
    %163 = arith.addf %161, %162 : vector<8x128xf32>
    %c0_64 = arith.constant 0 : index
    %c0_65 = arith.constant 0 : index
    %164 = vector.load %arg6[%c0_64, %c0_65] : memref<8x128xf32, #tpu.memory_space<vmem>>, vector<8x128xf32>
    tpu.vector_store %arg6[%c0_64, %c0_65], %163 {strides = array<i32>} : memref<8x128xf32, #tpu.memory_space<vmem>>, vector<8x128xf32>,
    %165 = arith.index_cast %c3_i32 : i32 to index
    %c0_66 = arith.constant 0 : index
    %c0_67 = arith.constant 0 : index
    %166 = vector.load %arg5[%165, %c0_66, %c0_67] : memref<8x8x128xf32, #tpu.memory_space<vmem>>, vector<1x8x128xf32>
    %167 = vector.shape_cast %166 : vector<1x8x128xf32> to vector<8x128xf32>
    %168 = vector.shape_cast %163 : vector<8x128xf32> to vector<1x8x128xf32>
    tpu.vector_store %arg5[%165, %c0_66, %c0_67], %168 {strides = array<i32>} : memref<8x8x128xf32, #tpu.memory_space<vmem>>, vector<1x8x128xf32>,
    %c4_i32 = arith.constant 4 : i32
    %c0_68 = arith.constant 0 : index
    %c0_69 = arith.constant 0 : index
    %169 = vector.load %arg6[%c0_68, %c0_69] : memref<8x128xf32, #tpu.memory_space<vmem>>, vector<8x128xf32>
    %170 = arith.index_cast %c4_i32 : i32 to index
    %c0_70 = arith.constant 0 : index
    %c0_71 = arith.constant 0 : index
    %171 = vector.load %arg7[%170, %c0_70, %c0_71] : memref<8x8x384xf32, #tpu.memory_space<vmem>>, vector<1x8x384xf32>
    %172 = vector.shape_cast %171 : vector<1x8x384xf32> to vector<8x384xf32>
    %cst_72 = arith.constant dense<0.000000e+00> : vector<8x384xf32>
    %173 = tpu.matmul %169, %3, %cst_72 {dimension_numbers = #tpu.dot_dimension_numbers<[1], [0], [0], [1], [0, 0, 1, 1], [], []>} : vector<8x128xf32>, vector<128x384xf32>, vector<8x384xf32> -> vector<8x384xf32>
    %174 = vector.broadcast %7 : vector<1x384xf32> to vector<8x384xf32>
    %175 = arith.addf %173, %174 : vector<8x384xf32>
    %176 = vector.extract_strided_slice %172 {offsets = [0, 0], sizes = [8, 128], strides = [1, 1]} : vector<8x384xf32> to vector<8x128xf32>
    %177 = vector.extract_strided_slice %175 {offsets = [0, 0], sizes = [8, 128], strides = [1, 1]} : vector<8x384xf32> to vector<8x128xf32>
    %178 = arith.addf %176, %177 : vector<8x128xf32>
    %179 = arith.negf %178 : vector<8x128xf32>
    %180 = math.exp %179 : vector<8x128xf32>
    %cst_73 = arith.constant 1.000000e+00 : f32
    %181 = vector.broadcast %cst_73 : f32 to vector<8x128xf32>
    %182 = arith.addf %181, %180 : vector<8x128xf32>
    %183 = arith.divf %181, %182 : vector<8x128xf32>
    %184 = vector.extract_strided_slice %172 {offsets = [0, 128], sizes = [8, 128], strides = [1, 1]} : vector<8x384xf32> to vector<8x128xf32>
    %185 = vector.extract_strided_slice %175 {offsets = [0, 128], sizes = [8, 128], strides = [1, 1]} : vector<8x384xf32> to vector<8x128xf32>
    %186 = arith.addf %184, %185 : vector<8x128xf32>
    %187 = arith.negf %186 : vector<8x128xf32>
    %188 = math.exp %187 : vector<8x128xf32>
    %cst_74 = arith.constant 1.000000e+00 : f32
    %189 = vector.broadcast %cst_74 : f32 to vector<8x128xf32>
    %190 = arith.addf %189, %188 : vector<8x128xf32>
    %191 = arith.divf %189, %190 : vector<8x128xf32>
    %192 = vector.extract_strided_slice %172 {offsets = [0, 256], sizes = [8, 128], strides = [1, 1]} : vector<8x384xf32> to vector<8x128xf32>
    %193 = vector.extract_strided_slice %175 {offsets = [0, 256], sizes = [8, 128], strides = [1, 1]} : vector<8x384xf32> to vector<8x128xf32>
    %194 = arith.mulf %183, %193 : vector<8x128xf32>
    %195 = arith.addf %192, %194 : vector<8x128xf32>
    %196 = math.tanh %195 : vector<8x128xf32>
    %cst_75 = arith.constant 1.000000e+00 : f32
    %197 = vector.broadcast %cst_75 : f32 to vector<8x128xf32>
    %198 = arith.subf %197, %191 : vector<8x128xf32>
    %199 = arith.mulf %198, %196 : vector<8x128xf32>
    %200 = arith.mulf %191, %169 : vector<8x128xf32>
    %201 = arith.addf %199, %200 : vector<8x128xf32>
    %c0_76 = arith.constant 0 : index
    %c0_77 = arith.constant 0 : index
    %202 = vector.load %arg6[%c0_76, %c0_77] : memref<8x128xf32, #tpu.memory_space<vmem>>, vector<8x128xf32>
    tpu.vector_store %arg6[%c0_76, %c0_77], %201 {strides = array<i32>} : memref<8x128xf32, #tpu.memory_space<vmem>>, vector<8x128xf32>,
    %203 = arith.index_cast %c4_i32 : i32 to index
    %c0_78 = arith.constant 0 : index
    %c0_79 = arith.constant 0 : index
    %204 = vector.load %arg5[%203, %c0_78, %c0_79] : memref<8x8x128xf32, #tpu.memory_space<vmem>>, vector<1x8x128xf32>
    %205 = vector.shape_cast %204 : vector<1x8x128xf32> to vector<8x128xf32>
    %206 = vector.shape_cast %201 : vector<8x128xf32> to vector<1x8x128xf32>
    tpu.vector_store %arg5[%203, %c0_78, %c0_79], %206 {strides = array<i32>} : memref<8x8x128xf32, #tpu.memory_space<vmem>>, vector<1x8x128xf32>,
    %c5_i32 = arith.constant 5 : i32
    %c0_80 = arith.constant 0 : index
    %c0_81 = arith.constant 0 : index
    %207 = vector.load %arg6[%c0_80, %c0_81] : memref<8x128xf32, #tpu.memory_space<vmem>>, vector<8x128xf32>
    %208 = arith.index_cast %c5_i32 : i32 to index
    %c0_82 = arith.constant 0 : index
    %c0_83 = arith.constant 0 : index
    %209 = vector.load %arg7[%208, %c0_82, %c0_83] : memref<8x8x384xf32, #tpu.memory_space<vmem>>, vector<1x8x384xf32>
    %210 = vector.shape_cast %209 : vector<1x8x384xf32> to vector<8x384xf32>
    %cst_84 = arith.constant dense<0.000000e+00> : vector<8x384xf32>
    %211 = tpu.matmul %207, %3, %cst_84 {dimension_numbers = #tpu.dot_dimension_numbers<[1], [0], [0], [1], [0, 0, 1, 1], [], []>} : vector<8x128xf32>, vector<128x384xf32>, vector<8x384xf32> -> vector<8x384xf32>
    %212 = vector.broadcast %7 : vector<1x384xf32> to vector<8x384xf32>
    %213 = arith.addf %211, %212 : vector<8x384xf32>
    %214 = vector.extract_strided_slice %210 {offsets = [0, 0], sizes = [8, 128], strides = [1, 1]} : vector<8x384xf32> to vector<8x128xf32>
    %215 = vector.extract_strided_slice %213 {offsets = [0, 0], sizes = [8, 128], strides = [1, 1]} : vector<8x384xf32> to vector<8x128xf32>
    %216 = arith.addf %214, %215 : vector<8x128xf32>
    %217 = arith.negf %216 : vector<8x128xf32>
    %218 = math.exp %217 : vector<8x128xf32>
    %cst_85 = arith.constant 1.000000e+00 : f32
    %219 = vector.broadcast %cst_85 : f32 to vector<8x128xf32>
    %220 = arith.addf %219, %218 : vector<8x128xf32>
    %221 = arith.divf %219, %220 : vector<8x128xf32>
    %222 = vector.extract_strided_slice %210 {offsets = [0, 128], sizes = [8, 128], strides = [1, 1]} : vector<8x384xf32> to vector<8x128xf32>
    %223 = vector.extract_strided_slice %213 {offsets = [0, 128], sizes = [8, 128], strides = [1, 1]} : vector<8x384xf32> to vector<8x128xf32>
    %224 = arith.addf %222, %223 : vector<8x128xf32>
    %225 = arith.negf %224 : vector<8x128xf32>
    %226 = math.exp %225 : vector<8x128xf32>
    %cst_86 = arith.constant 1.000000e+00 : f32
    %227 = vector.broadcast %cst_86 : f32 to vector<8x128xf32>
    %228 = arith.addf %227, %226 : vector<8x128xf32>
    %229 = arith.divf %227, %228 : vector<8x128xf32>
    %230 = vector.extract_strided_slice %210 {offsets = [0, 256], sizes = [8, 128], strides = [1, 1]} : vector<8x384xf32> to vector<8x128xf32>
    %231 = vector.extract_strided_slice %213 {offsets = [0, 256], sizes = [8, 128], strides = [1, 1]} : vector<8x384xf32> to vector<8x128xf32>
    %232 = arith.mulf %221, %231 : vector<8x128xf32>
    %233 = arith.addf %230, %232 : vector<8x128xf32>
    %234 = math.tanh %233 : vector<8x128xf32>
    %cst_87 = arith.constant 1.000000e+00 : f32
    %235 = vector.broadcast %cst_87 : f32 to vector<8x128xf32>
    %236 = arith.subf %235, %229 : vector<8x128xf32>
    %237 = arith.mulf %236, %234 : vector<8x128xf32>
    %238 = arith.mulf %229, %207 : vector<8x128xf32>
    %239 = arith.addf %237, %238 : vector<8x128xf32>
    %c0_88 = arith.constant 0 : index
    %c0_89 = arith.constant 0 : index
    %240 = vector.load %arg6[%c0_88, %c0_89] : memref<8x128xf32, #tpu.memory_space<vmem>>, vector<8x128xf32>
    tpu.vector_store %arg6[%c0_88, %c0_89], %239 {strides = array<i32>} : memref<8x128xf32, #tpu.memory_space<vmem>>, vector<8x128xf32>,
    %241 = arith.index_cast %c5_i32 : i32 to index
    %c0_90 = arith.constant 0 : index
    %c0_91 = arith.constant 0 : index
    %242 = vector.load %arg5[%241, %c0_90, %c0_91] : memref<8x8x128xf32, #tpu.memory_space<vmem>>, vector<1x8x128xf32>
    %243 = vector.shape_cast %242 : vector<1x8x128xf32> to vector<8x128xf32>
    %244 = vector.shape_cast %239 : vector<8x128xf32> to vector<1x8x128xf32>
    tpu.vector_store %arg5[%241, %c0_90, %c0_91], %244 {strides = array<i32>} : memref<8x8x128xf32, #tpu.memory_space<vmem>>, vector<1x8x128xf32>,
    %c6_i32 = arith.constant 6 : i32
    %c0_92 = arith.constant 0 : index
    %c0_93 = arith.constant 0 : index
    %245 = vector.load %arg6[%c0_92, %c0_93] : memref<8x128xf32, #tpu.memory_space<vmem>>, vector<8x128xf32>
    %246 = arith.index_cast %c6_i32 : i32 to index
    %c0_94 = arith.constant 0 : index
    %c0_95 = arith.constant 0 : index
    %247 = vector.load %arg7[%246, %c0_94, %c0_95] : memref<8x8x384xf32, #tpu.memory_space<vmem>>, vector<1x8x384xf32>
    %248 = vector.shape_cast %247 : vector<1x8x384xf32> to vector<8x384xf32>
    %cst_96 = arith.constant dense<0.000000e+00> : vector<8x384xf32>
    %249 = tpu.matmul %245, %3, %cst_96 {dimension_numbers = #tpu.dot_dimension_numbers<[1], [0], [0], [1], [0, 0, 1, 1], [], []>} : vector<8x128xf32>, vector<128x384xf32>, vector<8x384xf32> -> vector<8x384xf32>
    %250 = vector.broadcast %7 : vector<1x384xf32> to vector<8x384xf32>
    %251 = arith.addf %249, %250 : vector<8x384xf32>
    %252 = vector.extract_strided_slice %248 {offsets = [0, 0], sizes = [8, 128], strides = [1, 1]} : vector<8x384xf32> to vector<8x128xf32>
    %253 = vector.extract_strided_slice %251 {offsets = [0, 0], sizes = [8, 128], strides = [1, 1]} : vector<8x384xf32> to vector<8x128xf32>
    %254 = arith.addf %252, %253 : vector<8x128xf32>
    %255 = arith.negf %254 : vector<8x128xf32>
    %256 = math.exp %255 : vector<8x128xf32>
    %cst_97 = arith.constant 1.000000e+00 : f32
    %257 = vector.broadcast %cst_97 : f32 to vector<8x128xf32>
    %258 = arith.addf %257, %256 : vector<8x128xf32>
    %259 = arith.divf %257, %258 : vector<8x128xf32>
    %260 = vector.extract_strided_slice %248 {offsets = [0, 128], sizes = [8, 128], strides = [1, 1]} : vector<8x384xf32> to vector<8x128xf32>
    %261 = vector.extract_strided_slice %251 {offsets = [0, 128], sizes = [8, 128], strides = [1, 1]} : vector<8x384xf32> to vector<8x128xf32>
    %262 = arith.addf %260, %261 : vector<8x128xf32>
    %263 = arith.negf %262 : vector<8x128xf32>
    %264 = math.exp %263 : vector<8x128xf32>
    %cst_98 = arith.constant 1.000000e+00 : f32
    %265 = vector.broadcast %cst_98 : f32 to vector<8x128xf32>
    %266 = arith.addf %265, %264 : vector<8x128xf32>
    %267 = arith.divf %265, %266 : vector<8x128xf32>
    %268 = vector.extract_strided_slice %248 {offsets = [0, 256], sizes = [8, 128], strides = [1, 1]} : vector<8x384xf32> to vector<8x128xf32>
    %269 = vector.extract_strided_slice %251 {offsets = [0, 256], sizes = [8, 128], strides = [1, 1]} : vector<8x384xf32> to vector<8x128xf32>
    %270 = arith.mulf %259, %269 : vector<8x128xf32>
    %271 = arith.addf %268, %270 : vector<8x128xf32>
    %272 = math.tanh %271 : vector<8x128xf32>
    %cst_99 = arith.constant 1.000000e+00 : f32
    %273 = vector.broadcast %cst_99 : f32 to vector<8x128xf32>
    %274 = arith.subf %273, %267 : vector<8x128xf32>
    %275 = arith.mulf %274, %272 : vector<8x128xf32>
    %276 = arith.mulf %267, %245 : vector<8x128xf32>
    %277 = arith.addf %275, %276 : vector<8x128xf32>
    %c0_100 = arith.constant 0 : index
    %c0_101 = arith.constant 0 : index
    %278 = vector.load %arg6[%c0_100, %c0_101] : memref<8x128xf32, #tpu.memory_space<vmem>>, vector<8x128xf32>
    tpu.vector_store %arg6[%c0_100, %c0_101], %277 {strides = array<i32>} : memref<8x128xf32, #tpu.memory_space<vmem>>, vector<8x128xf32>,
    %279 = arith.index_cast %c6_i32 : i32 to index
    %c0_102 = arith.constant 0 : index
    %c0_103 = arith.constant 0 : index
    %280 = vector.load %arg5[%279, %c0_102, %c0_103] : memref<8x8x128xf32, #tpu.memory_space<vmem>>, vector<1x8x128xf32>
    %281 = vector.shape_cast %280 : vector<1x8x128xf32> to vector<8x128xf32>
    %282 = vector.shape_cast %277 : vector<8x128xf32> to vector<1x8x128xf32>
    tpu.vector_store %arg5[%279, %c0_102, %c0_103], %282 {strides = array<i32>} : memref<8x8x128xf32, #tpu.memory_space<vmem>>, vector<1x8x128xf32>,
    %c7_i32 = arith.constant 7 : i32
    %c0_104 = arith.constant 0 : index
    %c0_105 = arith.constant 0 : index
    %283 = vector.load %arg6[%c0_104, %c0_105] : memref<8x128xf32, #tpu.memory_space<vmem>>, vector<8x128xf32>
    %284 = arith.index_cast %c7_i32 : i32 to index
    %c0_106 = arith.constant 0 : index
    %c0_107 = arith.constant 0 : index
    %285 = vector.load %arg7[%284, %c0_106, %c0_107] : memref<8x8x384xf32, #tpu.memory_space<vmem>>, vector<1x8x384xf32>
    %286 = vector.shape_cast %285 : vector<1x8x384xf32> to vector<8x384xf32>
    %cst_108 = arith.constant dense<0.000000e+00> : vector<8x384xf32>
    %287 = tpu.matmul %283, %3, %cst_108 {dimension_numbers = #tpu.dot_dimension_numbers<[1], [0], [0], [1], [0, 0, 1, 1], [], []>} : vector<8x128xf32>, vector<128x384xf32>, vector<8x384xf32> -> vector<8x384xf32>
    %288 = vector.broadcast %7 : vector<1x384xf32> to vector<8x384xf32>
    %289 = arith.addf %287, %288 : vector<8x384xf32>
    %290 = vector.extract_strided_slice %286 {offsets = [0, 0], sizes = [8, 128], strides = [1, 1]} : vector<8x384xf32> to vector<8x128xf32>
    %291 = vector.extract_strided_slice %289 {offsets = [0, 0], sizes = [8, 128], strides = [1, 1]} : vector<8x384xf32> to vector<8x128xf32>
    %292 = arith.addf %290, %291 : vector<8x128xf32>
    %293 = arith.negf %292 : vector<8x128xf32>
    %294 = math.exp %293 : vector<8x128xf32>
    %cst_109 = arith.constant 1.000000e+00 : f32
    %295 = vector.broadcast %cst_109 : f32 to vector<8x128xf32>
    %296 = arith.addf %295, %294 : vector<8x128xf32>
    %297 = arith.divf %295, %296 : vector<8x128xf32>
    %298 = vector.extract_strided_slice %286 {offsets = [0, 128], sizes = [8, 128], strides = [1, 1]} : vector<8x384xf32> to vector<8x128xf32>
    %299 = vector.extract_strided_slice %289 {offsets = [0, 128], sizes = [8, 128], strides = [1, 1]} : vector<8x384xf32> to vector<8x128xf32>
    %300 = arith.addf %298, %299 : vector<8x128xf32>
    %301 = arith.negf %300 : vector<8x128xf32>
    %302 = math.exp %301 : vector<8x128xf32>
    %cst_110 = arith.constant 1.000000e+00 : f32
    %303 = vector.broadcast %cst_110 : f32 to vector<8x128xf32>
    %304 = arith.addf %303, %302 : vector<8x128xf32>
    %305 = arith.divf %303, %304 : vector<8x128xf32>
    %306 = vector.extract_strided_slice %286 {offsets = [0, 256], sizes = [8, 128], strides = [1, 1]} : vector<8x384xf32> to vector<8x128xf32>
    %307 = vector.extract_strided_slice %289 {offsets = [0, 256], sizes = [8, 128], strides = [1, 1]} : vector<8x384xf32> to vector<8x128xf32>
    %308 = arith.mulf %297, %307 : vector<8x128xf32>
    %309 = arith.addf %306, %308 : vector<8x128xf32>
    %310 = math.tanh %309 : vector<8x128xf32>
    %cst_111 = arith.constant 1.000000e+00 : f32
    %311 = vector.broadcast %cst_111 : f32 to vector<8x128xf32>
    %312 = arith.subf %311, %305 : vector<8x128xf32>
    %313 = arith.mulf %312, %310 : vector<8x128xf32>
    %314 = arith.mulf %305, %283 : vector<8x128xf32>
    %315 = arith.addf %313, %314 : vector<8x128xf32>
    %c0_112 = arith.constant 0 : index
    %c0_113 = arith.constant 0 : index
    %316 = vector.load %arg6[%c0_112, %c0_113] : memref<8x128xf32, #tpu.memory_space<vmem>>, vector<8x128xf32>
    tpu.vector_store %arg6[%c0_112, %c0_113], %315 {strides = array<i32>} : memref<8x128xf32, #tpu.memory_space<vmem>>, vector<8x128xf32>,
    %317 = arith.index_cast %c7_i32 : i32 to index
    %c0_114 = arith.constant 0 : index
    %c0_115 = arith.constant 0 : index
    %318 = vector.load %arg5[%317, %c0_114, %c0_115] : memref<8x8x128xf32, #tpu.memory_space<vmem>>, vector<1x8x128xf32>
    %319 = vector.shape_cast %318 : vector<1x8x128xf32> to vector<8x128xf32>
    %320 = vector.shape_cast %315 : vector<8x128xf32> to vector<1x8x128xf32>
    tpu.vector_store %arg5[%317, %c0_114, %c0_115], %320 {strides = array<i32>} : memref<8x8x128xf32, #tpu.memory_space<vmem>>, vector<1x8x128xf32>,
    %c8_i32 = arith.constant 8 : i32
    %c1 = arith.constant 1 : index
    %c0_116 = arith.constant 0 : index
    %c0_117 = arith.constant 0 : index
    %321 = vector.load %arg1[%c1, %c0_116, %c0_117] : memref<2x128x384xf32, #tpu.memory_space<vmem>>, vector<1x128x384xf32>
    %322 = vector.shape_cast %321 : vector<1x128x384xf32> to vector<128x384xf32>
    %c1_118 = arith.constant 1 : index
    %c0_119 = arith.constant 0 : index
    %c0_120 = arith.constant 0 : index
    %323 = vector.load %arg2[%c1_118, %c0_119, %c0_120] : memref<2x128x384xf32, #tpu.memory_space<vmem>>, vector<1x128x384xf32>
    %324 = vector.shape_cast %323 : vector<1x128x384xf32> to vector<128x384xf32>
    %c1_121 = arith.constant 1 : index
    %c0_122 = arith.constant 0 : index
    %c0_123 = arith.constant 0 : index
    %325 = vector.load %arg3[%c1_121, %c0_122, %c0_123] : memref<2x1x384xf32, #tpu.memory_space<vmem>>, vector<1x1x384xf32>
    %326 = vector.shape_cast %325 : vector<1x1x384xf32> to vector<1x384xf32>
    %c1_124 = arith.constant 1 : index
    %c0_125 = arith.constant 0 : index
    %c0_126 = arith.constant 0 : index
    %327 = vector.load %arg4[%c1_124, %c0_125, %c0_126] : memref<2x1x384xf32, #tpu.memory_space<vmem>>, vector<1x1x384xf32>
    %328 = vector.shape_cast %327 : vector<1x1x384xf32> to vector<1x384xf32>
    %c0_127 = arith.constant 0 : index
    %c0_128 = arith.constant 0 : index
    %c0_129 = arith.constant 0 : index
    %329 = vector.load %arg5[%c0_127, %c0_128, %c0_129] : memref<8x8x128xf32, #tpu.memory_space<vmem>>, vector<8x8x128xf32>
    %330 = vector.shape_cast %329 : vector<8x8x128xf32> to vector<64x128xf32>
    %cst_130 = arith.constant dense<0.000000e+00> : vector<64x384xf32>
    %331 = tpu.matmul %330, %322, %cst_130 {dimension_numbers = #tpu.dot_dimension_numbers<[1], [0], [0], [1], [0, 0, 1, 1], [], []>} : vector<64x128xf32>, vector<128x384xf32>, vector<64x384xf32> -> vector<64x384xf32>
    %332 = vector.broadcast %326 : vector<1x384xf32> to vector<64x384xf32>
    %333 = arith.addf %331, %332 : vector<64x384xf32>
    %334 = vector.shape_cast %333 : vector<64x384xf32> to vector<8x8x384xf32>
    %c0_131 = arith.constant 0 : index
    %c0_132 = arith.constant 0 : index
    %c0_133 = arith.constant 0 : index
    %335 = vector.load %arg7[%c0_131, %c0_132, %c0_133] : memref<8x8x384xf32, #tpu.memory_space<vmem>>, vector<8x8x384xf32>
    tpu.vector_store %arg7[%c0_131, %c0_132, %c0_133], %334 {strides = array<i32>} : memref<8x8x384xf32, #tpu.memory_space<vmem>>, vector<8x8x384xf32>,
    %cst_134 = arith.constant 0.000000e+00 : f32
    %336 = vector.broadcast %cst_134 : f32 to vector<8x128xf32>
    %c0_135 = arith.constant 0 : index
    %c0_136 = arith.constant 0 : index
    %337 = vector.load %arg6[%c0_135, %c0_136] : memref<8x128xf32, #tpu.memory_space<vmem>>, vector<8x128xf32>
    tpu.vector_store %arg6[%c0_135, %c0_136], %336 {strides = array<i32>} : memref<8x128xf32, #tpu.memory_space<vmem>>, vector<8x128xf32>,
    %c0_i32_137 = arith.constant 0 : i32
    %c0_138 = arith.constant 0 : index
    %c0_139 = arith.constant 0 : index
    %338 = vector.load %arg6[%c0_138, %c0_139] : memref<8x128xf32, #tpu.memory_space<vmem>>, vector<8x128xf32>
    %339 = arith.index_cast %c0_i32_137 : i32 to index
    %c0_140 = arith.constant 0 : index
    %c0_141 = arith.constant 0 : index
    %340 = vector.load %arg7[%339, %c0_140, %c0_141] : memref<8x8x384xf32, #tpu.memory_space<vmem>>, vector<1x8x384xf32>
    %341 = vector.shape_cast %340 : vector<1x8x384xf32> to vector<8x384xf32>
    %cst_142 = arith.constant dense<0.000000e+00> : vector<8x384xf32>
    %342 = tpu.matmul %338, %324, %cst_142 {dimension_numbers = #tpu.dot_dimension_numbers<[1], [0], [0], [1], [0, 0, 1, 1], [], []>} : vector<8x128xf32>, vector<128x384xf32>, vector<8x384xf32> -> vector<8x384xf32>
    %343 = vector.broadcast %328 : vector<1x384xf32> to vector<8x384xf32>
    %344 = arith.addf %342, %343 : vector<8x384xf32>
    %345 = vector.extract_strided_slice %341 {offsets = [0, 0], sizes = [8, 128], strides = [1, 1]} : vector<8x384xf32> to vector<8x128xf32>
    %346 = vector.extract_strided_slice %344 {offsets = [0, 0], sizes = [8, 128], strides = [1, 1]} : vector<8x384xf32> to vector<8x128xf32>
    %347 = arith.addf %345, %346 : vector<8x128xf32>
    %348 = arith.negf %347 : vector<8x128xf32>
    %349 = math.exp %348 : vector<8x128xf32>
    %cst_143 = arith.constant 1.000000e+00 : f32
    %350 = vector.broadcast %cst_143 : f32 to vector<8x128xf32>
    %351 = arith.addf %350, %349 : vector<8x128xf32>
    %352 = arith.divf %350, %351 : vector<8x128xf32>
    %353 = vector.extract_strided_slice %341 {offsets = [0, 128], sizes = [8, 128], strides = [1, 1]} : vector<8x384xf32> to vector<8x128xf32>
    %354 = vector.extract_strided_slice %344 {offsets = [0, 128], sizes = [8, 128], strides = [1, 1]} : vector<8x384xf32> to vector<8x128xf32>
    %355 = arith.addf %353, %354 : vector<8x128xf32>
    %356 = arith.negf %355 : vector<8x128xf32>
    %357 = math.exp %356 : vector<8x128xf32>
    %cst_144 = arith.constant 1.000000e+00 : f32
    %358 = vector.broadcast %cst_144 : f32 to vector<8x128xf32>
    %359 = arith.addf %358, %357 : vector<8x128xf32>
    %360 = arith.divf %358, %359 : vector<8x128xf32>
    %361 = vector.extract_strided_slice %341 {offsets = [0, 256], sizes = [8, 128], strides = [1, 1]} : vector<8x384xf32> to vector<8x128xf32>
    %362 = vector.extract_strided_slice %344 {offsets = [0, 256], sizes = [8, 128], strides = [1, 1]} : vector<8x384xf32> to vector<8x128xf32>
    %363 = arith.mulf %352, %362 : vector<8x128xf32>
    %364 = arith.addf %361, %363 : vector<8x128xf32>
    %365 = math.tanh %364 : vector<8x128xf32>
    %cst_145 = arith.constant 1.000000e+00 : f32
    %366 = vector.broadcast %cst_145 : f32 to vector<8x128xf32>
    %367 = arith.subf %366, %360 : vector<8x128xf32>
    %368 = arith.mulf %367, %365 : vector<8x128xf32>
    %369 = arith.mulf %360, %338 : vector<8x128xf32>
    %370 = arith.addf %368, %369 : vector<8x128xf32>
    %c0_146 = arith.constant 0 : index
    %c0_147 = arith.constant 0 : index
    %371 = vector.load %arg6[%c0_146, %c0_147] : memref<8x128xf32, #tpu.memory_space<vmem>>, vector<8x128xf32>
    tpu.vector_store %arg6[%c0_146, %c0_147], %370 {strides = array<i32>} : memref<8x128xf32, #tpu.memory_space<vmem>>, vector<8x128xf32>,
    %372 = arith.index_cast %c0_i32_137 : i32 to index
    %c0_148 = arith.constant 0 : index
    %c0_149 = arith.constant 0 : index
    %373 = vector.load %arg5[%372, %c0_148, %c0_149] : memref<8x8x128xf32, #tpu.memory_space<vmem>>, vector<1x8x128xf32>
    %374 = vector.shape_cast %373 : vector<1x8x128xf32> to vector<8x128xf32>
    %375 = vector.shape_cast %370 : vector<8x128xf32> to vector<1x8x128xf32>
    tpu.vector_store %arg5[%372, %c0_148, %c0_149], %375 {strides = array<i32>} : memref<8x8x128xf32, #tpu.memory_space<vmem>>, vector<1x8x128xf32>,
    %c1_i32_150 = arith.constant 1 : i32
    %c0_151 = arith.constant 0 : index
    %c0_152 = arith.constant 0 : index
    %376 = vector.load %arg6[%c0_151, %c0_152] : memref<8x128xf32, #tpu.memory_space<vmem>>, vector<8x128xf32>
    %377 = arith.index_cast %c1_i32_150 : i32 to index
    %c0_153 = arith.constant 0 : index
    %c0_154 = arith.constant 0 : index
    %378 = vector.load %arg7[%377, %c0_153, %c0_154] : memref<8x8x384xf32, #tpu.memory_space<vmem>>, vector<1x8x384xf32>
    %379 = vector.shape_cast %378 : vector<1x8x384xf32> to vector<8x384xf32>
    %cst_155 = arith.constant dense<0.000000e+00> : vector<8x384xf32>
    %380 = tpu.matmul %376, %324, %cst_155 {dimension_numbers = #tpu.dot_dimension_numbers<[1], [0], [0], [1], [0, 0, 1, 1], [], []>} : vector<8x128xf32>, vector<128x384xf32>, vector<8x384xf32> -> vector<8x384xf32>
    %381 = vector.broadcast %328 : vector<1x384xf32> to vector<8x384xf32>
    %382 = arith.addf %380, %381 : vector<8x384xf32>
    %383 = vector.extract_strided_slice %379 {offsets = [0, 0], sizes = [8, 128], strides = [1, 1]} : vector<8x384xf32> to vector<8x128xf32>
    %384 = vector.extract_strided_slice %382 {offsets = [0, 0], sizes = [8, 128], strides = [1, 1]} : vector<8x384xf32> to vector<8x128xf32>
    %385 = arith.addf %383, %384 : vector<8x128xf32>
    %386 = arith.negf %385 : vector<8x128xf32>
    %387 = math.exp %386 : vector<8x128xf32>
    %cst_156 = arith.constant 1.000000e+00 : f32
    %388 = vector.broadcast %cst_156 : f32 to vector<8x128xf32>
    %389 = arith.addf %388, %387 : vector<8x128xf32>
    %390 = arith.divf %388, %389 : vector<8x128xf32>
    %391 = vector.extract_strided_slice %379 {offsets = [0, 128], sizes = [8, 128], strides = [1, 1]} : vector<8x384xf32> to vector<8x128xf32>
    %392 = vector.extract_strided_slice %382 {offsets = [0, 128], sizes = [8, 128], strides = [1, 1]} : vector<8x384xf32> to vector<8x128xf32>
    %393 = arith.addf %391, %392 : vector<8x128xf32>
    %394 = arith.negf %393 : vector<8x128xf32>
    %395 = math.exp %394 : vector<8x128xf32>
    %cst_157 = arith.constant 1.000000e+00 : f32
    %396 = vector.broadcast %cst_157 : f32 to vector<8x128xf32>
    %397 = arith.addf %396, %395 : vector<8x128xf32>
    %398 = arith.divf %396, %397 : vector<8x128xf32>
    %399 = vector.extract_strided_slice %379 {offsets = [0, 256], sizes = [8, 128], strides = [1, 1]} : vector<8x384xf32> to vector<8x128xf32>
    %400 = vector.extract_strided_slice %382 {offsets = [0, 256], sizes = [8, 128], strides = [1, 1]} : vector<8x384xf32> to vector<8x128xf32>
    %401 = arith.mulf %390, %400 : vector<8x128xf32>
    %402 = arith.addf %399, %401 : vector<8x128xf32>
    %403 = math.tanh %402 : vector<8x128xf32>
    %cst_158 = arith.constant 1.000000e+00 : f32
    %404 = vector.broadcast %cst_158 : f32 to vector<8x128xf32>
    %405 = arith.subf %404, %398 : vector<8x128xf32>
    %406 = arith.mulf %405, %403 : vector<8x128xf32>
    %407 = arith.mulf %398, %376 : vector<8x128xf32>
    %408 = arith.addf %406, %407 : vector<8x128xf32>
    %c0_159 = arith.constant 0 : index
    %c0_160 = arith.constant 0 : index
    %409 = vector.load %arg6[%c0_159, %c0_160] : memref<8x128xf32, #tpu.memory_space<vmem>>, vector<8x128xf32>
    tpu.vector_store %arg6[%c0_159, %c0_160], %408 {strides = array<i32>} : memref<8x128xf32, #tpu.memory_space<vmem>>, vector<8x128xf32>,
    %410 = arith.index_cast %c1_i32_150 : i32 to index
    %c0_161 = arith.constant 0 : index
    %c0_162 = arith.constant 0 : index
    %411 = vector.load %arg5[%410, %c0_161, %c0_162] : memref<8x8x128xf32, #tpu.memory_space<vmem>>, vector<1x8x128xf32>
    %412 = vector.shape_cast %411 : vector<1x8x128xf32> to vector<8x128xf32>
    %413 = vector.shape_cast %408 : vector<8x128xf32> to vector<1x8x128xf32>
    tpu.vector_store %arg5[%410, %c0_161, %c0_162], %413 {strides = array<i32>} : memref<8x8x128xf32, #tpu.memory_space<vmem>>, vector<1x8x128xf32>,
    %c2_i32_163 = arith.constant 2 : i32
    %c0_164 = arith.constant 0 : index
    %c0_165 = arith.constant 0 : index
    %414 = vector.load %arg6[%c0_164, %c0_165] : memref<8x128xf32, #tpu.memory_space<vmem>>, vector<8x128xf32>
    %415 = arith.index_cast %c2_i32_163 : i32 to index
    %c0_166 = arith.constant 0 : index
    %c0_167 = arith.constant 0 : index
    %416 = vector.load %arg7[%415, %c0_166, %c0_167] : memref<8x8x384xf32, #tpu.memory_space<vmem>>, vector<1x8x384xf32>
    %417 = vector.shape_cast %416 : vector<1x8x384xf32> to vector<8x384xf32>
    %cst_168 = arith.constant dense<0.000000e+00> : vector<8x384xf32>
    %418 = tpu.matmul %414, %324, %cst_168 {dimension_numbers = #tpu.dot_dimension_numbers<[1], [0], [0], [1], [0, 0, 1, 1], [], []>} : vector<8x128xf32>, vector<128x384xf32>, vector<8x384xf32> -> vector<8x384xf32>
    %419 = vector.broadcast %328 : vector<1x384xf32> to vector<8x384xf32>
    %420 = arith.addf %418, %419 : vector<8x384xf32>
    %421 = vector.extract_strided_slice %417 {offsets = [0, 0], sizes = [8, 128], strides = [1, 1]} : vector<8x384xf32> to vector<8x128xf32>
    %422 = vector.extract_strided_slice %420 {offsets = [0, 0], sizes = [8, 128], strides = [1, 1]} : vector<8x384xf32> to vector<8x128xf32>
    %423 = arith.addf %421, %422 : vector<8x128xf32>
    %424 = arith.negf %423 : vector<8x128xf32>
    %425 = math.exp %424 : vector<8x128xf32>
    %cst_169 = arith.constant 1.000000e+00 : f32
    %426 = vector.broadcast %cst_169 : f32 to vector<8x128xf32>
    %427 = arith.addf %426, %425 : vector<8x128xf32>
    %428 = arith.divf %426, %427 : vector<8x128xf32>
    %429 = vector.extract_strided_slice %417 {offsets = [0, 128], sizes = [8, 128], strides = [1, 1]} : vector<8x384xf32> to vector<8x128xf32>
    %430 = vector.extract_strided_slice %420 {offsets = [0, 128], sizes = [8, 128], strides = [1, 1]} : vector<8x384xf32> to vector<8x128xf32>
    %431 = arith.addf %429, %430 : vector<8x128xf32>
    %432 = arith.negf %431 : vector<8x128xf32>
    %433 = math.exp %432 : vector<8x128xf32>
    %cst_170 = arith.constant 1.000000e+00 : f32
    %434 = vector.broadcast %cst_170 : f32 to vector<8x128xf32>
    %435 = arith.addf %434, %433 : vector<8x128xf32>
    %436 = arith.divf %434, %435 : vector<8x128xf32>
    %437 = vector.extract_strided_slice %417 {offsets = [0, 256], sizes = [8, 128], strides = [1, 1]} : vector<8x384xf32> to vector<8x128xf32>
    %438 = vector.extract_strided_slice %420 {offsets = [0, 256], sizes = [8, 128], strides = [1, 1]} : vector<8x384xf32> to vector<8x128xf32>
    %439 = arith.mulf %428, %438 : vector<8x128xf32>
    %440 = arith.addf %437, %439 : vector<8x128xf32>
    %441 = math.tanh %440 : vector<8x128xf32>
    %cst_171 = arith.constant 1.000000e+00 : f32
    %442 = vector.broadcast %cst_171 : f32 to vector<8x128xf32>
    %443 = arith.subf %442, %436 : vector<8x128xf32>
    %444 = arith.mulf %443, %441 : vector<8x128xf32>
    %445 = arith.mulf %436, %414 : vector<8x128xf32>
    %446 = arith.addf %444, %445 : vector<8x128xf32>
    %c0_172 = arith.constant 0 : index
    %c0_173 = arith.constant 0 : index
    %447 = vector.load %arg6[%c0_172, %c0_173] : memref<8x128xf32, #tpu.memory_space<vmem>>, vector<8x128xf32>
    tpu.vector_store %arg6[%c0_172, %c0_173], %446 {strides = array<i32>} : memref<8x128xf32, #tpu.memory_space<vmem>>, vector<8x128xf32>,
    %448 = arith.index_cast %c2_i32_163 : i32 to index
    %c0_174 = arith.constant 0 : index
    %c0_175 = arith.constant 0 : index
    %449 = vector.load %arg5[%448, %c0_174, %c0_175] : memref<8x8x128xf32, #tpu.memory_space<vmem>>, vector<1x8x128xf32>
    %450 = vector.shape_cast %449 : vector<1x8x128xf32> to vector<8x128xf32>
    %451 = vector.shape_cast %446 : vector<8x128xf32> to vector<1x8x128xf32>
    tpu.vector_store %arg5[%448, %c0_174, %c0_175], %451 {strides = array<i32>} : memref<8x8x128xf32, #tpu.memory_space<vmem>>, vector<1x8x128xf32>,
    %c3_i32_176 = arith.constant 3 : i32
    %c0_177 = arith.constant 0 : index
    %c0_178 = arith.constant 0 : index
    %452 = vector.load %arg6[%c0_177, %c0_178] : memref<8x128xf32, #tpu.memory_space<vmem>>, vector<8x128xf32>
    %453 = arith.index_cast %c3_i32_176 : i32 to index
    %c0_179 = arith.constant 0 : index
    %c0_180 = arith.constant 0 : index
    %454 = vector.load %arg7[%453, %c0_179, %c0_180] : memref<8x8x384xf32, #tpu.memory_space<vmem>>, vector<1x8x384xf32>
    %455 = vector.shape_cast %454 : vector<1x8x384xf32> to vector<8x384xf32>
    %cst_181 = arith.constant dense<0.000000e+00> : vector<8x384xf32>
    %456 = tpu.matmul %452, %324, %cst_181 {dimension_numbers = #tpu.dot_dimension_numbers<[1], [0], [0], [1], [0, 0, 1, 1], [], []>} : vector<8x128xf32>, vector<128x384xf32>, vector<8x384xf32> -> vector<8x384xf32>
    %457 = vector.broadcast %328 : vector<1x384xf32> to vector<8x384xf32>
    %458 = arith.addf %456, %457 : vector<8x384xf32>
    %459 = vector.extract_strided_slice %455 {offsets = [0, 0], sizes = [8, 128], strides = [1, 1]} : vector<8x384xf32> to vector<8x128xf32>
    %460 = vector.extract_strided_slice %458 {offsets = [0, 0], sizes = [8, 128], strides = [1, 1]} : vector<8x384xf32> to vector<8x128xf32>
    %461 = arith.addf %459, %460 : vector<8x128xf32>
    %462 = arith.negf %461 : vector<8x128xf32>
    %463 = math.exp %462 : vector<8x128xf32>
    %cst_182 = arith.constant 1.000000e+00 : f32
    %464 = vector.broadcast %cst_182 : f32 to vector<8x128xf32>
    %465 = arith.addf %464, %463 : vector<8x128xf32>
    %466 = arith.divf %464, %465 : vector<8x128xf32>
    %467 = vector.extract_strided_slice %455 {offsets = [0, 128], sizes = [8, 128], strides = [1, 1]} : vector<8x384xf32> to vector<8x128xf32>
    %468 = vector.extract_strided_slice %458 {offsets = [0, 128], sizes = [8, 128], strides = [1, 1]} : vector<8x384xf32> to vector<8x128xf32>
    %469 = arith.addf %467, %468 : vector<8x128xf32>
    %470 = arith.negf %469 : vector<8x128xf32>
    %471 = math.exp %470 : vector<8x128xf32>
    %cst_183 = arith.constant 1.000000e+00 : f32
    %472 = vector.broadcast %cst_183 : f32 to vector<8x128xf32>
    %473 = arith.addf %472, %471 : vector<8x128xf32>
    %474 = arith.divf %472, %473 : vector<8x128xf32>
    %475 = vector.extract_strided_slice %455 {offsets = [0, 256], sizes = [8, 128], strides = [1, 1]} : vector<8x384xf32> to vector<8x128xf32>
    %476 = vector.extract_strided_slice %458 {offsets = [0, 256], sizes = [8, 128], strides = [1, 1]} : vector<8x384xf32> to vector<8x128xf32>
    %477 = arith.mulf %466, %476 : vector<8x128xf32>
    %478 = arith.addf %475, %477 : vector<8x128xf32>
    %479 = math.tanh %478 : vector<8x128xf32>
    %cst_184 = arith.constant 1.000000e+00 : f32
    %480 = vector.broadcast %cst_184 : f32 to vector<8x128xf32>
    %481 = arith.subf %480, %474 : vector<8x128xf32>
    %482 = arith.mulf %481, %479 : vector<8x128xf32>
    %483 = arith.mulf %474, %452 : vector<8x128xf32>
    %484 = arith.addf %482, %483 : vector<8x128xf32>
    %c0_185 = arith.constant 0 : index
    %c0_186 = arith.constant 0 : index
    %485 = vector.load %arg6[%c0_185, %c0_186] : memref<8x128xf32, #tpu.memory_space<vmem>>, vector<8x128xf32>
    tpu.vector_store %arg6[%c0_185, %c0_186], %484 {strides = array<i32>} : memref<8x128xf32, #tpu.memory_space<vmem>>, vector<8x128xf32>,
    %486 = arith.index_cast %c3_i32_176 : i32 to index
    %c0_187 = arith.constant 0 : index
    %c0_188 = arith.constant 0 : index
    %487 = vector.load %arg5[%486, %c0_187, %c0_188] : memref<8x8x128xf32, #tpu.memory_space<vmem>>, vector<1x8x128xf32>
    %488 = vector.shape_cast %487 : vector<1x8x128xf32> to vector<8x128xf32>
    %489 = vector.shape_cast %484 : vector<8x128xf32> to vector<1x8x128xf32>
    tpu.vector_store %arg5[%486, %c0_187, %c0_188], %489 {strides = array<i32>} : memref<8x8x128xf32, #tpu.memory_space<vmem>>, vector<1x8x128xf32>,
    %c4_i32_189 = arith.constant 4 : i32
    %c0_190 = arith.constant 0 : index
    %c0_191 = arith.constant 0 : index
    %490 = vector.load %arg6[%c0_190, %c0_191] : memref<8x128xf32, #tpu.memory_space<vmem>>, vector<8x128xf32>
    %491 = arith.index_cast %c4_i32_189 : i32 to index
    %c0_192 = arith.constant 0 : index
    %c0_193 = arith.constant 0 : index
    %492 = vector.load %arg7[%491, %c0_192, %c0_193] : memref<8x8x384xf32, #tpu.memory_space<vmem>>, vector<1x8x384xf32>
    %493 = vector.shape_cast %492 : vector<1x8x384xf32> to vector<8x384xf32>
    %cst_194 = arith.constant dense<0.000000e+00> : vector<8x384xf32>
    %494 = tpu.matmul %490, %324, %cst_194 {dimension_numbers = #tpu.dot_dimension_numbers<[1], [0], [0], [1], [0, 0, 1, 1], [], []>} : vector<8x128xf32>, vector<128x384xf32>, vector<8x384xf32> -> vector<8x384xf32>
    %495 = vector.broadcast %328 : vector<1x384xf32> to vector<8x384xf32>
    %496 = arith.addf %494, %495 : vector<8x384xf32>
    %497 = vector.extract_strided_slice %493 {offsets = [0, 0], sizes = [8, 128], strides = [1, 1]} : vector<8x384xf32> to vector<8x128xf32>
    %498 = vector.extract_strided_slice %496 {offsets = [0, 0], sizes = [8, 128], strides = [1, 1]} : vector<8x384xf32> to vector<8x128xf32>
    %499 = arith.addf %497, %498 : vector<8x128xf32>
    %500 = arith.negf %499 : vector<8x128xf32>
    %501 = math.exp %500 : vector<8x128xf32>
    %cst_195 = arith.constant 1.000000e+00 : f32
    %502 = vector.broadcast %cst_195 : f32 to vector<8x128xf32>
    %503 = arith.addf %502, %501 : vector<8x128xf32>
    %504 = arith.divf %502, %503 : vector<8x128xf32>
    %505 = vector.extract_strided_slice %493 {offsets = [0, 128], sizes = [8, 128], strides = [1, 1]} : vector<8x384xf32> to vector<8x128xf32>
    %506 = vector.extract_strided_slice %496 {offsets = [0, 128], sizes = [8, 128], strides = [1, 1]} : vector<8x384xf32> to vector<8x128xf32>
    %507 = arith.addf %505, %506 : vector<8x128xf32>
    %508 = arith.negf %507 : vector<8x128xf32>
    %509 = math.exp %508 : vector<8x128xf32>
    %cst_196 = arith.constant 1.000000e+00 : f32
    %510 = vector.broadcast %cst_196 : f32 to vector<8x128xf32>
    %511 = arith.addf %510, %509 : vector<8x128xf32>
    %512 = arith.divf %510, %511 : vector<8x128xf32>
    %513 = vector.extract_strided_slice %493 {offsets = [0, 256], sizes = [8, 128], strides = [1, 1]} : vector<8x384xf32> to vector<8x128xf32>
    %514 = vector.extract_strided_slice %496 {offsets = [0, 256], sizes = [8, 128], strides = [1, 1]} : vector<8x384xf32> to vector<8x128xf32>
    %515 = arith.mulf %504, %514 : vector<8x128xf32>
    %516 = arith.addf %513, %515 : vector<8x128xf32>
    %517 = math.tanh %516 : vector<8x128xf32>
    %cst_197 = arith.constant 1.000000e+00 : f32
    %518 = vector.broadcast %cst_197 : f32 to vector<8x128xf32>
    %519 = arith.subf %518, %512 : vector<8x128xf32>
    %520 = arith.mulf %519, %517 : vector<8x128xf32>
    %521 = arith.mulf %512, %490 : vector<8x128xf32>
    %522 = arith.addf %520, %521 : vector<8x128xf32>
    %c0_198 = arith.constant 0 : index
    %c0_199 = arith.constant 0 : index
    %523 = vector.load %arg6[%c0_198, %c0_199] : memref<8x128xf32, #tpu.memory_space<vmem>>, vector<8x128xf32>
    tpu.vector_store %arg6[%c0_198, %c0_199], %522 {strides = array<i32>} : memref<8x128xf32, #tpu.memory_space<vmem>>, vector<8x128xf32>,
    %524 = arith.index_cast %c4_i32_189 : i32 to index
    %c0_200 = arith.constant 0 : index
    %c0_201 = arith.constant 0 : index
    %525 = vector.load %arg5[%524, %c0_200, %c0_201] : memref<8x8x128xf32, #tpu.memory_space<vmem>>, vector<1x8x128xf32>
    %526 = vector.shape_cast %525 : vector<1x8x128xf32> to vector<8x128xf32>
    %527 = vector.shape_cast %522 : vector<8x128xf32> to vector<1x8x128xf32>
    tpu.vector_store %arg5[%524, %c0_200, %c0_201], %527 {strides = array<i32>} : memref<8x8x128xf32, #tpu.memory_space<vmem>>, vector<1x8x128xf32>,
    %c5_i32_202 = arith.constant 5 : i32
    %c0_203 = arith.constant 0 : index
    %c0_204 = arith.constant 0 : index
    %528 = vector.load %arg6[%c0_203, %c0_204] : memref<8x128xf32, #tpu.memory_space<vmem>>, vector<8x128xf32>
    %529 = arith.index_cast %c5_i32_202 : i32 to index
    %c0_205 = arith.constant 0 : index
    %c0_206 = arith.constant 0 : index
    %530 = vector.load %arg7[%529, %c0_205, %c0_206] : memref<8x8x384xf32, #tpu.memory_space<vmem>>, vector<1x8x384xf32>
    %531 = vector.shape_cast %530 : vector<1x8x384xf32> to vector<8x384xf32>
    %cst_207 = arith.constant dense<0.000000e+00> : vector<8x384xf32>
    %532 = tpu.matmul %528, %324, %cst_207 {dimension_numbers = #tpu.dot_dimension_numbers<[1], [0], [0], [1], [0, 0, 1, 1], [], []>} : vector<8x128xf32>, vector<128x384xf32>, vector<8x384xf32> -> vector<8x384xf32>
    %533 = vector.broadcast %328 : vector<1x384xf32> to vector<8x384xf32>
    %534 = arith.addf %532, %533 : vector<8x384xf32>
    %535 = vector.extract_strided_slice %531 {offsets = [0, 0], sizes = [8, 128], strides = [1, 1]} : vector<8x384xf32> to vector<8x128xf32>
    %536 = vector.extract_strided_slice %534 {offsets = [0, 0], sizes = [8, 128], strides = [1, 1]} : vector<8x384xf32> to vector<8x128xf32>
    %537 = arith.addf %535, %536 : vector<8x128xf32>
    %538 = arith.negf %537 : vector<8x128xf32>
    %539 = math.exp %538 : vector<8x128xf32>
    %cst_208 = arith.constant 1.000000e+00 : f32
    %540 = vector.broadcast %cst_208 : f32 to vector<8x128xf32>
    %541 = arith.addf %540, %539 : vector<8x128xf32>
    %542 = arith.divf %540, %541 : vector<8x128xf32>
    %543 = vector.extract_strided_slice %531 {offsets = [0, 128], sizes = [8, 128], strides = [1, 1]} : vector<8x384xf32> to vector<8x128xf32>
    %544 = vector.extract_strided_slice %534 {offsets = [0, 128], sizes = [8, 128], strides = [1, 1]} : vector<8x384xf32> to vector<8x128xf32>
    %545 = arith.addf %543, %544 : vector<8x128xf32>
    %546 = arith.negf %545 : vector<8x128xf32>
    %547 = math.exp %546 : vector<8x128xf32>
    %cst_209 = arith.constant 1.000000e+00 : f32
    %548 = vector.broadcast %cst_209 : f32 to vector<8x128xf32>
    %549 = arith.addf %548, %547 : vector<8x128xf32>
    %550 = arith.divf %548, %549 : vector<8x128xf32>
    %551 = vector.extract_strided_slice %531 {offsets = [0, 256], sizes = [8, 128], strides = [1, 1]} : vector<8x384xf32> to vector<8x128xf32>
    %552 = vector.extract_strided_slice %534 {offsets = [0, 256], sizes = [8, 128], strides = [1, 1]} : vector<8x384xf32> to vector<8x128xf32>
    %553 = arith.mulf %542, %552 : vector<8x128xf32>
    %554 = arith.addf %551, %553 : vector<8x128xf32>
    %555 = math.tanh %554 : vector<8x128xf32>
    %cst_210 = arith.constant 1.000000e+00 : f32
    %556 = vector.broadcast %cst_210 : f32 to vector<8x128xf32>
    %557 = arith.subf %556, %550 : vector<8x128xf32>
    %558 = arith.mulf %557, %555 : vector<8x128xf32>
    %559 = arith.mulf %550, %528 : vector<8x128xf32>
    %560 = arith.addf %558, %559 : vector<8x128xf32>
    %c0_211 = arith.constant 0 : index
    %c0_212 = arith.constant 0 : index
    %561 = vector.load %arg6[%c0_211, %c0_212] : memref<8x128xf32, #tpu.memory_space<vmem>>, vector<8x128xf32>
    tpu.vector_store %arg6[%c0_211, %c0_212], %560 {strides = array<i32>} : memref<8x128xf32, #tpu.memory_space<vmem>>, vector<8x128xf32>,
    %562 = arith.index_cast %c5_i32_202 : i32 to index
    %c0_213 = arith.constant 0 : index
    %c0_214 = arith.constant 0 : index
    %563 = vector.load %arg5[%562, %c0_213, %c0_214] : memref<8x8x128xf32, #tpu.memory_space<vmem>>, vector<1x8x128xf32>
    %564 = vector.shape_cast %563 : vector<1x8x128xf32> to vector<8x128xf32>
    %565 = vector.shape_cast %560 : vector<8x128xf32> to vector<1x8x128xf32>
    tpu.vector_store %arg5[%562, %c0_213, %c0_214], %565 {strides = array<i32>} : memref<8x8x128xf32, #tpu.memory_space<vmem>>, vector<1x8x128xf32>,
    %c6_i32_215 = arith.constant 6 : i32
    %c0_216 = arith.constant 0 : index
    %c0_217 = arith.constant 0 : index
    %566 = vector.load %arg6[%c0_216, %c0_217] : memref<8x128xf32, #tpu.memory_space<vmem>>, vector<8x128xf32>
    %567 = arith.index_cast %c6_i32_215 : i32 to index
    %c0_218 = arith.constant 0 : index
    %c0_219 = arith.constant 0 : index
    %568 = vector.load %arg7[%567, %c0_218, %c0_219] : memref<8x8x384xf32, #tpu.memory_space<vmem>>, vector<1x8x384xf32>
    %569 = vector.shape_cast %568 : vector<1x8x384xf32> to vector<8x384xf32>
    %cst_220 = arith.constant dense<0.000000e+00> : vector<8x384xf32>
    %570 = tpu.matmul %566, %324, %cst_220 {dimension_numbers = #tpu.dot_dimension_numbers<[1], [0], [0], [1], [0, 0, 1, 1], [], []>} : vector<8x128xf32>, vector<128x384xf32>, vector<8x384xf32> -> vector<8x384xf32>
    %571 = vector.broadcast %328 : vector<1x384xf32> to vector<8x384xf32>
    %572 = arith.addf %570, %571 : vector<8x384xf32>
    %573 = vector.extract_strided_slice %569 {offsets = [0, 0], sizes = [8, 128], strides = [1, 1]} : vector<8x384xf32> to vector<8x128xf32>
    %574 = vector.extract_strided_slice %572 {offsets = [0, 0], sizes = [8, 128], strides = [1, 1]} : vector<8x384xf32> to vector<8x128xf32>
    %575 = arith.addf %573, %574 : vector<8x128xf32>
    %576 = arith.negf %575 : vector<8x128xf32>
    %577 = math.exp %576 : vector<8x128xf32>
    %cst_221 = arith.constant 1.000000e+00 : f32
    %578 = vector.broadcast %cst_221 : f32 to vector<8x128xf32>
    %579 = arith.addf %578, %577 : vector<8x128xf32>
    %580 = arith.divf %578, %579 : vector<8x128xf32>
    %581 = vector.extract_strided_slice %569 {offsets = [0, 128], sizes = [8, 128], strides = [1, 1]} : vector<8x384xf32> to vector<8x128xf32>
    %582 = vector.extract_strided_slice %572 {offsets = [0, 128], sizes = [8, 128], strides = [1, 1]} : vector<8x384xf32> to vector<8x128xf32>
    %583 = arith.addf %581, %582 : vector<8x128xf32>
    %584 = arith.negf %583 : vector<8x128xf32>
    %585 = math.exp %584 : vector<8x128xf32>
    %cst_222 = arith.constant 1.000000e+00 : f32
    %586 = vector.broadcast %cst_222 : f32 to vector<8x128xf32>
    %587 = arith.addf %586, %585 : vector<8x128xf32>
    %588 = arith.divf %586, %587 : vector<8x128xf32>
    %589 = vector.extract_strided_slice %569 {offsets = [0, 256], sizes = [8, 128], strides = [1, 1]} : vector<8x384xf32> to vector<8x128xf32>
    %590 = vector.extract_strided_slice %572 {offsets = [0, 256], sizes = [8, 128], strides = [1, 1]} : vector<8x384xf32> to vector<8x128xf32>
    %591 = arith.mulf %580, %590 : vector<8x128xf32>
    %592 = arith.addf %589, %591 : vector<8x128xf32>
    %593 = math.tanh %592 : vector<8x128xf32>
    %cst_223 = arith.constant 1.000000e+00 : f32
    %594 = vector.broadcast %cst_223 : f32 to vector<8x128xf32>
    %595 = arith.subf %594, %588 : vector<8x128xf32>
    %596 = arith.mulf %595, %593 : vector<8x128xf32>
    %597 = arith.mulf %588, %566 : vector<8x128xf32>
    %598 = arith.addf %596, %597 : vector<8x128xf32>
    %c0_224 = arith.constant 0 : index
    %c0_225 = arith.constant 0 : index
    %599 = vector.load %arg6[%c0_224, %c0_225] : memref<8x128xf32, #tpu.memory_space<vmem>>, vector<8x128xf32>
    tpu.vector_store %arg6[%c0_224, %c0_225], %598 {strides = array<i32>} : memref<8x128xf32, #tpu.memory_space<vmem>>, vector<8x128xf32>,
    %600 = arith.index_cast %c6_i32_215 : i32 to index
    %c0_226 = arith.constant 0 : index
    %c0_227 = arith.constant 0 : index
    %601 = vector.load %arg5[%600, %c0_226, %c0_227] : memref<8x8x128xf32, #tpu.memory_space<vmem>>, vector<1x8x128xf32>
    %602 = vector.shape_cast %601 : vector<1x8x128xf32> to vector<8x128xf32>
    %603 = vector.shape_cast %598 : vector<8x128xf32> to vector<1x8x128xf32>
    tpu.vector_store %arg5[%600, %c0_226, %c0_227], %603 {strides = array<i32>} : memref<8x8x128xf32, #tpu.memory_space<vmem>>, vector<1x8x128xf32>,
    %c7_i32_228 = arith.constant 7 : i32
    %c0_229 = arith.constant 0 : index
    %c0_230 = arith.constant 0 : index
    %604 = vector.load %arg6[%c0_229, %c0_230] : memref<8x128xf32, #tpu.memory_space<vmem>>, vector<8x128xf32>
    %605 = arith.index_cast %c7_i32_228 : i32 to index
    %c0_231 = arith.constant 0 : index
    %c0_232 = arith.constant 0 : index
    %606 = vector.load %arg7[%605, %c0_231, %c0_232] : memref<8x8x384xf32, #tpu.memory_space<vmem>>, vector<1x8x384xf32>
    %607 = vector.shape_cast %606 : vector<1x8x384xf32> to vector<8x384xf32>
    %cst_233 = arith.constant dense<0.000000e+00> : vector<8x384xf32>
    %608 = tpu.matmul %604, %324, %cst_233 {dimension_numbers = #tpu.dot_dimension_numbers<[1], [0], [0], [1], [0, 0, 1, 1], [], []>} : vector<8x128xf32>, vector<128x384xf32>, vector<8x384xf32> -> vector<8x384xf32>
    %609 = vector.broadcast %328 : vector<1x384xf32> to vector<8x384xf32>
    %610 = arith.addf %608, %609 : vector<8x384xf32>
    %611 = vector.extract_strided_slice %607 {offsets = [0, 0], sizes = [8, 128], strides = [1, 1]} : vector<8x384xf32> to vector<8x128xf32>
    %612 = vector.extract_strided_slice %610 {offsets = [0, 0], sizes = [8, 128], strides = [1, 1]} : vector<8x384xf32> to vector<8x128xf32>
    %613 = arith.addf %611, %612 : vector<8x128xf32>
    %614 = arith.negf %613 : vector<8x128xf32>
    %615 = math.exp %614 : vector<8x128xf32>
    %cst_234 = arith.constant 1.000000e+00 : f32
    %616 = vector.broadcast %cst_234 : f32 to vector<8x128xf32>
    %617 = arith.addf %616, %615 : vector<8x128xf32>
    %618 = arith.divf %616, %617 : vector<8x128xf32>
    %619 = vector.extract_strided_slice %607 {offsets = [0, 128], sizes = [8, 128], strides = [1, 1]} : vector<8x384xf32> to vector<8x128xf32>
    %620 = vector.extract_strided_slice %610 {offsets = [0, 128], sizes = [8, 128], strides = [1, 1]} : vector<8x384xf32> to vector<8x128xf32>
    %621 = arith.addf %619, %620 : vector<8x128xf32>
    %622 = arith.negf %621 : vector<8x128xf32>
    %623 = math.exp %622 : vector<8x128xf32>
    %cst_235 = arith.constant 1.000000e+00 : f32
    %624 = vector.broadcast %cst_235 : f32 to vector<8x128xf32>
    %625 = arith.addf %624, %623 : vector<8x128xf32>
    %626 = arith.divf %624, %625 : vector<8x128xf32>
    %627 = vector.extract_strided_slice %607 {offsets = [0, 256], sizes = [8, 128], strides = [1, 1]} : vector<8x384xf32> to vector<8x128xf32>
    %628 = vector.extract_strided_slice %610 {offsets = [0, 256], sizes = [8, 128], strides = [1, 1]} : vector<8x384xf32> to vector<8x128xf32>
    %629 = arith.mulf %618, %628 : vector<8x128xf32>
    %630 = arith.addf %627, %629 : vector<8x128xf32>
    %631 = math.tanh %630 : vector<8x128xf32>
    %cst_236 = arith.constant 1.000000e+00 : f32
    %632 = vector.broadcast %cst_236 : f32 to vector<8x128xf32>
    %633 = arith.subf %632, %626 : vector<8x128xf32>
    %634 = arith.mulf %633, %631 : vector<8x128xf32>
    %635 = arith.mulf %626, %604 : vector<8x128xf32>
    %636 = arith.addf %634, %635 : vector<8x128xf32>
    %c0_237 = arith.constant 0 : index
    %c0_238 = arith.constant 0 : index
    %637 = vector.load %arg6[%c0_237, %c0_238] : memref<8x128xf32, #tpu.memory_space<vmem>>, vector<8x128xf32>
    tpu.vector_store %arg6[%c0_237, %c0_238], %636 {strides = array<i32>} : memref<8x128xf32, #tpu.memory_space<vmem>>, vector<8x128xf32>,
    %638 = arith.index_cast %c7_i32_228 : i32 to index
    %c0_239 = arith.constant 0 : index
    %c0_240 = arith.constant 0 : index
    %639 = vector.load %arg5[%638, %c0_239, %c0_240] : memref<8x8x128xf32, #tpu.memory_space<vmem>>, vector<1x8x128xf32>
    %640 = vector.shape_cast %639 : vector<1x8x128xf32> to vector<8x128xf32>
    %641 = vector.shape_cast %636 : vector<8x128xf32> to vector<1x8x128xf32>
    tpu.vector_store %arg5[%638, %c0_239, %c0_240], %641 {strides = array<i32>} : memref<8x8x128xf32, #tpu.memory_space<vmem>>, vector<1x8x128xf32>,
    %c8_i32_241 = arith.constant 8 : i32
    return
  }
}

</mosaic_0001>

<llo_original>
// kernel: _gru_apply.1
$region0: #{_gru_apply.1}
  #allocation0 [shape = 'u32[]', space=smem, size = 0x4, offset = 0x4, fixed_abs, tag = 'smem constant byte address 0x4 - core index']
  #allocation1 [shape = 'u32[144,128]{1,0:T(1,128)}', space=vmem, size = 0x12000, scoped, tag = 'internal scratch']
  #allocation2 [shape = 'f32[8,128]{1,0:T(8,128)}', space=vmem, size = 0x1000, scoped, tag = 'scratch operand']
  #allocation3 [shape = 'f32[8,8,384]{2,1,0:T(8,128)}', space=vmem, size = 0x18000, scoped, tag = 'scratch operand']
  %s0 = inlined_call_operand.vmem [shape: f32[8,8,128], index: 0, kind: input, shape index: {}]
  %s1 = inlined_call_operand.hbm [shape: f32[2,128,384], index: 1, kind: input, shape index: {}]
  %s2 = inlined_call_operand.hbm [shape: f32[2,128,384], index: 2, kind: input, shape index: {}]
  %s3 = inlined_call_operand.vmem [shape: f32[2,1,384], index: 3, kind: input, shape index: {}]
  %s4 = inlined_call_operand.vmem [shape: f32[2,1,384], index: 4, kind: input, shape index: {}]
  %s5 = inlined_call_operand.vmem [shape: f32[8,8,128], index: 5, kind: output, shape index: {}]
  %s6 = sld [smem:[#allocation0]]
  $region38: #{_gru_apply.1} parent=0
    _
  %s8 = ssub.s32 1, %s6
  %s9 = scalar_select 0, %s8, %s6
  $region1: #{_gru_apply.1} parent=0
    #allocation4 [shape = 'u8[393216]{0}', space=vmem, size = 0x60000, scoped, tag = 'input window, operand 1, single buffered']
    #allocation5 [shape = 's32[1]{0}', space=sflag, size = 0x4, scoped, tag = 'scoped memory for _gru_apply.1']
    #allocation6 [shape = 'u8[393216]{0}', space=vmem, size = 0x60000, scoped, tag = 'input window, operand 2, single buffered']
    #allocation7 [shape = 's32[1]{0}', space=sflag, size = 0x4, scoped, tag = 'scoped memory for _gru_apply.1']
    %10 = vsyncpa [#allocation5], 0
    %11 = vsyncpa [#allocation7], 0
    // Predicated region
    $region2: #{_gru_apply.1} parent=1 // pred_check
      _
    $region3: #{_gru_apply.1} parent=1 // pred_check_branch
      %13 = sbr.rel (0) target = $region5
    $region4: #{_gru_apply.1} parent=1 // pred_region
      _
    $region5: #{_gru_apply.1} parent=1 // pred_fallthru
      _
    // Predicated region
    $region6: #{_gru_apply.1} parent=1 // pred_check
      _
    $region7: #{_gru_apply.1} parent=1 // pred_check_branch
      %15 = sbr.rel (0) target = $region9
    $region8: #{_gru_apply.1} parent=1 // pred_region
      %s17 = ssub.s32 12288, 12288
      %18 = vsyncadd [#allocation5], %s17
      %s19 = sshll.u32 [#allocation4], 4
      %s20 = int_to_ptr.vmem [resolvable:$true] %s19
      %25 = dma.hbm_to_vmem [thread:$0]  %s1, 12288, %s20, [#allocation5], 384, 384, 24
    $region9: #{_gru_apply.1} parent=1 // pred_fallthru
      _
    // Predicated region
    $region10: #{_gru_apply.1} parent=1 // pred_check
      _
    $region11: #{_gru_apply.1} parent=1 // pred_check_branch
      %27 = sbr.rel (0) target = $region13
    $region12: #{_gru_apply.1} parent=1 // pred_region
      %s29 = ssub.s32 12288, 12288
      %30 = vsyncadd [#allocation7], %s29
      %s31 = sshll.u32 [#allocation6], 4
      %s32 = int_to_ptr.vmem [resolvable:$true] %s31
      %37 = dma.hbm_to_vmem [thread:$0]  %s2, 12288, %s32, [#allocation7], 384, 384, 24
    $region13: #{_gru_apply.1} parent=1 // pred_fallthru
      _
    // Predicated region
    $region14: #{_gru_apply.1} parent=1 // pred_check
      _
    $region15: #{_gru_apply.1} parent=1 // pred_check_branch
      %39 = sbr.rel (0) target = $region17
    $region16: #{_gru_apply.1} parent=1 // pred_region
      _
    $region17: #{_gru_apply.1} parent=1 // pred_fallthru
      _
    // Predicated region
    $region18: #{_gru_apply.1} parent=1 // pred_check
      _
    $region19: #{_gru_apply.1} parent=1 // pred_check_branch
      %41 = sbr.rel (0) target = $region21
    $region20: #{_gru_apply.1} parent=1 // pred_region
      _
    $region21: #{_gru_apply.1} parent=1 // pred_fallthru
      _
    // Predicated region
    $region22: #{_gru_apply.1} parent=1 // pred_check
      _
    $region23: #{_gru_apply.1} parent=1 // pred_check_branch
      %43 = sbr.rel (0) target = $region25
    $region24: #{_gru_apply.1} parent=1 // pred_region
      %44 = dma.done [#allocation5], 12288
    $region25: #{_gru_apply.1} parent=1 // pred_fallthru
      _
    // Predicated region
    $region26: #{_gru_apply.1} parent=1 // pred_check
      _
    $region27: #{_gru_apply.1} parent=1 // pred_check_branch
      %46 = sbr.rel (0) target = $region29
    $region28: #{_gru_apply.1} parent=1 // pred_region
      %47 = dma.done [#allocation7], 12288
    $region29: #{_gru_apply.1} parent=1 // pred_fallthru
      _
    %v48 = vld [vmem:[#allocation4] sm:$0xff]
    %v49 = vld [vmem:[#allocation4 + $0x8] sm:$0xff]
    %v50 = vld [vmem:[#allocation4 + $0x10] sm:$0xff]
    %v51 = vld [vmem:[#allocation4 + $0x18] sm:$0xff]
    %v52 = vld [vmem:[#allocation4 + $0x20] sm:$0xff]
    %v53 = vld [vmem:[#allocation4 + $0x28] sm:$0xff]
    %v54 = vld [vmem:[#allocation4 + $0x30] sm:$0xff]
    %v55 = vld [vmem:[#allocation4 + $0x38] sm:$0xff]
    %v56 = vld [vmem:[#allocation4 + $0x40] sm:$0xff]
    %v57 = vld [vmem:[#allocation4 + $0x48] sm:$0xff]
    %v58 = vld [vmem:[#allocation4 + $0x50] sm:$0xff]
    %v59 = vld [vmem:[#allocation4 + $0x58] sm:$0xff]
    %v60 = vld [vmem:[#allocation4 + $0x60] sm:$0xff]
    %v61 = vld [vmem:[#allocation4 + $0x68] sm:$0xff]
    %v62 = vld [vmem:[#allocation4 + $0x70] sm:$0xff]
    %v63 = vld [vmem:[#allocation4 + $0x78] sm:$0xff]
    %v64 = vld [vmem:[#allocation4 + $0x80] sm:$0xff]
    %v65 = vld [vmem:[#allocation4 + $0x88] sm:$0xff]
    %v66 = vld [vmem:[#allocation4 + $0x90] sm:$0xff]
    %v67 = vld [vmem:[#allocation4 + $0x98] sm:$0xff]
    %v68 = vld [vmem:[#allocation4 + $0xa0] sm:$0xff]
    %v69 = vld [vmem:[#allocation4 + $0xa8] sm:$0xff]
    %v70 = vld [vmem:[#allocation4 + $0xb0] sm:$0xff]
    %v71 = vld [vmem:[#allocation4 + $0xb8] sm:$0xff]
    %v72 = vld [vmem:[#allocation4 + $0xc0] sm:$0xff]
    %v73 = vld [vmem:[#allocation4 + $0xc8] sm:$0xff]
    %v74 = vld [vmem:[#allocation4 + $0xd0] sm:$0xff]
    %v75 = vld [vmem:[#allocation4 + $0xd8] sm:$0xff]
    %v76 = vld [vmem:[#allocation4 + $0xe0] sm:$0xff]
    %v77 = vld [vmem:[#allocation4 + $0xe8] sm:$0xff]
    %v78 = vld [vmem:[#allocation4 + $0xf0] sm:$0xff]
    %v79 = vld [vmem:[#allocation4 + $0xf8] sm:$0xff]
    %v80 = vld [vmem:[#allocation4 + $0x100] sm:$0xff]
    %v81 = vld [vmem:[#allocation4 + $0x108] sm:$0xff]
    %v82 = vld [vmem:[#allocation4 + $0x110] sm:$0xff]
    %v83 = vld [vmem:[#allocation4 + $0x118] sm:$0xff]
    %v84 = vld [vmem:[#allocation4 + $0x120] sm:$0xff]
    %v85 = vld [vmem:[#allocation4 + $0x128] sm:$0xff]
    %v86 = vld [vmem:[#allocation4 + $0x130] sm:$0xff]
    %v87 = vld [vmem:[#allocation4 + $0x138] sm:$0xff]
    %v88 = vld [vmem:[#allocation4 + $0x140] sm:$0xff]
    %v89 = vld [vmem:[#allocation4 + $0x148] sm:$0xff]
    %v90 = vld [vmem:[#allocation4 + $0x150] sm:$0xff]
    %v91 = vld [vmem:[#allocation4 + $0x158] sm:$0xff]
    %v92 = vld [vmem:[#allocation4 + $0x160] sm:$0xff]
    %v93 = vld [vmem:[#allocation4 + $0x168] sm:$0xff]
    %v94 = vld [vmem:[#allocation4 + $0x170] sm:$0xff]
    %v95 = vld [vmem:[#allocation4 + $0x178] sm:$0xff]
    %v96 = vld [vmem:[#allocation6] sm:$0xff]
    %v97 = vld [vmem:[#allocation6 + $0x8] sm:$0xff]
    %v98 = vld [vmem:[#allocation6 + $0x10] sm:$0xff]
    %v99 = vld [vmem:[#allocation6 + $0x18] sm:$0xff]
    %v100 = vld [vmem:[#allocation6 + $0x20] sm:$0xff]
    %v101 = vld [vmem:[#allocation6 + $0x28] sm:$0xff]
    %v102 = vld [vmem:[#allocation6 + $0x30] sm:$0xff]
    %v103 = vld [vmem:[#allocation6 + $0x38] sm:$0xff]
    %v104 = vld [vmem:[#allocation6 + $0x40] sm:$0xff]
    %v105 = vld [vmem:[#allocation6 + $0x48] sm:$0xff]
    %v106 = vld [vmem:[#allocation6 + $0x50] sm:$0xff]
    %v107 = vld [vmem:[#allocation6 + $0x58] sm:$0xff]
    %v108 = vld [vmem:[#allocation6 + $0x60] sm:$0xff]
    %v109 = vld [vmem:[#allocation6 + $0x68] sm:$0xff]
    %v110 = vld [vmem:[#allocation6 + $0x70] sm:$0xff]
    %v111 = vld [vmem:[#allocation6 + $0x78] sm:$0xff]
    %v112 = vld [vmem:[#allocation6 + $0x80] sm:$0xff]
    %v113 = vld [vmem:[#allocation6 + $0x88] sm:$0xff]
    %v114 = vld [vmem:[#allocation6 + $0x90] sm:$0xff]
    %v115 = vld [vmem:[#allocation6 + $0x98] sm:$0xff]
    %v116 = vld [vmem:[#allocation6 + $0xa0] sm:$0xff]
    %v117 = vld [vmem:[#allocation6 + $0xa8] sm:$0xff]
    %v118 = vld [vmem:[#allocation6 + $0xb0] sm:$0xff]
    %v119 = vld [vmem:[#allocation6 + $0xb8] sm:$0xff]
    %v120 = vld [vmem:[#allocation6 + $0xc0] sm:$0xff]
    %v121 = vld [vmem:[#allocation6 + $0xc8] sm:$0xff]
    %v122 = vld [vmem:[#allocation6 + $0xd0] sm:$0xff]
    %v123 = vld [vmem:[#allocation6 + $0xd8] sm:$0xff]
    %v124 = vld [vmem:[#allocation6 + $0xe0] sm:$0xff]
    %v125 = vld [vmem:[#allocation6 + $0xe8] sm:$0xff]
    %v126 = vld [vmem:[#allocation6 + $0xf0] sm:$0xff]
    %v127 = vld [vmem:[#allocation6 + $0xf8] sm:$0xff]
    %v128 = vld [vmem:[#allocation6 + $0x100] sm:$0xff]
    %v129 = vld [vmem:[#allocation6 + $0x108] sm:$0xff]
    %v130 = vld [vmem:[#allocation6 + $0x110] sm:$0xff]
    %v131 = vld [vmem:[#allocation6 + $0x118] sm:$0xff]
    %v132 = vld [vmem:[#allocation6 + $0x120] sm:$0xff]
    %v133 = vld [vmem:[#allocation6 + $0x128] sm:$0xff]
    %v134 = vld [vmem:[#allocation6 + $0x130] sm:$0xff]
    %v135 = vld [vmem:[#allocation6 + $0x138] sm:$0xff]
    %v136 = vld [vmem:[#allocation6 + $0x140] sm:$0xff]
    %v137 = vld [vmem:[#allocation6 + $0x148] sm:$0xff]
    %v138 = vld [vmem:[#allocation6 + $0x150] sm:$0xff]
    %v139 = vld [vmem:[#allocation6 + $0x158] sm:$0xff]
    %v140 = vld [vmem:[#allocation6 + $0x160] sm:$0xff]
    %v141 = vld [vmem:[#allocation6 + $0x168] sm:$0xff]
    %v142 = vld [vmem:[#allocation6 + $0x170] sm:$0xff]
    %v143 = vld [vmem:[#allocation6 + $0x178] sm:$0xff]
    %v144 = vld [vmem:[%s3] sm:$0x7]
    %v145 = vld [vmem:[%s4] sm:$0x7]
    %v146 = vld [vmem:[%s0] sm:$0xff]
    %v147 = vld [vmem:[%s0 + $0x8] sm:$0xff]
    %v148 = vld [vmem:[%s0 + $0x10] sm:$0xff]
    %v149 = vld [vmem:[%s0 + $0x18] sm:$0xff]
    %v150 = vld [vmem:[%s0 + $0x20] sm:$0xff]
    %v151 = vld [vmem:[%s0 + $0x28] sm:$0xff]
    %v152 = vld [vmem:[%s0 + $0x30] sm:$0xff]
    %v153 = vld [vmem:[%s0 + $0x38] sm:$0xff]
    %v155 = vlaneseq
    %v156 = vshrl.u32 %v155, 7
    %v157 = vsub.s32 0, %v156
    %v158 = vrot.slane %v144, %v157
    %v159 = vlaneseq
    %v160 = vshrl.u32 %v159, 7
    %v161 = vsub.s32 1, %v160
    %v162 = vrot.slane %v144, %v161
    %v163 = vlaneseq
    %v164 = vshrl.u32 %v163, 7
    %v165 = vsub.s32 2, %v164
    %v166 = vrot.slane %v144, %v165
    %170 = vmatprep.subr.mxu0 %v49
    %171 = vmatpush1.msra.mxu0 %v48
    %172 = vmatprep.subr.mxu0 %v52
    %173 = vmatpush1.msra.mxu0 %v51
    %174 = vmatprep.subr.mxu0 %v55
    %175 = vmatpush1.msra.mxu0 %v54
    %176 = vmatprep.subr.mxu0 %v58
    %177 = vmatpush1.msra.mxu0 %v57
    %178 = vmatprep.subr.mxu0 %v61
    %179 = vmatpush1.msra.mxu0 %v60
    %180 = vmatprep.subr.mxu0 %v64
    %181 = vmatpush1.msra.mxu0 %v63
    %182 = vmatprep.subr.mxu0 %v67
    %183 = vmatpush1.msra.mxu0 %v66
    %184 = vmatprep.subr.mxu0 %v70
    %185 = vmatpush1.msra.mxu0 %v69
    %186 = vmatprep.subr.mxu0 %v73
    %187 = vmatpush1.msra.mxu0 %v72
    %188 = vmatprep.subr.mxu0 %v76
    %189 = vmatpush1.msra.mxu0 %v75
    %190 = vmatprep.subr.mxu0 %v79
    %191 = vmatpush1.msra.mxu0 %v78
    %192 = vmatprep.subr.mxu0 %v82
    %193 = vmatpush1.msra.mxu0 %v81
    %194 = vmatprep.subr.mxu0 %v85
    %195 = vmatpush1.msra.mxu0 %v84
    %196 = vmatprep.subr.mxu0 %v88
    %197 = vmatpush1.msra.mxu0 %v87
    %198 = vmatprep.subr.mxu0 %v91
    %199 = vmatpush1.msra.mxu0 %v90
    %200 = vmatprep.subr.mxu0 %v94
    %201 = vmatpush1.msra.mxu0 %v93
    %202 = vmatprep.subr.mxu0 0.0
    %203 = vmatpush1.msra.mxu0 0.0
    %204 = vmatprep.subr.mxu0 0.0
    %205 = vmatpush1.msra.mxu0 0.0
    %206 = vmatprep.subr.mxu0 0.0
    %207 = vmatpush1.msra.mxu0 0.0
    %208 = vmatprep.subr.mxu0 0.0
    %209 = vmatpush1.msra.mxu0 0.0
    %210 = vmatprep.subr.mxu0 0.0
    %211 = vmatpush1.msra.mxu0 0.0
    %212 = vmatprep.subr.mxu0 0.0
    %213 = vmatpush1.msra.mxu0 0.0
    %214 = vmatprep.subr.mxu0 0.0
    %215 = vmatpush1.msra.mxu0 0.0
    %216 = vmatprep.subr.mxu0 0.0
    %217 = vmatpush1.msra.mxu0 0.0
    %218 = vmatprep.subr.mxu0 0.0
    %219 = vmatpush1.msra.mxu0 0.0
    %220 = vmatprep.subr.mxu0 0.0
    %221 = vmatpush1.msra.mxu0 0.0
    %222 = vmatprep.subr.mxu0 0.0
    %223 = vmatpush1.msra.mxu0 0.0
    %224 = vmatprep.subr.mxu0 0.0
    %225 = vmatpush1.msra.mxu0 0.0
    %226 = vmatprep.subr.mxu0 0.0
    %227 = vmatpush1.msra.mxu0 0.0
    %228 = vmatprep.subr.mxu0 0.0
    %229 = vmatpush1.msra.mxu0 0.0
    %230 = vmatprep.subr.mxu0 0.0
    %231 = vmatpush1.msra.mxu0 0.0
    %232 = vmatprep.subr.mxu0 0.0
    %233 = vmatpush1.msra.mxu0 0.0
    %234 = vmatprep.mubr.f32.mxu0 0.0
    %235 = vmatmul.mubr.f32.gmra.mrb[0].mxu0 %v146
    %v236 = vpop.f32.mrb[0].mxu0
    %v237 = vadd.f32 %v158, %v236
    %v238 = vpop.f32.mrb[0].mxu0
    %v239 = vadd.f32 %v162, %v238
    %240 = vmatprep.mubr.f32.mxu0 0.0
    %241 = vmatmul.mubr.f32.gmra.mrb[0].mxu0 %v147
    %v242 = vpop.f32.mrb[0].mxu0
    %v243 = vadd.f32 %v158, %v242
    %v244 = vpop.f32.mrb[0].mxu0
    %v245 = vadd.f32 %v162, %v244
    %246 = vmatprep.mubr.f32.mxu0 0.0
    %247 = vmatmul.mubr.f32.gmra.mrb[0].mxu0 %v148
    %v248 = vpop.f32.mrb[0].mxu0
    %v249 = vadd.f32 %v158, %v248
    %v250 = vpop.f32.mrb[0].mxu0
    %v251 = vadd.f32 %v162, %v250
    %252 = vmatprep.mubr.f32.mxu0 0.0
    %253 = vmatmul.mubr.f32.gmra.mrb[0].mxu0 %v149
    %v254 = vpop.f32.mrb[0].mxu0
    %v255 = vadd.f32 %v158, %v254
    %v256 = vpop.f32.mrb[0].mxu0
    %v257 = vadd.f32 %v162, %v256
    %258 = vmatprep.mubr.f32.mxu0 0.0
    %259 = vmatmul.mubr.f32.gmra.mrb[0].mxu0 %v150
    %v260 = vpop.f32.mrb[0].mxu0
    %v261 = vadd.f32 %v158, %v260
    %v262 = vpop.f32.mrb[0].mxu0
    %v263 = vadd.f32 %v162, %v262
    %264 = vmatprep.mubr.f32.mxu0 0.0
    %265 = vmatmul.mubr.f32.gmra.mrb[0].mxu0 %v151
    %v266 = vpop.f32.mrb[0].mxu0
    %v267 = vadd.f32 %v158, %v266
    %v268 = vpop.f32.mrb[0].mxu0
    %v269 = vadd.f32 %v162, %v268
    %270 = vmatprep.mubr.f32.mxu0 0.0
    %271 = vmatmul.mubr.f32.gmra.mrb[0].mxu0 %v152
    %v272 = vpop.f32.mrb[0].mxu0
    %v273 = vadd.f32 %v158, %v272
    %v274 = vpop.f32.mrb[0].mxu0
    %v275 = vadd.f32 %v162, %v274
    %276 = vmatprep.mubr.f32.mxu0 0.0
    %277 = vmatmul.mubr.f32.gmra.mrb[0].mxu0 %v153
    %v278 = vpop.f32.mrb[0].mxu0
    %v279 = vadd.f32 %v158, %v278
    %v280 = vpop.f32.mrb[0].mxu0
    %v281 = vadd.f32 %v162, %v280
    %282 = vdwg.mxu0
    %283 = vmatprep.subr.mxu0 0.0
    %284 = vmatpush1.msra.mxu0 %v50
    %285 = vmatprep.subr.mxu0 0.0
    %286 = vmatpush1.msra.mxu0 %v53
    %287 = vmatprep.subr.mxu0 0.0
    %288 = vmatpush1.msra.mxu0 %v56
    %289 = vmatprep.subr.mxu0 0.0
    %290 = vmatpush1.msra.mxu0 %v59
    %291 = vmatprep.subr.mxu0 0.0
    %292 = vmatpush1.msra.mxu0 %v62
    %293 = vmatprep.subr.mxu0 0.0
    %294 = vmatpush1.msra.mxu0 %v65
    %295 = vmatprep.subr.mxu0 0.0
    %296 = vmatpush1.msra.mxu0 %v68
    %297 = vmatprep.subr.mxu0 0.0
    %298 = vmatpush1.msra.mxu0 %v71
    %299 = vmatprep.subr.mxu0 0.0
    %300 = vmatpush1.msra.mxu0 %v74
    %301 = vmatprep.subr.mxu0 0.0
    %302 = vmatpush1.msra.mxu0 %v77
    %303 = vmatprep.subr.mxu0 0.0
    %304 = vmatpush1.msra.mxu0 %v80
    %305 = vmatprep.subr.mxu0 0.0
    %306 = vmatpush1.msra.mxu0 %v83
    %307 = vmatprep.subr.mxu0 0.0
    %308 = vmatpush1.msra.mxu0 %v86
    %309 = vmatprep.subr.mxu0 0.0
    %310 = vmatpush1.msra.mxu0 %v89
    %311 = vmatprep.subr.mxu0 0.0
    %312 = vmatpush1.msra.mxu0 %v92
    %313 = vmatprep.subr.mxu0 0.0
    %314 = vmatpush1.msra.mxu0 %v95
    %315 = vmatprep.subr.mxu0 0.0
    %316 = vmatpush1.msra.mxu0 0.0
    %317 = vmatprep.subr.mxu0 0.0
    %318 = vmatpush1.msra.mxu0 0.0
    %319 = vmatprep.subr.mxu0 0.0
    %320 = vmatpush1.msra.mxu0 0.0
    %321 = vmatprep.subr.mxu0 0.0
    %322 = vmatpush1.msra.mxu0 0.0
    %323 = vmatprep.subr.mxu0 0.0
    %324 = vmatpush1.msra.mxu0 0.0
    %325 = vmatprep.subr.mxu0 0.0
    %326 = vmatpush1.msra.mxu0 0.0
    %327 = vmatprep.subr.mxu0 0.0
    %328 = vmatpush1.msra.mxu0 0.0
    %329 = vmatprep.subr.mxu0 0.0
    %330 = vmatpush1.msra.mxu0 0.0
    %331 = vmatprep.subr.mxu0 0.0
    %332 = vmatpush1.msra.mxu0 0.0
    %333 = vmatprep.subr.mxu0 0.0
    %334 = vmatpush1.msra.mxu0 0.0
    %335 = vmatprep.subr.mxu0 0.0
    %336 = vmatpush1.msra.mxu0 0.0
    %337 = vmatprep.subr.mxu0 0.0
    %338 = vmatpush1.msra.mxu0 0.0
    %339 = vmatprep.subr.mxu0 0.0
    %340 = vmatpush1.msra.mxu0 0.0
    %341 = vmatprep.subr.mxu0 0.0
    %342 = vmatpush1.msra.mxu0 0.0
    %343 = vmatprep.subr.mxu0 0.0
    %344 = vmatpush1.msra.mxu0 0.0
    %345 = vmatprep.subr.mxu0 0.0
    %346 = vmatpush1.msra.mxu0 0.0
    %347 = vmatprep.mubr.f32.mxu0 0.0
    %348 = vmatmul.mubr.f32.gmra.mrb[0].mxu0 %v146
    %v349 = vpop.f32.mrb[0].mxu0
    %v350 = vadd.f32 %v166, %v349
    %v351 = vpop.f32.mrb[0].mxu0
    %352 = vmatprep.mubr.f32.mxu0 0.0
    %353 = vmatmul.mubr.f32.gmra.mrb[0].mxu0 %v147
    %v354 = vpop.f32.mrb[0].mxu0
    %v355 = vadd.f32 %v166, %v354
    %v356 = vpop.f32.mrb[0].mxu0
    %357 = vmatprep.mubr.f32.mxu0 0.0
    %358 = vmatmul.mubr.f32.gmra.mrb[0].mxu0 %v148
    %v359 = vpop.f32.mrb[0].mxu0
    %v360 = vadd.f32 %v166, %v359
    %v361 = vpop.f32.mrb[0].mxu0
    %362 = vmatprep.mubr.f32.mxu0 0.0
    %363 = vmatmul.mubr.f32.gmra.mrb[0].mxu0 %v149
    %v364 = vpop.f32.mrb[0].mxu0
    %v365 = vadd.f32 %v166, %v364
    %v366 = vpop.f32.mrb[0].mxu0
    %367 = vmatprep.mubr.f32.mxu0 0.0
    %368 = vmatmul.mubr.f32.gmra.mrb[0].mxu0 %v150
    %v369 = vpop.f32.mrb[0].mxu0
    %v370 = vadd.f32 %v166, %v369
    %v371 = vpop.f32.mrb[0].mxu0
    %372 = vmatprep.mubr.f32.mxu0 0.0
    %373 = vmatmul.mubr.f32.gmra.mrb[0].mxu0 %v151
    %v374 = vpop.f32.mrb[0].mxu0
    %v375 = vadd.f32 %v166, %v374
    %v376 = vpop.f32.mrb[0].mxu0
    %377 = vmatprep.mubr.f32.mxu0 0.0
    %378 = vmatmul.mubr.f32.gmra.mrb[0].mxu0 %v152
    %v379 = vpop.f32.mrb[0].mxu0
    %v380 = vadd.f32 %v166, %v379
    %v381 = vpop.f32.mrb[0].mxu0
    %382 = vmatprep.mubr.f32.mxu0 0.0
    %383 = vmatmul.mubr.f32.gmra.mrb[0].mxu0 %v153
    %v384 = vpop.f32.mrb[0].mxu0
    %v385 = vadd.f32 %v166, %v384
    %v386 = vpop.f32.mrb[0].mxu0
    %387 = vdwg.mxu0
    %388 = vst [vmem:[#allocation3] sm:$0xff] %v237
    %389 = vst [vmem:[#allocation3 + $0x8] sm:$0xff] %v239
    %390 = vst [vmem:[#allocation3 + $0x10] sm:$0xff] %v350
    %391 = vst [vmem:[#allocation3 + $0x18] sm:$0xff] %v243
    %392 = vst [vmem:[#allocation3 + $0x20] sm:$0xff] %v245
    %393 = vst [vmem:[#allocation3 + $0x28] sm:$0xff] %v355
    %394 = vst [vmem:[#allocation3 + $0x30] sm:$0xff] %v249
    %395 = vst [vmem:[#allocation3 + $0x38] sm:$0xff] %v251
    %396 = vst [vmem:[#allocation3 + $0x40] sm:$0xff] %v360
    %397 = vst [vmem:[#allocation3 + $0x48] sm:$0xff] %v255
    %398 = vst [vmem:[#allocation3 + $0x50] sm:$0xff] %v257
    %399 = vst [vmem:[#allocation3 + $0x58] sm:$0xff] %v365
    %400 = vst [vmem:[#allocation3 + $0x60] sm:$0xff] %v261
    %401 = vst [vmem:[#allocation3 + $0x68] sm:$0xff] %v263
    %402 = vst [vmem:[#allocation3 + $0x70] sm:$0xff] %v370
    %403 = vst [vmem:[#allocation3 + $0x78] sm:$0xff] %v267
    %404 = vst [vmem:[#allocation3 + $0x80] sm:$0xff] %v269
    %405 = vst [vmem:[#allocation3 + $0x88] sm:$0xff] %v375
    %406 = vst [vmem:[#allocation3 + $0x90] sm:$0xff] %v273
    %407 = vst [vmem:[#allocation3 + $0x98] sm:$0xff] %v275
    %408 = vst [vmem:[#allocation3 + $0xa0] sm:$0xff] %v380
    %409 = vst [vmem:[#allocation3 + $0xa8] sm:$0xff] %v279
    %410 = vst [vmem:[#allocation3 + $0xb0] sm:$0xff] %v281
    %411 = vst [vmem:[#allocation3 + $0xb8] sm:$0xff] %v385
    %412 = vst [vmem:[#allocation2] sm:$0xff] 0.0
    %v413 = vld [vmem:[#allocation2] sm:$0xff]
    %v414 = vld [vmem:[#allocation3] sm:$0xff]
    %v415 = vld [vmem:[#allocation3 + $0x8] sm:$0xff]
    %v416 = vld [vmem:[#allocation3 + $0x10] sm:$0xff]
    %v418 = vlaneseq
    %v419 = vshrl.u32 %v418, 7
    %v420 = vsub.s32 0, %v419
    %v421 = vrot.slane %v145, %v420
    %v422 = vlaneseq
    %v423 = vshrl.u32 %v422, 7
    %v424 = vsub.s32 1, %v423
    %v425 = vrot.slane %v145, %v424
    %v426 = vlaneseq
    %v427 = vshrl.u32 %v426, 7
    %v428 = vsub.s32 2, %v427
    %v429 = vrot.slane %v145, %v428
    %433 = vmatprep.subr.mxu0 %v97
    %434 = vmatpush1.msra.mxu0 %v96
    %435 = vmatprep.subr.mxu0 %v100
    %436 = vmatpush1.msra.mxu0 %v99
    %437 = vmatprep.subr.mxu0 %v103
    %438 = vmatpush1.msra.mxu0 %v102
    %439 = vmatprep.subr.mxu0 %v106
    %440 = vmatpush1.msra.mxu0 %v105
    %441 = vmatprep.subr.mxu0 %v109
    %442 = vmatpush1.msra.mxu0 %v108
    %443 = vmatprep.subr.mxu0 %v112
    %444 = vmatpush1.msra.mxu0 %v111
    %445 = vmatprep.subr.mxu0 %v115
    %446 = vmatpush1.msra.mxu0 %v114
    %447 = vmatprep.subr.mxu0 %v118
    %448 = vmatpush1.msra.mxu0 %v117
    %449 = vmatprep.subr.mxu0 %v121
    %450 = vmatpush1.msra.mxu0 %v120
    %451 = vmatprep.subr.mxu0 %v124
    %452 = vmatpush1.msra.mxu0 %v123
    %453 = vmatprep.subr.mxu0 %v127
    %454 = vmatpush1.msra.mxu0 %v126
    %455 = vmatprep.subr.mxu0 %v130
    %456 = vmatpush1.msra.mxu0 %v129
    %457 = vmatprep.subr.mxu0 %v133
    %458 = vmatpush1.msra.mxu0 %v132
    %459 = vmatprep.subr.mxu0 %v136
    %460 = vmatpush1.msra.mxu0 %v135
    %461 = vmatprep.subr.mxu0 %v139
    %462 = vmatpush1.msra.mxu0 %v138
    %463 = vmatprep.subr.mxu0 %v142
    %464 = vmatpush1.msra.mxu0 %v141
    %465 = vmatprep.subr.mxu0 0.0
    %466 = vmatpush1.msra.mxu0 0.0
    %467 = vmatprep.subr.mxu0 0.0
    %468 = vmatpush1.msra.mxu0 0.0
    %469 = vmatprep.subr.mxu0 0.0
    %470 = vmatpush1.msra.mxu0 0.0
    %471 = vmatprep.subr.mxu0 0.0
    %472 = vmatpush1.msra.mxu0 0.0
    %473 = vmatprep.subr.mxu0 0.0
    %474 = vmatpush1.msra.mxu0 0.0
    %475 = vmatprep.subr.mxu0 0.0
    %476 = vmatpush1.msra.mxu0 0.0
    %477 = vmatprep.subr.mxu0 0.0
    %478 = vmatpush1.msra.mxu0 0.0
    %479 = vmatprep.subr.mxu0 0.0
    %480 = vmatpush1.msra.mxu0 0.0
    %481 = vmatprep.subr.mxu0 0.0
    %482 = vmatpush1.msra.mxu0 0.0
    %483 = vmatprep.subr.mxu0 0.0
    %484 = vmatpush1.msra.mxu0 0.0
    %485 = vmatprep.subr.mxu0 0.0
    %486 = vmatpush1.msra.mxu0 0.0
    %487 = vmatprep.subr.mxu0 0.0
    %488 = vmatpush1.msra.mxu0 0.0
    %489 = vmatprep.subr.mxu0 0.0
    %490 = vmatpush1.msra.mxu0 0.0
    %491 = vmatprep.subr.mxu0 0.0
    %492 = vmatpush1.msra.mxu0 0.0
    %493 = vmatprep.subr.mxu0 0.0
    %494 = vmatpush1.msra.mxu0 0.0
    %495 = vmatprep.subr.mxu0 0.0
    %496 = vmatpush1.msra.mxu0 0.0
    %497 = vmatprep.mubr.f32.mxu0 0.0
    %498 = vmatmul.mubr.f32.gmra.mrb[0].mxu0 %v413
    %v499 = vpop.f32.mrb[0].mxu0
    %v500 = vadd.f32 %v421, %v499
    %v501 = vpop.f32.mrb[0].mxu0
    %v502 = vadd.f32 %v425, %v501
    %503 = vdwg.mxu0
    %504 = vmatprep.subr.mxu0 0.0
    %505 = vmatpush1.msra.mxu0 %v98
    %506 = vmatprep.subr.mxu0 0.0
    %507 = vmatpush1.msra.mxu0 %v101
    %508 = vmatprep.subr.mxu0 0.0
    %509 = vmatpush1.msra.mxu0 %v104
    %510 = vmatprep.subr.mxu0 0.0
    %511 = vmatpush1.msra.mxu0 %v107
    %512 = vmatprep.subr.mxu0 0.0
    %513 = vmatpush1.msra.mxu0 %v110
    %514 = vmatprep.subr.mxu0 0.0
    %515 = vmatpush1.msra.mxu0 %v113
    %516 = vmatprep.subr.mxu0 0.0
    %517 = vmatpush1.msra.mxu0 %v116
    %518 = vmatprep.subr.mxu0 0.0
    %519 = vmatpush1.msra.mxu0 %v119
    %520 = vmatprep.subr.mxu0 0.0
    %521 = vmatpush1.msra.mxu0 %v122
    %522 = vmatprep.subr.mxu0 0.0
    %523 = vmatpush1.msra.mxu0 %v125
    %524 = vmatprep.subr.mxu0 0.0
    %525 = vmatpush1.msra.mxu0 %v128
    %526 = vmatprep.subr.mxu0 0.0
    %527 = vmatpush1.msra.mxu0 %v131
    %528 = vmatprep.subr.mxu0 0.0
    %529 = vmatpush1.msra.mxu0 %v134
    %530 = vmatprep.subr.mxu0 0.0
    %531 = vmatpush1.msra.mxu0 %v137
    %532 = vmatprep.subr.mxu0 0.0
    %533 = vmatpush1.msra.mxu0 %v140
    %534 = vmatprep.subr.mxu0 0.0
    %535 = vmatpush1.msra.mxu0 %v143
    %536 = vmatprep.subr.mxu0 0.0
    %537 = vmatpush1.msra.mxu0 0.0
    %538 = vmatprep.subr.mxu0 0.0
    %539 = vmatpush1.msra.mxu0 0.0
    %540 = vmatprep.subr.mxu0 0.0
    %541 = vmatpush1.msra.mxu0 0.0
    %542 = vmatprep.subr.mxu0 0.0
    %543 = vmatpush1.msra.mxu0 0.0
    %544 = vmatprep.subr.mxu0 0.0
    %545 = vmatpush1.msra.mxu0 0.0
    %546 = vmatprep.subr.mxu0 0.0
    %547 = vmatpush1.msra.mxu0 0.0
    %548 = vmatprep.subr.mxu0 0.0
    %549 = vmatpush1.msra.mxu0 0.0
    %550 = vmatprep.subr.mxu0 0.0
    %551 = vmatpush1.msra.mxu0 0.0
    %552 = vmatprep.subr.mxu0 0.0
    %553 = vmatpush1.msra.mxu0 0.0
    %554 = vmatprep.subr.mxu0 0.0
    %555 = vmatpush1.msra.mxu0 0.0
    %556 = vmatprep.subr.mxu0 0.0
    %557 = vmatpush1.msra.mxu0 0.0
    %558 = vmatprep.subr.mxu0 0.0
    %559 = vmatpush1.msra.mxu0 0.0
    %560 = vmatprep.subr.mxu0 0.0
    %561 = vmatpush1.msra.mxu0 0.0
    %562 = vmatprep.subr.mxu0 0.0
    %563 = vmatpush1.msra.mxu0 0.0
    %564 = vmatprep.subr.mxu0 0.0
    %565 = vmatpush1.msra.mxu0 0.0
    %566 = vmatprep.subr.mxu0 0.0
    %567 = vmatpush1.msra.mxu0 0.0
    %568 = vmatprep.mubr.f32.mxu0 0.0
    %569 = vmatmul.mubr.f32.gmra.mrb[0].mxu0 %v413
    %v570 = vpop.f32.mrb[0].mxu0
    %v571 = vadd.f32 %v429, %v570
    %v572 = vpop.f32.mrb[0].mxu0
    %573 = vdwg.mxu0
    %v574 = vadd.f32 %v414, %v500
    %v575 = vxor.u32 %v574, 2147483648
    %v576 = vmul.f32 %v575, 1.442695
    %v577 = vpow.pop %v576
    %v578 = vadd.f32 %v577, 1.0
    %v579 = vrcp.pop %v578
    %v580 = vmul.f32 1.0, %v579
    %v581 = vadd.f32 %v415, %v502
    %v582 = vxor.u32 %v581, 2147483648
    %v583 = vmul.f32 %v582, 1.442695
    %v584 = vpow.pop %v583
    %v585 = vadd.f32 %v584, 1.0
    %v586 = vrcp.pop %v585
    %v587 = vmul.f32 1.0, %v586
    %v588 = vmul.f32 %v580, %v571
    %v589 = vadd.f32 %v416, %v588
    %v590 = vtanh.pop %v589
    %v591 = vsub.f32 1.0, %v587
    %v592 = vmul.f32 %v591, %v590
    %v593 = vmul.f32 %v587, %v413
    %v594 = vadd.f32 %v592, %v593
    %595 = vst [vmem:[#allocation2] sm:$0xff] %v594
    %596 = vst [vmem:[%s5] sm:$0xff] %v594
    %v597 = vld [vmem:[#allocation2] sm:$0xff]
    %s598 = scalar_lea.vmem [#allocation3], 24
    %v599 = vld [vmem:[%s598] sm:$0xff]
    %v600 = vld [vmem:[%s598 + $0x8] sm:$0xff]
    %v601 = vld [vmem:[%s598 + $0x10] sm:$0xff]
    %602 = vmatprep.subr.mxu0 %v97
    %603 = vmatpush1.msra.mxu0 %v96
    %604 = vmatprep.subr.mxu0 %v100
    %605 = vmatpush1.msra.mxu0 %v99
    %606 = vmatprep.subr.mxu0 %v103
    %607 = vmatpush1.msra.mxu0 %v102
    %608 = vmatprep.subr.mxu0 %v106
    %609 = vmatpush1.msra.mxu0 %v105
    %610 = vmatprep.subr.mxu0 %v109
    %611 = vmatpush1.msra.mxu0 %v108
    %612 = vmatprep.subr.mxu0 %v112
    %613 = vmatpush1.msra.mxu0 %v111
    %614 = vmatprep.subr.mxu0 %v115
    %615 = vmatpush1.msra.mxu0 %v114
    %616 = vmatprep.subr.mxu0 %v118
    %617 = vmatpush1.msra.mxu0 %v117
    %618 = vmatprep.subr.mxu0 %v121
    %619 = vmatpush1.msra.mxu0 %v120
    %620 = vmatprep.subr.mxu0 %v124
    %621 = vmatpush1.msra.mxu0 %v123
    %622 = vmatprep.subr.mxu0 %v127
    %623 = vmatpush1.msra.mxu0 %v126
    %624 = vmatprep.subr.mxu0 %v130
    %625 = vmatpush1.msra.mxu0 %v129
    %626 = vmatprep.subr.mxu0 %v133
    %627 = vmatpush1.msra.mxu0 %v132
    %628 = vmatprep.subr.mxu0 %v136
    %629 = vmatpush1.msra.mxu0 %v135
    %630 = vmatprep.subr.mxu0 %v139
    %631 = vmatpush1.msra.mxu0 %v138
    %632 = vmatprep.subr.mxu0 %v142
    %633 = vmatpush1.msra.mxu0 %v141
    %634 = vmatprep.subr.mxu0 0.0
    %635 = vmatpush1.msra.mxu0 0.0
    %636 = vmatprep.subr.mxu0 0.0
    %637 = vmatpush1.msra.mxu0 0.0
    %638 = vmatprep.subr.mxu0 0.0
    %639 = vmatpush1.msra.mxu0 0.0
    %640 = vmatprep.subr.mxu0 0.0
    %641 = vmatpush1.msra.mxu0 0.0
    %642 = vmatprep.subr.mxu0 0.0
    %643 = vmatpush1.msra.mxu0 0.0
    %644 = vmatprep.subr.mxu0 0.0
    %645 = vmatpush1.msra.mxu0 0.0
    %646 = vmatprep.subr.mxu0 0.0
    %647 = vmatpush1.msra.mxu0 0.0
    %648 = vmatprep.subr.mxu0 0.0
    %649 = vmatpush1.msra.mxu0 0.0
    %650 = vmatprep.subr.mxu0 0.0
    %651 = vmatpush1.msra.mxu0 0.0
    %652 = vmatprep.subr.mxu0 0.0
    %653 = vmatpush1.msra.mxu0 0.0
    %654 = vmatprep.subr.mxu0 0.0
    %655 = vmatpush1.msra.mxu0 0.0
    %656 = vmatprep.subr.mxu0 0.0
    %657 = vmatpush1.msra.mxu0 0.0
    %658 = vmatprep.subr.mxu0 0.0
    %659 = vmatpush1.msra.mxu0 0.0
    %660 = vmatprep.subr.mxu0 0.0
    %661 = vmatpush1.msra.mxu0 0.0
    %662 = vmatprep.subr.mxu0 0.0
    %663 = vmatpush1.msra.mxu0 0.0
    %664 = vmatprep.subr.mxu0 0.0
    %665 = vmatpush1.msra.mxu0 0.0
    %666 = vmatprep.mubr.f32.mxu0 0.0
    %667 = vmatmul.mubr.f32.gmra.mrb[0].mxu0 %v597
    %v668 = vpop.f32.mrb[0].mxu0
    %v669 = vadd.f32 %v421, %v668
    %v670 = vpop.f32.mrb[0].mxu0
    %v671 = vadd.f32 %v425, %v670
    %672 = vdwg.mxu0
    %673 = vmatprep.subr.mxu0 0.0
    %674 = vmatpush1.msra.mxu0 %v98
    %675 = vmatprep.subr.mxu0 0.0
    %676 = vmatpush1.msra.mxu0 %v101
    %677 = vmatprep.subr.mxu0 0.0
    %678 = vmatpush1.msra.mxu0 %v104
    %679 = vmatprep.subr.mxu0 0.0
    %680 = vmatpush1.msra.mxu0 %v107
    %681 = vmatprep.subr.mxu0 0.0
    %682 = vmatpush1.msra.mxu0 %v110
    %683 = vmatprep.subr.mxu0 0.0
    %684 = vmatpush1.msra.mxu0 %v113
    %685 = vmatprep.subr.mxu0 0.0
    %686 = vmatpush1.msra.mxu0 %v116
    %687 = vmatprep.subr.mxu0 0.0
    %688 = vmatpush1.msra.mxu0 %v119
    %689 = vmatprep.subr.mxu0 0.0
    %690 = vmatpush1.msra.mxu0 %v122
    %691 = vmatprep.subr.mxu0 0.0
    %692 = vmatpush1.msra.mxu0 %v125
    %693 = vmatprep.subr.mxu0 0.0
    %694 = vmatpush1.msra.mxu0 %v128
    %695 = vmatprep.subr.mxu0 0.0
    %696 = vmatpush1.msra.mxu0 %v131
    %697 = vmatprep.subr.mxu0 0.0
    %698 = vmatpush1.msra.mxu0 %v134
    %699 = vmatprep.subr.mxu0 0.0
    %700 = vmatpush1.msra.mxu0 %v137
    %701 = vmatprep.subr.mxu0 0.0
    %702 = vmatpush1.msra.mxu0 %v140
    %703 = vmatprep.subr.mxu0 0.0
    %704 = vmatpush1.msra.mxu0 %v143
    %705 = vmatprep.subr.mxu0 0.0
    %706 = vmatpush1.msra.mxu0 0.0
    %707 = vmatprep.subr.mxu0 0.0
    %708 = vmatpush1.msra.mxu0 0.0
    %709 = vmatprep.subr.mxu0 0.0
    %710 = vmatpush1.msra.mxu0 0.0
    %711 = vmatprep.subr.mxu0 0.0
    %712 = vmatpush1.msra.mxu0 0.0
    %713 = vmatprep.subr.mxu0 0.0
    %714 = vmatpush1.msra.mxu0 0.0
    %715 = vmatprep.subr.mxu0 0.0
    %716 = vmatpush1.msra.mxu0 0.0
    %717 = vmatprep.subr.mxu0 0.0
    %718 = vmatpush1.msra.mxu0 0.0
    %719 = vmatprep.subr.mxu0 0.0
    %720 = vmatpush1.msra.mxu0 0.0
    %721 = vmatprep.subr.mxu0 0.0
    %722 = vmatpush1.msra.mxu0 0.0
    %723 = vmatprep.subr.mxu0 0.0
    %724 = vmatpush1.msra.mxu0 0.0
    %725 = vmatprep.subr.mxu0 0.0
    %726 = vmatpush1.msra.mxu0 0.0
    %727 = vmatprep.subr.mxu0 0.0
    %728 = vmatpush1.msra.mxu0 0.0
    %729 = vmatprep.subr.mxu0 0.0
    %730 = vmatpush1.msra.mxu0 0.0
    %731 = vmatprep.subr.mxu0 0.0
    %732 = vmatpush1.msra.mxu0 0.0
    %733 = vmatprep.subr.mxu0 0.0
    %734 = vmatpush1.msra.mxu0 0.0
    %735 = vmatprep.subr.mxu0 0.0
    %736 = vmatpush1.msra.mxu0 0.0
    %737 = vmatprep.mubr.f32.mxu0 0.0
    %738 = vmatmul.mubr.f32.gmra.mrb[0].mxu0 %v597
    %v739 = vpop.f32.mrb[0].mxu0
    %v740 = vadd.f32 %v429, %v739
    %v741 = vpop.f32.mrb[0].mxu0
    %742 = vdwg.mxu0
    %v743 = vadd.f32 %v599, %v669
    %v744 = vxor.u32 %v743, 2147483648
    %v745 = vmul.f32 %v744, 1.442695
    %v746 = vpow.pop %v745
    %v747 = vadd.f32 %v746, 1.0
    %v748 = vrcp.pop %v747
    %v749 = vmul.f32 1.0, %v748
    %v750 = vadd.f32 %v600, %v671
    %v751 = vxor.u32 %v750, 2147483648
    %v752 = vmul.f32 %v751, 1.442695
    %v753 = vpow.pop %v752
    %v754 = vadd.f32 %v753, 1.0
    %v755 = vrcp.pop %v754
    %v756 = vmul.f32 1.0, %v755
    %v757 = vmul.f32 %v749, %v740
    %v758 = vadd.f32 %v601, %v757
    %v759 = vtanh.pop %v758
    %v760 = vsub.f32 1.0, %v756
    %v761 = vmul.f32 %v760, %v759
    %v762 = vmul.f32 %v756, %v597
    %v763 = vadd.f32 %v761, %v762
    %764 = vst [vmem:[#allocation2] sm:$0xff] %v763
    %s765 = scalar_lea.vmem %s5, 8
    %766 = vst [vmem:[%s765] sm:$0xff] %v763
    %v767 = vld [vmem:[#allocation2] sm:$0xff]
    %s768 = scalar_lea.vmem [#allocation3], 48
    %v769 = vld [vmem:[%s768] sm:$0xff]
    %v770 = vld [vmem:[%s768 + $0x8] sm:$0xff]
    %v771 = vld [vmem:[%s768 + $0x10] sm:$0xff]
    %772 = vmatprep.subr.mxu0 %v97
    %773 = vmatpush1.msra.mxu0 %v96
    %774 = vmatprep.subr.mxu0 %v100
    %775 = vmatpush1.msra.mxu0 %v99
    %776 = vmatprep.subr.mxu0 %v103
    %777 = vmatpush1.msra.mxu0 %v102
    %778 = vmatprep.subr.mxu0 %v106
    %779 = vmatpush1.msra.mxu0 %v105
    %780 = vmatprep.subr.mxu0 %v109
    %781 = vmatpush1.msra.mxu0 %v108
    %782 = vmatprep.subr.mxu0 %v112
    %783 = vmatpush1.msra.mxu0 %v111
    %784 = vmatprep.subr.mxu0 %v115
    %785 = vmatpush1.msra.mxu0 %v114
    %786 = vmatprep.subr.mxu0 %v118
    %787 = vmatpush1.msra.mxu0 %v117
    %788 = vmatprep.subr.mxu0 %v121
    %789 = vmatpush1.msra.mxu0 %v120
    %790 = vmatprep.subr.mxu0 %v124
    %791 = vmatpush1.msra.mxu0 %v123
    %792 = vmatprep.subr.mxu0 %v127
    %793 = vmatpush1.msra.mxu0 %v126
    %794 = vmatprep.subr.mxu0 %v130
    %795 = vmatpush1.msra.mxu0 %v129
    %796 = vmatprep.subr.mxu0 %v133
    %797 = vmatpush1.msra.mxu0 %v132
    %798 = vmatprep.subr.mxu0 %v136
    %799 = vmatpush1.msra.mxu0 %v135
    %800 = vmatprep.subr.mxu0 %v139
    %801 = vmatpush1.msra.mxu0 %v138
    %802 = vmatprep.subr.mxu0 %v142
    %803 = vmatpush1.msra.mxu0 %v141
    %804 = vmatprep.subr.mxu0 0.0
    %805 = vmatpush1.msra.mxu0 0.0
    %806 = vmatprep.subr.mxu0 0.0
    %807 = vmatpush1.msra.mxu0 0.0
    %808 = vmatprep.subr.mxu0 0.0
    %809 = vmatpush1.msra.mxu0 0.0
    %810 = vmatprep.subr.mxu0 0.0
    %811 = vmatpush1.msra.mxu0 0.0
    %812 = vmatprep.subr.mxu0 0.0
    %813 = vmatpush1.msra.mxu0 0.0
    %814 = vmatprep.subr.mxu0 0.0
    %815 = vmatpush1.msra.mxu0 0.0
    %816 = vmatprep.subr.mxu0 0.0
    %817 = vmatpush1.msra.mxu0 0.0
    %818 = vmatprep.subr.mxu0 0.0
    %819 = vmatpush1.msra.mxu0 0.0
    %820 = vmatprep.subr.mxu0 0.0
    %821 = vmatpush1.msra.mxu0 0.0
    %822 = vmatprep.subr.mxu0 0.0
    %823 = vmatpush1.msra.mxu0 0.0
    %824 = vmatprep.subr.mxu0 0.0
    %825 = vmatpush1.msra.mxu0 0.0
    %826 = vmatprep.subr.mxu0 0.0
    %827 = vmatpush1.msra.mxu0 0.0
    %828 = vmatprep.subr.mxu0 0.0
    %829 = vmatpush1.msra.mxu0 0.0
    %830 = vmatprep.subr.mxu0 0.0
    %831 = vmatpush1.msra.mxu0 0.0
    %832 = vmatprep.subr.mxu0 0.0
    %833 = vmatpush1.msra.mxu0 0.0
    %834 = vmatprep.subr.mxu0 0.0
    %835 = vmatpush1.msra.mxu0 0.0
    %836 = vmatprep.mubr.f32.mxu0 0.0
    %837 = vmatmul.mubr.f32.gmra.mrb[0].mxu0 %v767
    %v838 = vpop.f32.mrb[0].mxu0
    %v839 = vadd.f32 %v421, %v838
    %v840 = vpop.f32.mrb[0].mxu0
    %v841 = vadd.f32 %v425, %v840
    %842 = vdwg.mxu0
    %843 = vmatprep.subr.mxu0 0.0
    %844 = vmatpush1.msra.mxu0 %v98
    %845 = vmatprep.subr.mxu0 0.0
    %846 = vmatpush1.msra.mxu0 %v101
    %847 = vmatprep.subr.mxu0 0.0
    %848 = vmatpush1.msra.mxu0 %v104
    %849 = vmatprep.subr.mxu0 0.0
    %850 = vmatpush1.msra.mxu0 %v107
    %851 = vmatprep.subr.mxu0 0.0
    %852 = vmatpush1.msra.mxu0 %v110
    %853 = vmatprep.subr.mxu0 0.0
    %854 = vmatpush1.msra.mxu0 %v113
    %855 = vmatprep.subr.mxu0 0.0
    %856 = vmatpush1.msra.mxu0 %v116
    %857 = vmatprep.subr.mxu0 0.0
    %858 = vmatpush1.msra.mxu0 %v119
    %859 = vmatprep.subr.mxu0 0.0
    %860 = vmatpush1.msra.mxu0 %v122
    %861 = vmatprep.subr.mxu0 0.0
    %862 = vmatpush1.msra.mxu0 %v125
    %863 = vmatprep.subr.mxu0 0.0
    %864 = vmatpush1.msra.mxu0 %v128
    %865 = vmatprep.subr.mxu0 0.0
    %866 = vmatpush1.msra.mxu0 %v131
    %867 = vmatprep.subr.mxu0 0.0
    %868 = vmatpush1.msra.mxu0 %v134
    %869 = vmatprep.subr.mxu0 0.0
    %870 = vmatpush1.msra.mxu0 %v137
    %871 = vmatprep.subr.mxu0 0.0
    %872 = vmatpush1.msra.mxu0 %v140
    %873 = vmatprep.subr.mxu0 0.0
    %874 = vmatpush1.msra.mxu0 %v143
    %875 = vmatprep.subr.mxu0 0.0
    %876 = vmatpush1.msra.mxu0 0.0
    %877 = vmatprep.subr.mxu0 0.0
    %878 = vmatpush1.msra.mxu0 0.0
    %879 = vmatprep.subr.mxu0 0.0
    %880 = vmatpush1.msra.mxu0 0.0
    %881 = vmatprep.subr.mxu0 0.0
    %882 = vmatpush1.msra.mxu0 0.0
    %883 = vmatprep.subr.mxu0 0.0
    %884 = vmatpush1.msra.mxu0 0.0
    %885 = vmatprep.subr.mxu0 0.0
    %886 = vmatpush1.msra.mxu0 0.0
    %887 = vmatprep.subr.mxu0 0.0
    %888 = vmatpush1.msra.mxu0 0.0
    %889 = vmatprep.subr.mxu0 0.0
    %890 = vmatpush1.msra.mxu0 0.0
    %891 = vmatprep.subr.mxu0 0.0
    %892 = vmatpush1.msra.mxu0 0.0
    %893 = vmatprep.subr.mxu0 0.0
    %894 = vmatpush1.msra.mxu0 0.0
    %895 = vmatprep.subr.mxu0 0.0
    %896 = vmatpush1.msra.mxu0 0.0
    %897 = vmatprep.subr.mxu0 0.0
    %898 = vmatpush1.msra.mxu0 0.0
    %899 = vmatprep.subr.mxu0 0.0
    %900 = vmatpush1.msra.mxu0 0.0
    %901 = vmatprep.subr.mxu0 0.0
    %902 = vmatpush1.msra.mxu0 0.0
    %903 = vmatprep.subr.mxu0 0.0
    %904 = vmatpush1.msra.mxu0 0.0
    %905 = vmatprep.subr.mxu0 0.0
    %906 = vmatpush1.msra.mxu0 0.0
    %907 = vmatprep.mubr.f32.mxu0 0.0
    %908 = vmatmul.mubr.f32.gmra.mrb[0].mxu0 %v767
    %v909 = vpop.f32.mrb[0].mxu0
    %v910 = vadd.f32 %v429, %v909
    %v911 = vpop.f32.mrb[0].mxu0
    %912 = vdwg.mxu0
    %v913 = vadd.f32 %v769, %v839
    %v914 = vxor.u32 %v913, 2147483648
    %v915 = vmul.f32 %v914, 1.442695
    %v916 = vpow.pop %v915
    %v917 = vadd.f32 %v916, 1.0
    %v918 = vrcp.pop %v917
    %v919 = vmul.f32 1.0, %v918
    %v920 = vadd.f32 %v770, %v841
    %v921 = vxor.u32 %v920, 2147483648
    %v922 = vmul.f32 %v921, 1.442695
    %v923 = vpow.pop %v922
    %v924 = vadd.f32 %v923, 1.0
    %v925 = vrcp.pop %v924
    %v926 = vmul.f32 1.0, %v925
    %v927 = vmul.f32 %v919, %v910
    %v928 = vadd.f32 %v771, %v927
    %v929 = vtanh.pop %v928
    %v930 = vsub.f32 1.0, %v926
    %v931 = vmul.f32 %v930, %v929
    %v932 = vmul.f32 %v926, %v767
    %v933 = vadd.f32 %v931, %v932
    %934 = vst [vmem:[#allocation2] sm:$0xff] %v933
    %s935 = scalar_lea.vmem %s5, 16
    %936 = vst [vmem:[%s935] sm:$0xff] %v933
    %v937 = vld [vmem:[#allocation2] sm:$0xff]
    %s938 = scalar_lea.vmem [#allocation3], 72
    %v939 = vld [vmem:[%s938] sm:$0xff]
    %v940 = vld [vmem:[%s938 + $0x8] sm:$0xff]
    %v941 = vld [vmem:[%s938 + $0x10] sm:$0xff]
    %942 = vmatprep.subr.mxu0 %v97
    %943 = vmatpush1.msra.mxu0 %v96
    %944 = vmatprep.subr.mxu0 %v100
    %945 = vmatpush1.msra.mxu0 %v99
    %946 = vmatprep.subr.mxu0 %v103
    %947 = vmatpush1.msra.mxu0 %v102
    %948 = vmatprep.subr.mxu0 %v106
    %949 = vmatpush1.msra.mxu0 %v105
    %950 = vmatprep.subr.mxu0 %v109
    %951 = vmatpush1.msra.mxu0 %v108
    %952 = vmatprep.subr.mxu0 %v112
    %953 = vmatpush1.msra.mxu0 %v111
    %954 = vmatprep.subr.mxu0 %v115
    %955 = vmatpush1.msra.mxu0 %v114
    %956 = vmatprep.subr.mxu0 %v118
    %957 = vmatpush1.msra.mxu0 %v117
    %958 = vmatprep.subr.mxu0 %v121
    %959 = vmatpush1.msra.mxu0 %v120
    %960 = vmatprep.subr.mxu0 %v124
    %961 = vmatpush1.msra.mxu0 %v123
    %962 = vmatprep.subr.mxu0 %v127
    %963 = vmatpush1.msra.mxu0 %v126
    %964 = vmatprep.subr.mxu0 %v130
    %965 = vmatpush1.msra.mxu0 %v129
    %966 = vmatprep.subr.mxu0 %v133
    %967 = vmatpush1.msra.mxu0 %v132
    %968 = vmatprep.subr.mxu0 %v136
    %969 = vmatpush1.msra.mxu0 %v135
    %970 = vmatprep.subr.mxu0 %v139
    %971 = vmatpush1.msra.mxu0 %v138
    %972 = vmatprep.subr.mxu0 %v142
    %973 = vmatpush1.msra.mxu0 %v141
    %974 = vmatprep.subr.mxu0 0.0
    %975 = vmatpush1.msra.mxu0 0.0
    %976 = vmatprep.subr.mxu0 0.0
    %977 = vmatpush1.msra.mxu0 0.0
    %978 = vmatprep.subr.mxu0 0.0
    %979 = vmatpush1.msra.mxu0 0.0
    %980 = vmatprep.subr.mxu0 0.0
    %981 = vmatpush1.msra.mxu0 0.0
    %982 = vmatprep.subr.mxu0 0.0
    %983 = vmatpush1.msra.mxu0 0.0
    %984 = vmatprep.subr.mxu0 0.0
    %985 = vmatpush1.msra.mxu0 0.0
    %986 = vmatprep.subr.mxu0 0.0
    %987 = vmatpush1.msra.mxu0 0.0
    %988 = vmatprep.subr.mxu0 0.0
    %989 = vmatpush1.msra.mxu0 0.0
    %990 = vmatprep.subr.mxu0 0.0
    %991 = vmatpush1.msra.mxu0 0.0
    %992 = vmatprep.subr.mxu0 0.0
    %993 = vmatpush1.msra.mxu0 0.0
    %994 = vmatprep.subr.mxu0 0.0
    %995 = vmatpush1.msra.mxu0 0.0
    %996 = vmatprep.subr.mxu0 0.0
    %997 = vmatpush1.msra.mxu0 0.0
    %998 = vmatprep.subr.mxu0 0.0
    %999 = vmatpush1.msra.mxu0 0.0
    %1000 = vmatprep.subr.mxu0 0.0
    %1001 = vmatpush1.msra.mxu0 0.0
    %1002 = vmatprep.subr.mxu0 0.0
    %1003 = vmatpush1.msra.mxu0 0.0
    %1004 = vmatprep.subr.mxu0 0.0
    %1005 = vmatpush1.msra.mxu0 0.0
    %1006 = vmatprep.mubr.f32.mxu0 0.0
    %1007 = vmatmul.mubr.f32.gmra.mrb[0].mxu0 %v937
    %v1008 = vpop.f32.mrb[0].mxu0
    %v1009 = vadd.f32 %v421, %v1008
    %v1010 = vpop.f32.mrb[0].mxu0
    %v1011 = vadd.f32 %v425, %v1010
    %1012 = vdwg.mxu0
    %1013 = vmatprep.subr.mxu0 0.0
    %1014 = vmatpush1.msra.mxu0 %v98
    %1015 = vmatprep.subr.mxu0 0.0
    %1016 = vmatpush1.msra.mxu0 %v101
    %1017 = vmatprep.subr.mxu0 0.0
    %1018 = vmatpush1.msra.mxu0 %v104
    %1019 = vmatprep.subr.mxu0 0.0
    %1020 = vmatpush1.msra.mxu0 %v107
    %1021 = vmatprep.subr.mxu0 0.0
    %1022 = vmatpush1.msra.mxu0 %v110
    %1023 = vmatprep.subr.mxu0 0.0
    %1024 = vmatpush1.msra.mxu0 %v113
    %1025 = vmatprep.subr.mxu0 0.0
    %1026 = vmatpush1.msra.mxu0 %v116
    %1027 = vmatprep.subr.mxu0 0.0
    %1028 = vmatpush1.msra.mxu0 %v119
    %1029 = vmatprep.subr.mxu0 0.0
    %1030 = vmatpush1.msra.mxu0 %v122
    %1031 = vmatprep.subr.mxu0 0.0
    %1032 = vmatpush1.msra.mxu0 %v125
    %1033 = vmatprep.subr.mxu0 0.0
    %1034 = vmatpush1.msra.mxu0 %v128
    %1035 = vmatprep.subr.mxu0 0.0
    %1036 = vmatpush1.msra.mxu0 %v131
    %1037 = vmatprep.subr.mxu0 0.0
    %1038 = vmatpush1.msra.mxu0 %v134
    %1039 = vmatprep.subr.mxu0 0.0
    %1040 = vmatpush1.msra.mxu0 %v137
    %1041 = vmatprep.subr.mxu0 0.0
    %1042 = vmatpush1.msra.mxu0 %v140
    %1043 = vmatprep.subr.mxu0 0.0
    %1044 = vmatpush1.msra.mxu0 %v143
    %1045 = vmatprep.subr.mxu0 0.0
    %1046 = vmatpush1.msra.mxu0 0.0
    %1047 = vmatprep.subr.mxu0 0.0
    %1048 = vmatpush1.msra.mxu0 0.0
    %1049 = vmatprep.subr.mxu0 0.0
    %1050 = vmatpush1.msra.mxu0 0.0
    %1051 = vmatprep.subr.mxu0 0.0
    %1052 = vmatpush1.msra.mxu0 0.0
    %1053 = vmatprep.subr.mxu0 0.0
    %1054 = vmatpush1.msra.mxu0 0.0
    %1055 = vmatprep.subr.mxu0 0.0
    %1056 = vmatpush1.msra.mxu0 0.0
    %1057 = vmatprep.subr.mxu0 0.0
    %1058 = vmatpush1.msra.mxu0 0.0
    %1059 = vmatprep.subr.mxu0 0.0
    %1060 = vmatpush1.msra.mxu0 0.0
    %1061 = vmatprep.subr.mxu0 0.0
    %1062 = vmatpush1.msra.mxu0 0.0
    %1063 = vmatprep.subr.mxu0 0.0
    %1064 = vmatpush1.msra.mxu0 0.0
    %1065 = vmatprep.subr.mxu0 0.0
    %1066 = vmatpush1.msra.mxu0 0.0
    %1067 = vmatprep.subr.mxu0 0.0
    %1068 = vmatpush1.msra.mxu0 0.0
    %1069 = vmatprep.subr.mxu0 0.0
    %1070 = vmatpush1.msra.mxu0 0.0
    %1071 = vmatprep.subr.mxu0 0.0
    %1072 = vmatpush1.msra.mxu0 0.0
    %1073 = vmatprep.subr.mxu0 0.0
    %1074 = vmatpush1.msra.mxu0 0.0
    %1075 = vmatprep.subr.mxu0 0.0
    %1076 = vmatpush1.msra.mxu0 0.0
    %1077 = vmatprep.mubr.f32.mxu0 0.0
    %1078 = vmatmul.mubr.f32.gmra.mrb[0].mxu0 %v937
    %v1079 = vpop.f32.mrb[0].mxu0
    %v1080 = vadd.f32 %v429, %v1079
    %v1081 = vpop.f32.mrb[0].mxu0
    %1082 = vdwg.mxu0
    %v1083 = vadd.f32 %v939, %v1009
    %v1084 = vxor.u32 %v1083, 2147483648
    %v1085 = vmul.f32 %v1084, 1.442695
    %v1086 = vpow.pop %v1085
    %v1087 = vadd.f32 %v1086, 1.0
    %v1088 = vrcp.pop %v1087
    %v1089 = vmul.f32 1.0, %v1088
    %v1090 = vadd.f32 %v940, %v1011
    %v1091 = vxor.u32 %v1090, 2147483648
    %v1092 = vmul.f32 %v1091, 1.442695
    %v1093 = vpow.pop %v1092
    %v1094 = vadd.f32 %v1093, 1.0
    %v1095 = vrcp.pop %v1094
    %v1096 = vmul.f32 1.0, %v1095
    %v1097 = vmul.f32 %v1089, %v1080
    %v1098 = vadd.f32 %v941, %v1097
    %v1099 = vtanh.pop %v1098
    %v1100 = vsub.f32 1.0, %v1096
    %v1101 = vmul.f32 %v1100, %v1099
    %v1102 = vmul.f32 %v1096, %v937
    %v1103 = vadd.f32 %v1101, %v1102
    %1104 = vst [vmem:[#allocation2] sm:$0xff] %v1103
    %s1105 = scalar_lea.vmem %s5, 24
    %1106 = vst [vmem:[%s1105] sm:$0xff] %v1103
    %v1107 = vld [vmem:[#allocation2] sm:$0xff]
    %s1108 = scalar_lea.vmem [#allocation3], 96
    %v1109 = vld [vmem:[%s1108] sm:$0xff]
    %v1110 = vld [vmem:[%s1108 + $0x8] sm:$0xff]
    %v1111 = vld [vmem:[%s1108 + $0x10] sm:$0xff]
    %1112 = vmatprep.subr.mxu0 %v97
    %1113 = vmatpush1.msra.mxu0 %v96
    %1114 = vmatprep.subr.mxu0 %v100
    %1115 = vmatpush1.msra.mxu0 %v99
    %1116 = vmatprep.subr.mxu0 %v103
    %1117 = vmatpush1.msra.mxu0 %v102
    %1118 = vmatprep.subr.mxu0 %v106
    %1119 = vmatpush1.msra.mxu0 %v105
    %1120 = vmatprep.subr.mxu0 %v109
    %1121 = vmatpush1.msra.mxu0 %v108
    %1122 = vmatprep.subr.mxu0 %v112
    %1123 = vmatpush1.msra.mxu0 %v111
    %1124 = vmatprep.subr.mxu0 %v115
    %1125 = vmatpush1.msra.mxu0 %v114
    %1126 = vmatprep.subr.mxu0 %v118
    %1127 = vmatpush1.msra.mxu0 %v117
    %1128 = vmatprep.subr.mxu0 %v121
    %1129 = vmatpush1.msra.mxu0 %v120
    %1130 = vmatprep.subr.mxu0 %v124
    %1131 = vmatpush1.msra.mxu0 %v123
    %1132 = vmatprep.subr.mxu0 %v127
    %1133 = vmatpush1.msra.mxu0 %v126
    %1134 = vmatprep.subr.mxu0 %v130
    %1135 = vmatpush1.msra.mxu0 %v129
    %1136 = vmatprep.subr.mxu0 %v133
    %1137 = vmatpush1.msra.mxu0 %v132
    %1138 = vmatprep.subr.mxu0 %v136
    %1139 = vmatpush1.msra.mxu0 %v135
    %1140 = vmatprep.subr.mxu0 %v139
    %1141 = vmatpush1.msra.mxu0 %v138
    %1142 = vmatprep.subr.mxu0 %v142
    %1143 = vmatpush1.msra.mxu0 %v141
    %1144 = vmatprep.subr.mxu0 0.0
    %1145 = vmatpush1.msra.mxu0 0.0
    %1146 = vmatprep.subr.mxu0 0.0
    %1147 = vmatpush1.msra.mxu0 0.0
    %1148 = vmatprep.subr.mxu0 0.0
    %1149 = vmatpush1.msra.mxu0 0.0
    %1150 = vmatprep.subr.mxu0 0.0
    %1151 = vmatpush1.msra.mxu0 0.0
    %1152 = vmatprep.subr.mxu0 0.0
    %1153 = vmatpush1.msra.mxu0 0.0
    %1154 = vmatprep.subr.mxu0 0.0
    %1155 = vmatpush1.msra.mxu0 0.0
    %1156 = vmatprep.subr.mxu0 0.0
    %1157 = vmatpush1.msra.mxu0 0.0
    %1158 = vmatprep.subr.mxu0 0.0
    %1159 = vmatpush1.msra.mxu0 0.0
    %1160 = vmatprep.subr.mxu0 0.0
    %1161 = vmatpush1.msra.mxu0 0.0
    %1162 = vmatprep.subr.mxu0 0.0
    %1163 = vmatpush1.msra.mxu0 0.0
    %1164 = vmatprep.subr.mxu0 0.0
    %1165 = vmatpush1.msra.mxu0 0.0
    %1166 = vmatprep.subr.mxu0 0.0
    %1167 = vmatpush1.msra.mxu0 0.0
    %1168 = vmatprep.subr.mxu0 0.0
    %1169 = vmatpush1.msra.mxu0 0.0
    %1170 = vmatprep.subr.mxu0 0.0
    %1171 = vmatpush1.msra.mxu0 0.0
    %1172 = vmatprep.subr.mxu0 0.0
    %1173 = vmatpush1.msra.mxu0 0.0
    %1174 = vmatprep.subr.mxu0 0.0
    %1175 = vmatpush1.msra.mxu0 0.0
    %1176 = vmatprep.mubr.f32.mxu0 0.0
    %1177 = vmatmul.mubr.f32.gmra.mrb[0].mxu0 %v1107
    %v1178 = vpop.f32.mrb[0].mxu0
    %v1179 = vadd.f32 %v421, %v1178
    %v1180 = vpop.f32.mrb[0].mxu0
    %v1181 = vadd.f32 %v425, %v1180
    %1182 = vdwg.mxu0
    %1183 = vmatprep.subr.mxu0 0.0
    %1184 = vmatpush1.msra.mxu0 %v98
    %1185 = vmatprep.subr.mxu0 0.0
    %1186 = vmatpush1.msra.mxu0 %v101
    %1187 = vmatprep.subr.mxu0 0.0
    %1188 = vmatpush1.msra.mxu0 %v104
    %1189 = vmatprep.subr.mxu0 0.0
    %1190 = vmatpush1.msra.mxu0 %v107
    %1191 = vmatprep.subr.mxu0 0.0
    %1192 = vmatpush1.msra.mxu0 %v110
    %1193 = vmatprep.subr.mxu0 0.0
    %1194 = vmatpush1.msra.mxu0 %v113
    %1195 = vmatprep.subr.mxu0 0.0
    %1196 = vmatpush1.msra.mxu0 %v116
    %1197 = vmatprep.subr.mxu0 0.0
    %1198 = vmatpush1.msra.mxu0 %v119
    %1199 = vmatprep.subr.mxu0 0.0
    %1200 = vmatpush1.msra.mxu0 %v122
    %1201 = vmatprep.subr.mxu0 0.0
    %1202 = vmatpush1.msra.mxu0 %v125
    %1203 = vmatprep.subr.mxu0 0.0
    %1204 = vmatpush1.msra.mxu0 %v128
    %1205 = vmatprep.subr.mxu0 0.0
    %1206 = vmatpush1.msra.mxu0 %v131
    %1207 = vmatprep.subr.mxu0 0.0
    %1208 = vmatpush1.msra.mxu0 %v134
    %1209 = vmatprep.subr.mxu0 0.0
    %1210 = vmatpush1.msra.mxu0 %v137
    %1211 = vmatprep.subr.mxu0 0.0
    %1212 = vmatpush1.msra.mxu0 %v140
    %1213 = vmatprep.subr.mxu0 0.0
    %1214 = vmatpush1.msra.mxu0 %v143
    %1215 = vmatprep.subr.mxu0 0.0
    %1216 = vmatpush1.msra.mxu0 0.0
    %1217 = vmatprep.subr.mxu0 0.0
    %1218 = vmatpush1.msra.mxu0 0.0
    %1219 = vmatprep.subr.mxu0 0.0
    %1220 = vmatpush1.msra.mxu0 0.0
    %1221 = vmatprep.subr.mxu0 0.0
    %1222 = vmatpush1.msra.mxu0 0.0
    %1223 = vmatprep.subr.mxu0 0.0
    %1224 = vmatpush1.msra.mxu0 0.0
    %1225 = vmatprep.subr.mxu0 0.0
    %1226 = vmatpush1.msra.mxu0 0.0
    %1227 = vmatprep.subr.mxu0 0.0
    %1228 = vmatpush1.msra.mxu0 0.0
    %1229 = vmatprep.subr.mxu0 0.0
    %1230 = vmatpush1.msra.mxu0 0.0
    %1231 = vmatprep.subr.mxu0 0.0
    %1232 = vmatpush1.msra.mxu0 0.0
    %1233 = vmatprep.subr.mxu0 0.0
    %1234 = vmatpush1.msra.mxu0 0.0
    %1235 = vmatprep.subr.mxu0 0.0
    %1236 = vmatpush1.msra.mxu0 0.0
    %1237 = vmatprep.subr.mxu0 0.0
    %1238 = vmatpush1.msra.mxu0 0.0
    %1239 = vmatprep.subr.mxu0 0.0
    %1240 = vmatpush1.msra.mxu0 0.0
    %1241 = vmatprep.subr.mxu0 0.0
    %1242 = vmatpush1.msra.mxu0 0.0
    %1243 = vmatprep.subr.mxu0 0.0
    %1244 = vmatpush1.msra.mxu0 0.0
    %1245 = vmatprep.subr.mxu0 0.0
    %1246 = vmatpush1.msra.mxu0 0.0
    %1247 = vmatprep.mubr.f32.mxu0 0.0
    %1248 = vmatmul.mubr.f32.gmra.mrb[0].mxu0 %v1107
    %v1249 = vpop.f32.mrb[0].mxu0
    %v1250 = vadd.f32 %v429, %v1249
    %v1251 = vpop.f32.mrb[0].mxu0
    %1252 = vdwg.mxu0
    %v1253 = vadd.f32 %v1109, %v1179
    %v1254 = vxor.u32 %v1253, 2147483648
    %v1255 = vmul.f32 %v1254, 1.442695
    %v1256 = vpow.pop %v1255
    %v1257 = vadd.f32 %v1256, 1.0
    %v1258 = vrcp.pop %v1257
    %v1259 = vmul.f32 1.0, %v1258
    %v1260 = vadd.f32 %v1110, %v1181
    %v1261 = vxor.u32 %v1260, 2147483648
    %v1262 = vmul.f32 %v1261, 1.442695
    %v1263 = vpow.pop %v1262
    %v1264 = vadd.f32 %v1263, 1.0
    %v1265 = vrcp.pop %v1264
    %v1266 = vmul.f32 1.0, %v1265
    %v1267 = vmul.f32 %v1259, %v1250
    %v1268 = vadd.f32 %v1111, %v1267
    %v1269 = vtanh.pop %v1268
    %v1270 = vsub.f32 1.0, %v1266
    %v1271 = vmul.f32 %v1270, %v1269
    %v1272 = vmul.f32 %v1266, %v1107
    %v1273 = vadd.f32 %v1271, %v1272
    %1274 = vst [vmem:[#allocation2] sm:$0xff] %v1273
    %s1275 = scalar_lea.vmem %s5, 32
    %1276 = vst [vmem:[%s1275] sm:$0xff] %v1273
    %v1277 = vld [vmem:[#allocation2] sm:$0xff]
    %s1278 = scalar_lea.vmem [#allocation3], 120
    %v1279 = vld [vmem:[%s1278] sm:$0xff]
    %v1280 = vld [vmem:[%s1278 + $0x8] sm:$0xff]
    %v1281 = vld [vmem:[%s1278 + $0x10] sm:$0xff]
    %1282 = vmatprep.subr.mxu0 %v97
    %1283 = vmatpush1.msra.mxu0 %v96
    %1284 = vmatprep.subr.mxu0 %v100
    %1285 = vmatpush1.msra.mxu0 %v99
    %1286 = vmatprep.subr.mxu0 %v103
    %1287 = vmatpush1.msra.mxu0 %v102
    %1288 = vmatprep.subr.mxu0 %v106
    %1289 = vmatpush1.msra.mxu0 %v105
    %1290 = vmatprep.subr.mxu0 %v109
    %1291 = vmatpush1.msra.mxu0 %v108
    %1292 = vmatprep.subr.mxu0 %v112
    %1293 = vmatpush1.msra.mxu0 %v111
    %1294 = vmatprep.subr.mxu0 %v115
    %1295 = vmatpush1.msra.mxu0 %v114
    %1296 = vmatprep.subr.mxu0 %v118
    %1297 = vmatpush1.msra.mxu0 %v117
    %1298 = vmatprep.subr.mxu0 %v121
    %1299 = vmatpush1.msra.mxu0 %v120
    %1300 = vmatprep.subr.mxu0 %v124
    %1301 = vmatpush1.msra.mxu0 %v123
    %1302 = vmatprep.subr.mxu0 %v127
    %1303 = vmatpush1.msra.mxu0 %v126
    %1304 = vmatprep.subr.mxu0 %v130
    %1305 = vmatpush1.msra.mxu0 %v129
    %1306 = vmatprep.subr.mxu0 %v133
    %1307 = vmatpush1.msra.mxu0 %v132
    %1308 = vmatprep.subr.mxu0 %v136
    %1309 = vmatpush1.msra.mxu0 %v135
    %1310 = vmatprep.subr.mxu0 %v139
    %1311 = vmatpush1.msra.mxu0 %v138
    %1312 = vmatprep.subr.mxu0 %v142
    %1313 = vmatpush1.msra.mxu0 %v141
    %1314 = vmatprep.subr.mxu0 0.0
    %1315 = vmatpush1.msra.mxu0 0.0
    %1316 = vmatprep.subr.mxu0 0.0
    %1317 = vmatpush1.msra.mxu0 0.0
    %1318 = vmatprep.subr.mxu0 0.0
    %1319 = vmatpush1.msra.mxu0 0.0
    %1320 = vmatprep.subr.mxu0 0.0
    %1321 = vmatpush1.msra.mxu0 0.0
    %1322 = vmatprep.subr.mxu0 0.0
    %1323 = vmatpush1.msra.mxu0 0.0
    %1324 = vmatprep.subr.mxu0 0.0
    %1325 = vmatpush1.msra.mxu0 0.0
    %1326 = vmatprep.subr.mxu0 0.0
    %1327 = vmatpush1.msra.mxu0 0.0
    %1328 = vmatprep.subr.mxu0 0.0
    %1329 = vmatpush1.msra.mxu0 0.0
    %1330 = vmatprep.subr.mxu0 0.0
    %1331 = vmatpush1.msra.mxu0 0.0
    %1332 = vmatprep.subr.mxu0 0.0
    %1333 = vmatpush1.msra.mxu0 0.0
    %1334 = vmatprep.subr.mxu0 0.0
    %1335 = vmatpush1.msra.mxu0 0.0
    %1336 = vmatprep.subr.mxu0 0.0
    %1337 = vmatpush1.msra.mxu0 0.0
    %1338 = vmatprep.subr.mxu0 0.0
    %1339 = vmatpush1.msra.mxu0 0.0
    %1340 = vmatprep.subr.mxu0 0.0
    %1341 = vmatpush1.msra.mxu0 0.0
    %1342 = vmatprep.subr.mxu0 0.0
    %1343 = vmatpush1.msra.mxu0 0.0
    %1344 = vmatprep.subr.mxu0 0.0
    %1345 = vmatpush1.msra.mxu0 0.0
    %1346 = vmatprep.mubr.f32.mxu0 0.0
    %1347 = vmatmul.mubr.f32.gmra.mrb[0].mxu0 %v1277
    %v1348 = vpop.f32.mrb[0].mxu0
    %v1349 = vadd.f32 %v421, %v1348
    %v1350 = vpop.f32.mrb[0].mxu0
    %v1351 = vadd.f32 %v425, %v1350
    %1352 = vdwg.mxu0
    %1353 = vmatprep.subr.mxu0 0.0
    %1354 = vmatpush1.msra.mxu0 %v98
    %1355 = vmatprep.subr.mxu0 0.0
    %1356 = vmatpush1.msra.mxu0 %v101
    %1357 = vmatprep.subr.mxu0 0.0
    %1358 = vmatpush1.msra.mxu0 %v104
    %1359 = vmatprep.subr.mxu0 0.0
    %1360 = vmatpush1.msra.mxu0 %v107
    %1361 = vmatprep.subr.mxu0 0.0
    %1362 = vmatpush1.msra.mxu0 %v110
    %1363 = vmatprep.subr.mxu0 0.0
    %1364 = vmatpush1.msra.mxu0 %v113
    %1365 = vmatprep.subr.mxu0 0.0
    %1366 = vmatpush1.msra.mxu0 %v116
    %1367 = vmatprep.subr.mxu0 0.0
    %1368 = vmatpush1.msra.mxu0 %v119
    %1369 = vmatprep.subr.mxu0 0.0
    %1370 = vmatpush1.msra.mxu0 %v122
    %1371 = vmatprep.subr.mxu0 0.0
    %1372 = vmatpush1.msra.mxu0 %v125
    %1373 = vmatprep.subr.mxu0 0.0
    %1374 = vmatpush1.msra.mxu0 %v128
    %1375 = vmatprep.subr.mxu0 0.0
    %1376 = vmatpush1.msra.mxu0 %v131
    %1377 = vmatprep.subr.mxu0 0.0
    %1378 = vmatpush1.msra.mxu0 %v134
    %1379 = vmatprep.subr.mxu0 0.0
    %1380 = vmatpush1.msra.mxu0 %v137
    %1381 = vmatprep.subr.mxu0 0.0
    %1382 = vmatpush1.msra.mxu0 %v140
    %1383 = vmatprep.subr.mxu0 0.0
    %1384 = vmatpush1.msra.mxu0 %v143
    %1385 = vmatprep.subr.mxu0 0.0
    %1386 = vmatpush1.msra.mxu0 0.0
    %1387 = vmatprep.subr.mxu0 0.0
    %1388 = vmatpush1.msra.mxu0 0.0
    %1389 = vmatprep.subr.mxu0 0.0
    %1390 = vmatpush1.msra.mxu0 0.0
    %1391 = vmatprep.subr.mxu0 0.0
    %1392 = vmatpush1.msra.mxu0 0.0
    %1393 = vmatprep.subr.mxu0 0.0
    %1394 = vmatpush1.msra.mxu0 0.0
    %1395 = vmatprep.subr.mxu0 0.0
    %1396 = vmatpush1.msra.mxu0 0.0
    %1397 = vmatprep.subr.mxu0 0.0
    %1398 = vmatpush1.msra.mxu0 0.0
    %1399 = vmatprep.subr.mxu0 0.0
    %1400 = vmatpush1.msra.mxu0 0.0
    %1401 = vmatprep.subr.mxu0 0.0
    %1402 = vmatpush1.msra.mxu0 0.0
    %1403 = vmatprep.subr.mxu0 0.0
    %1404 = vmatpush1.msra.mxu0 0.0
    %1405 = vmatprep.subr.mxu0 0.0
    %1406 = vmatpush1.msra.mxu0 0.0
    %1407 = vmatprep.subr.mxu0 0.0
    %1408 = vmatpush1.msra.mxu0 0.0
    %1409 = vmatprep.subr.mxu0 0.0
    %1410 = vmatpush1.msra.mxu0 0.0
    %1411 = vmatprep.subr.mxu0 0.0
    %1412 = vmatpush1.msra.mxu0 0.0
    %1413 = vmatprep.subr.mxu0 0.0
    %1414 = vmatpush1.msra.mxu0 0.0
    %1415 = vmatprep.subr.mxu0 0.0
    %1416 = vmatpush1.msra.mxu0 0.0
    %1417 = vmatprep.mubr.f32.mxu0 0.0
    %1418 = vmatmul.mubr.f32.gmra.mrb[0].mxu0 %v1277
    %v1419 = vpop.f32.mrb[0].mxu0
    %v1420 = vadd.f32 %v429, %v1419
    %v1421 = vpop.f32.mrb[0].mxu0
    %1422 = vdwg.mxu0
    %v1423 = vadd.f32 %v1279, %v1349
    %v1424 = vxor.u32 %v1423, 2147483648
    %v1425 = vmul.f32 %v1424, 1.442695
    %v1426 = vpow.pop %v1425
    %v1427 = vadd.f32 %v1426, 1.0
    %v1428 = vrcp.pop %v1427
    %v1429 = vmul.f32 1.0, %v1428
    %v1430 = vadd.f32 %v1280, %v1351
    %v1431 = vxor.u32 %v1430, 2147483648
    %v1432 = vmul.f32 %v1431, 1.442695
    %v1433 = vpow.pop %v1432
    %v1434 = vadd.f32 %v1433, 1.0
    %v1435 = vrcp.pop %v1434
    %v1436 = vmul.f32 1.0, %v1435
    %v1437 = vmul.f32 %v1429, %v1420
    %v1438 = vadd.f32 %v1281, %v1437
    %v1439 = vtanh.pop %v1438
    %v1440 = vsub.f32 1.0, %v1436
    %v1441 = vmul.f32 %v1440, %v1439
    %v1442 = vmul.f32 %v1436, %v1277
    %v1443 = vadd.f32 %v1441, %v1442
    %1444 = vst [vmem:[#allocation2] sm:$0xff] %v1443
    %s1445 = scalar_lea.vmem %s5, 40
    %1446 = vst [vmem:[%s1445] sm:$0xff] %v1443
    %v1447 = vld [vmem:[#allocation2] sm:$0xff]
    %s1448 = scalar_lea.vmem [#allocation3], 144
    %v1449 = vld [vmem:[%s1448] sm:$0xff]
    %v1450 = vld [vmem:[%s1448 + $0x8] sm:$0xff]
    %v1451 = vld [vmem:[%s1448 + $0x10] sm:$0xff]
    %1452 = vmatprep.subr.mxu0 %v97
    %1453 = vmatpush1.msra.mxu0 %v96
    %1454 = vmatprep.subr.mxu0 %v100
    %1455 = vmatpush1.msra.mxu0 %v99
    %1456 = vmatprep.subr.mxu0 %v103
    %1457 = vmatpush1.msra.mxu0 %v102
    %1458 = vmatprep.subr.mxu0 %v106
    %1459 = vmatpush1.msra.mxu0 %v105
    %1460 = vmatprep.subr.mxu0 %v109
    %1461 = vmatpush1.msra.mxu0 %v108
    %1462 = vmatprep.subr.mxu0 %v112
    %1463 = vmatpush1.msra.mxu0 %v111
    %1464 = vmatprep.subr.mxu0 %v115
    %1465 = vmatpush1.msra.mxu0 %v114
    %1466 = vmatprep.subr.mxu0 %v118
    %1467 = vmatpush1.msra.mxu0 %v117
    %1468 = vmatprep.subr.mxu0 %v121
    %1469 = vmatpush1.msra.mxu0 %v120
    %1470 = vmatprep.subr.mxu0 %v124
    %1471 = vmatpush1.msra.mxu0 %v123
    %1472 = vmatprep.subr.mxu0 %v127
    %1473 = vmatpush1.msra.mxu0 %v126
    %1474 = vmatprep.subr.mxu0 %v130
    %1475 = vmatpush1.msra.mxu0 %v129
    %1476 = vmatprep.subr.mxu0 %v133
    %1477 = vmatpush1.msra.mxu0 %v132
    %1478 = vmatprep.subr.mxu0 %v136
    %1479 = vmatpush1.msra.mxu0 %v135
    %1480 = vmatprep.subr.mxu0 %v139
    %1481 = vmatpush1.msra.mxu0 %v138
    %1482 = vmatprep.subr.mxu0 %v142
    %1483 = vmatpush1.msra.mxu0 %v141
    %1484 = vmatprep.subr.mxu0 0.0
    %1485 = vmatpush1.msra.mxu0 0.0
    %1486 = vmatprep.subr.mxu0 0.0
    %1487 = vmatpush1.msra.mxu0 0.0
    %1488 = vmatprep.subr.mxu0 0.0
    %1489 = vmatpush1.msra.mxu0 0.0
    %1490 = vmatprep.subr.mxu0 0.0
    %1491 = vmatpush1.msra.mxu0 0.0
    %1492 = vmatprep.subr.mxu0 0.0
    %1493 = vmatpush1.msra.mxu0 0.0
    %1494 = vmatprep.subr.mxu0 0.0
    %1495 = vmatpush1.msra.mxu0 0.0
    %1496 = vmatprep.subr.mxu0 0.0
    %1497 = vmatpush1.msra.mxu0 0.0
    %1498 = vmatprep.subr.mxu0 0.0
    %1499 = vmatpush1.msra.mxu0 0.0
    %1500 = vmatprep.subr.mxu0 0.0
    %1501 = vmatpush1.msra.mxu0 0.0
    %1502 = vmatprep.subr.mxu0 0.0
    %1503 = vmatpush1.msra.mxu0 0.0
    %1504 = vmatprep.subr.mxu0 0.0
    %1505 = vmatpush1.msra.mxu0 0.0
    %1506 = vmatprep.subr.mxu0 0.0
    %1507 = vmatpush1.msra.mxu0 0.0
    %1508 = vmatprep.subr.mxu0 0.0
    %1509 = vmatpush1.msra.mxu0 0.0
    %1510 = vmatprep.subr.mxu0 0.0
    %1511 = vmatpush1.msra.mxu0 0.0
    %1512 = vmatprep.subr.mxu0 0.0
    %1513 = vmatpush1.msra.mxu0 0.0
    %1514 = vmatprep.subr.mxu0 0.0
    %1515 = vmatpush1.msra.mxu0 0.0
    %1516 = vmatprep.mubr.f32.mxu0 0.0
    %1517 = vmatmul.mubr.f32.gmra.mrb[0].mxu0 %v1447
    %v1518 = vpop.f32.mrb[0].mxu0
    %v1519 = vadd.f32 %v421, %v1518
    %v1520 = vpop.f32.mrb[0].mxu0
    %v1521 = vadd.f32 %v425, %v1520
    %1522 = vdwg.mxu0
    %1523 = vmatprep.subr.mxu0 0.0
    %1524 = vmatpush1.msra.mxu0 %v98
    %1525 = vmatprep.subr.mxu0 0.0
    %1526 = vmatpush1.msra.mxu0 %v101
    %1527 = vmatprep.subr.mxu0 0.0
    %1528 = vmatpush1.msra.mxu0 %v104
    %1529 = vmatprep.subr.mxu0 0.0
    %1530 = vmatpush1.msra.mxu0 %v107
    %1531 = vmatprep.subr.mxu0 0.0
    %1532 = vmatpush1.msra.mxu0 %v110
    %1533 = vmatprep.subr.mxu0 0.0
    %1534 = vmatpush1.msra.mxu0 %v113
    %1535 = vmatprep.subr.mxu0 0.0
    %1536 = vmatpush1.msra.mxu0 %v116
    %1537 = vmatprep.subr.mxu0 0.0
    %1538 = vmatpush1.msra.mxu0 %v119
    %1539 = vmatprep.subr.mxu0 0.0
    %1540 = vmatpush1.msra.mxu0 %v122
    %1541 = vmatprep.subr.mxu0 0.0
    %1542 = vmatpush1.msra.mxu0 %v125
    %1543 = vmatprep.subr.mxu0 0.0
    %1544 = vmatpush1.msra.mxu0 %v128
    %1545 = vmatprep.subr.mxu0 0.0
    %1546 = vmatpush1.msra.mxu0 %v131
    %1547 = vmatprep.subr.mxu0 0.0
    %1548 = vmatpush1.msra.mxu0 %v134
    %1549 = vmatprep.subr.mxu0 0.0
    %1550 = vmatpush1.msra.mxu0 %v137
    %1551 = vmatprep.subr.mxu0 0.0
    %1552 = vmatpush1.msra.mxu0 %v140
    %1553 = vmatprep.subr.mxu0 0.0
    %1554 = vmatpush1.msra.mxu0 %v143
    %1555 = vmatprep.subr.mxu0 0.0
    %1556 = vmatpush1.msra.mxu0 0.0
    %1557 = vmatprep.subr.mxu0 0.0
    %1558 = vmatpush1.msra.mxu0 0.0
    %1559 = vmatprep.subr.mxu0 0.0
    %1560 = vmatpush1.msra.mxu0 0.0
    %1561 = vmatprep.subr.mxu0 0.0
    %1562 = vmatpush1.msra.mxu0 0.0
    %1563 = vmatprep.subr.mxu0 0.0
    %1564 = vmatpush1.msra.mxu0 0.0
    %1565 = vmatprep.subr.mxu0 0.0
    %1566 = vmatpush1.msra.mxu0 0.0
    %1567 = vmatprep.subr.mxu0 0.0
    %1568 = vmatpush1.msra.mxu0 0.0
    %1569 = vmatprep.subr.mxu0 0.0
    %1570 = vmatpush1.msra.mxu0 0.0
    %1571 = vmatprep.subr.mxu0 0.0
    %1572 = vmatpush1.msra.mxu0 0.0
    %1573 = vmatprep.subr.mxu0 0.0
    %1574 = vmatpush1.msra.mxu0 0.0
    %1575 = vmatprep.subr.mxu0 0.0
    %1576 = vmatpush1.msra.mxu0 0.0
    %1577 = vmatprep.subr.mxu0 0.0
    %1578 = vmatpush1.msra.mxu0 0.0
    %1579 = vmatprep.subr.mxu0 0.0
    %1580 = vmatpush1.msra.mxu0 0.0
    %1581 = vmatprep.subr.mxu0 0.0
    %1582 = vmatpush1.msra.mxu0 0.0
    %1583 = vmatprep.subr.mxu0 0.0
    %1584 = vmatpush1.msra.mxu0 0.0
    %1585 = vmatprep.subr.mxu0 0.0
    %1586 = vmatpush1.msra.mxu0 0.0
    %1587 = vmatprep.mubr.f32.mxu0 0.0
    %1588 = vmatmul.mubr.f32.gmra.mrb[0].mxu0 %v1447
    %v1589 = vpop.f32.mrb[0].mxu0
    %v1590 = vadd.f32 %v429, %v1589
    %v1591 = vpop.f32.mrb[0].mxu0
    %1592 = vdwg.mxu0
    %v1593 = vadd.f32 %v1449, %v1519
    %v1594 = vxor.u32 %v1593, 2147483648
    %v1595 = vmul.f32 %v1594, 1.442695
    %v1596 = vpow.pop %v1595
    %v1597 = vadd.f32 %v1596, 1.0
    %v1598 = vrcp.pop %v1597
    %v1599 = vmul.f32 1.0, %v1598
    %v1600 = vadd.f32 %v1450, %v1521
    %v1601 = vxor.u32 %v1600, 2147483648
    %v1602 = vmul.f32 %v1601, 1.442695
    %v1603 = vpow.pop %v1602
    %v1604 = vadd.f32 %v1603, 1.0
    %v1605 = vrcp.pop %v1604
    %v1606 = vmul.f32 1.0, %v1605
    %v1607 = vmul.f32 %v1599, %v1590
    %v1608 = vadd.f32 %v1451, %v1607
    %v1609 = vtanh.pop %v1608
    %v1610 = vsub.f32 1.0, %v1606
    %v1611 = vmul.f32 %v1610, %v1609
    %v1612 = vmul.f32 %v1606, %v1447
    %v1613 = vadd.f32 %v1611, %v1612
    %1614 = vst [vmem:[#allocation2] sm:$0xff] %v1613
    %s1615 = scalar_lea.vmem %s5, 48
    %1616 = vst [vmem:[%s1615] sm:$0xff] %v1613
    %v1617 = vld [vmem:[#allocation2] sm:$0xff]
    %s1618 = scalar_lea.vmem [#allocation3], 168
    %v1619 = vld [vmem:[%s1618] sm:$0xff]
    %v1620 = vld [vmem:[%s1618 + $0x8] sm:$0xff]
    %v1621 = vld [vmem:[%s1618 + $0x10] sm:$0xff]
    %1622 = vmatprep.subr.mxu0 %v97
    %1623 = vmatpush1.msra.mxu0 %v96
    %1624 = vmatprep.subr.mxu0 %v100
    %1625 = vmatpush1.msra.mxu0 %v99
    %1626 = vmatprep.subr.mxu0 %v103
    %1627 = vmatpush1.msra.mxu0 %v102
    %1628 = vmatprep.subr.mxu0 %v106
    %1629 = vmatpush1.msra.mxu0 %v105
    %1630 = vmatprep.subr.mxu0 %v109
    %1631 = vmatpush1.msra.mxu0 %v108
    %1632 = vmatprep.subr.mxu0 %v112
    %1633 = vmatpush1.msra.mxu0 %v111
    %1634 = vmatprep.subr.mxu0 %v115
    %1635 = vmatpush1.msra.mxu0 %v114
    %1636 = vmatprep.subr.mxu0 %v118
    %1637 = vmatpush1.msra.mxu0 %v117
    %1638 = vmatprep.subr.mxu0 %v121
    %1639 = vmatpush1.msra.mxu0 %v120
    %1640 = vmatprep.subr.mxu0 %v124
    %1641 = vmatpush1.msra.mxu0 %v123
    %1642 = vmatprep.subr.mxu0 %v127
    %1643 = vmatpush1.msra.mxu0 %v126
    %1644 = vmatprep.subr.mxu0 %v130
    %1645 = vmatpush1.msra.mxu0 %v129
    %1646 = vmatprep.subr.mxu0 %v133
    %1647 = vmatpush1.msra.mxu0 %v132
    %1648 = vmatprep.subr.mxu0 %v136
    %1649 = vmatpush1.msra.mxu0 %v135
    %1650 = vmatprep.subr.mxu0 %v139
    %1651 = vmatpush1.msra.mxu0 %v138
    %1652 = vmatprep.subr.mxu0 %v142
    %1653 = vmatpush1.msra.mxu0 %v141
    %1654 = vmatprep.subr.mxu0 0.0
    %1655 = vmatpush1.msra.mxu0 0.0
    %1656 = vmatprep.subr.mxu0 0.0
    %1657 = vmatpush1.msra.mxu0 0.0
    %1658 = vmatprep.subr.mxu0 0.0
    %1659 = vmatpush1.msra.mxu0 0.0
    %1660 = vmatprep.subr.mxu0 0.0
    %1661 = vmatpush1.msra.mxu0 0.0
    %1662 = vmatprep.subr.mxu0 0.0
    %1663 = vmatpush1.msra.mxu0 0.0
    %1664 = vmatprep.subr.mxu0 0.0
    %1665 = vmatpush1.msra.mxu0 0.0
    %1666 = vmatprep.subr.mxu0 0.0
    %1667 = vmatpush1.msra.mxu0 0.0
    %1668 = vmatprep.subr.mxu0 0.0
    %1669 = vmatpush1.msra.mxu0 0.0
    %1670 = vmatprep.subr.mxu0 0.0
    %1671 = vmatpush1.msra.mxu0 0.0
    %1672 = vmatprep.subr.mxu0 0.0
    %1673 = vmatpush1.msra.mxu0 0.0
    %1674 = vmatprep.subr.mxu0 0.0
    %1675 = vmatpush1.msra.mxu0 0.0
    %1676 = vmatprep.subr.mxu0 0.0
    %1677 = vmatpush1.msra.mxu0 0.0
    %1678 = vmatprep.subr.mxu0 0.0
    %1679 = vmatpush1.msra.mxu0 0.0
    %1680 = vmatprep.subr.mxu0 0.0
    %1681 = vmatpush1.msra.mxu0 0.0
    %1682 = vmatprep.subr.mxu0 0.0
    %1683 = vmatpush1.msra.mxu0 0.0
    %1684 = vmatprep.subr.mxu0 0.0
    %1685 = vmatpush1.msra.mxu0 0.0
    %1686 = vmatprep.mubr.f32.mxu0 0.0
    %1687 = vmatmul.mubr.f32.gmra.mrb[0].mxu0 %v1617
    %v1688 = vpop.f32.mrb[0].mxu0
    %v1689 = vadd.f32 %v421, %v1688
    %v1690 = vpop.f32.mrb[0].mxu0
    %v1691 = vadd.f32 %v425, %v1690
    %1692 = vdwg.mxu0
    %1693 = vmatprep.subr.mxu0 0.0
    %1694 = vmatpush1.msra.mxu0 %v98
    %1695 = vmatprep.subr.mxu0 0.0
    %1696 = vmatpush1.msra.mxu0 %v101
    %1697 = vmatprep.subr.mxu0 0.0
    %1698 = vmatpush1.msra.mxu0 %v104
    %1699 = vmatprep.subr.mxu0 0.0
    %1700 = vmatpush1.msra.mxu0 %v107
    %1701 = vmatprep.subr.mxu0 0.0
    %1702 = vmatpush1.msra.mxu0 %v110
    %1703 = vmatprep.subr.mxu0 0.0
    %1704 = vmatpush1.msra.mxu0 %v113
    %1705 = vmatprep.subr.mxu0 0.0
    %1706 = vmatpush1.msra.mxu0 %v116
    %1707 = vmatprep.subr.mxu0 0.0
    %1708 = vmatpush1.msra.mxu0 %v119
    %1709 = vmatprep.subr.mxu0 0.0
    %1710 = vmatpush1.msra.mxu0 %v122
    %1711 = vmatprep.subr.mxu0 0.0
    %1712 = vmatpush1.msra.mxu0 %v125
    %1713 = vmatprep.subr.mxu0 0.0
    %1714 = vmatpush1.msra.mxu0 %v128
    %1715 = vmatprep.subr.mxu0 0.0
    %1716 = vmatpush1.msra.mxu0 %v131
    %1717 = vmatprep.subr.mxu0 0.0
    %1718 = vmatpush1.msra.mxu0 %v134
    %1719 = vmatprep.subr.mxu0 0.0
    %1720 = vmatpush1.msra.mxu0 %v137
    %1721 = vmatprep.subr.mxu0 0.0
    %1722 = vmatpush1.msra.mxu0 %v140
    %1723 = vmatprep.subr.mxu0 0.0
    %1724 = vmatpush1.msra.mxu0 %v143
    %1725 = vmatprep.subr.mxu0 0.0
    %1726 = vmatpush1.msra.mxu0 0.0
    %1727 = vmatprep.subr.mxu0 0.0
    %1728 = vmatpush1.msra.mxu0 0.0
    %1729 = vmatprep.subr.mxu0 0.0
    %1730 = vmatpush1.msra.mxu0 0.0
    %1731 = vmatprep.subr.mxu0 0.0
    %1732 = vmatpush1.msra.mxu0 0.0
    %1733 = vmatprep.subr.mxu0 0.0
    %1734 = vmatpush1.msra.mxu0 0.0
    %1735 = vmatprep.subr.mxu0 0.0
    %1736 = vmatpush1.msra.mxu0 0.0
    %1737 = vmatprep.subr.mxu0 0.0
    %1738 = vmatpush1.msra.mxu0 0.0
    %1739 = vmatprep.subr.mxu0 0.0
    %1740 = vmatpush1.msra.mxu0 0.0
    %1741 = vmatprep.subr.mxu0 0.0
    %1742 = vmatpush1.msra.mxu0 0.0
    %1743 = vmatprep.subr.mxu0 0.0
    %1744 = vmatpush1.msra.mxu0 0.0
    %1745 = vmatprep.subr.mxu0 0.0
    %1746 = vmatpush1.msra.mxu0 0.0
    %1747 = vmatprep.subr.mxu0 0.0
    %1748 = vmatpush1.msra.mxu0 0.0
    %1749 = vmatprep.subr.mxu0 0.0
    %1750 = vmatpush1.msra.mxu0 0.0
    %1751 = vmatprep.subr.mxu0 0.0
    %1752 = vmatpush1.msra.mxu0 0.0
    %1753 = vmatprep.subr.mxu0 0.0
    %1754 = vmatpush1.msra.mxu0 0.0
    %1755 = vmatprep.subr.mxu0 0.0
    %1756 = vmatpush1.msra.mxu0 0.0
    %1757 = vmatprep.mubr.f32.mxu0 0.0
    %1758 = vmatmul.mubr.f32.gmra.mrb[0].mxu0 %v1617
    %v1759 = vpop.f32.mrb[0].mxu0
    %v1760 = vadd.f32 %v429, %v1759
    %v1761 = vpop.f32.mrb[0].mxu0
    %1762 = vdwg.mxu0
    %v1763 = vadd.f32 %v1619, %v1689
    %v1764 = vxor.u32 %v1763, 2147483648
    %v1765 = vmul.f32 %v1764, 1.442695
    %v1766 = vpow.pop %v1765
    %v1767 = vadd.f32 %v1766, 1.0
    %v1768 = vrcp.pop %v1767
    %v1769 = vmul.f32 1.0, %v1768
    %v1770 = vadd.f32 %v1620, %v1691
    %v1771 = vxor.u32 %v1770, 2147483648
    %v1772 = vmul.f32 %v1771, 1.442695
    %v1773 = vpow.pop %v1772
    %v1774 = vadd.f32 %v1773, 1.0
    %v1775 = vrcp.pop %v1774
    %v1776 = vmul.f32 1.0, %v1775
    %v1777 = vmul.f32 %v1769, %v1760
    %v1778 = vadd.f32 %v1621, %v1777
    %v1779 = vtanh.pop %v1778
    %v1780 = vsub.f32 1.0, %v1776
    %v1781 = vmul.f32 %v1780, %v1779
    %v1782 = vmul.f32 %v1776, %v1617
    %v1783 = vadd.f32 %v1781, %v1782
    %1784 = vst [vmem:[#allocation2] sm:$0xff] %v1783
    %s1785 = scalar_lea.vmem %s5, 56
    %1786 = vst [vmem:[%s1785] sm:$0xff] %v1783
    %s1787 = scalar_lea.vmem [#allocation4], 384
    %v1788 = vld [vmem:[%s1787] sm:$0xff]
    %v1789 = vld [vmem:[%s1787 + $0x8] sm:$0xff]
    %v1790 = vld [vmem:[%s1787 + $0x10] sm:$0xff]
    %v1791 = vld [vmem:[%s1787 + $0x18] sm:$0xff]
    %v1792 = vld [vmem:[%s1787 + $0x20] sm:$0xff]
    %v1793 = vld [vmem:[%s1787 + $0x28] sm:$0xff]
    %v1794 = vld [vmem:[%s1787 + $0x30] sm:$0xff]
    %v1795 = vld [vmem:[%s1787 + $0x38] sm:$0xff]
    %v1796 = vld [vmem:[%s1787 + $0x40] sm:$0xff]
    %v1797 = vld [vmem:[%s1787 + $0x48] sm:$0xff]
    %v1798 = vld [vmem:[%s1787 + $0x50] sm:$0xff]
    %v1799 = vld [vmem:[%s1787 + $0x58] sm:$0xff]
    %v1800 = vld [vmem:[%s1787 + $0x60] sm:$0xff]
    %v1801 = vld [vmem:[%s1787 + $0x68] sm:$0xff]
    %v1802 = vld [vmem:[%s1787 + $0x70] sm:$0xff]
    %v1803 = vld [vmem:[%s1787 + $0x78] sm:$0xff]
    %v1804 = vld [vmem:[%s1787 + $0x80] sm:$0xff]
    %v1805 = vld [vmem:[%s1787 + $0x88] sm:$0xff]
    %v1806 = vld [vmem:[%s1787 + $0x90] sm:$0xff]
    %v1807 = vld [vmem:[%s1787 + $0x98] sm:$0xff]
    %v1808 = vld [vmem:[%s1787 + $0xa0] sm:$0xff]
    %v1809 = vld [vmem:[%s1787 + $0xa8] sm:$0xff]
    %v1810 = vld [vmem:[%s1787 + $0xb0] sm:$0xff]
    %v1811 = vld [vmem:[%s1787 + $0xb8] sm:$0xff]
    %v1812 = vld [vmem:[%s1787 + $0xc0] sm:$0xff]
    %v1813 = vld [vmem:[%s1787 + $0xc8] sm:$0xff]
    %v1814 = vld [vmem:[%s1787 + $0xd0] sm:$0xff]
    %v1815 = vld [vmem:[%s1787 + $0xd8] sm:$0xff]
    %v1816 = vld [vmem:[%s1787 + $0xe0] sm:$0xff]
    %v1817 = vld [vmem:[%s1787 + $0xe8] sm:$0xff]
    %v1818 = vld [vmem:[%s1787 + $0xf0] sm:$0xff]
    %v1819 = vld [vmem:[%s1787 + $0xf8] sm:$0xff]
    %v1820 = vld [vmem:[%s1787 + $0x100] sm:$0xff]
    %v1821 = vld [vmem:[%s1787 + $0x108] sm:$0xff]
    %v1822 = vld [vmem:[%s1787 + $0x110] sm:$0xff]
    %v1823 = vld [vmem:[%s1787 + $0x118] sm:$0xff]
    %v1824 = vld [vmem:[%s1787 + $0x120] sm:$0xff]
    %v1825 = vld [vmem:[%s1787 + $0x128] sm:$0xff]
    %v1826 = vld [vmem:[%s1787 + $0x130] sm:$0xff]
    %v1827 = vld [vmem:[%s1787 + $0x138] sm:$0xff]
    %v1828 = vld [vmem:[%s1787 + $0x140] sm:$0xff]
    %v1829 = vld [vmem:[%s1787 + $0x148] sm:$0xff]
    %v1830 = vld [vmem:[%s1787 + $0x150] sm:$0xff]
    %v1831 = vld [vmem:[%s1787 + $0x158] sm:$0xff]
    %v1832 = vld [vmem:[%s1787 + $0x160] sm:$0xff]
    %v1833 = vld [vmem:[%s1787 + $0x168] sm:$0xff]
    %v1834 = vld [vmem:[%s1787 + $0x170] sm:$0xff]
    %v1835 = vld [vmem:[%s1787 + $0x178] sm:$0xff]
    %s1836 = scalar_lea.vmem [#allocation6], 384
    %v1837 = vld [vmem:[%s1836] sm:$0xff]
    %v1838 = vld [vmem:[%s1836 + $0x8] sm:$0xff]
    %v1839 = vld [vmem:[%s1836 + $0x10] sm:$0xff]
    %v1840 = vld [vmem:[%s1836 + $0x18] sm:$0xff]
    %v1841 = vld [vmem:[%s1836 + $0x20] sm:$0xff]
    %v1842 = vld [vmem:[%s1836 + $0x28] sm:$0xff]
    %v1843 = vld [vmem:[%s1836 + $0x30] sm:$0xff]
    %v1844 = vld [vmem:[%s1836 + $0x38] sm:$0xff]
    %v1845 = vld [vmem:[%s1836 + $0x40] sm:$0xff]
    %v1846 = vld [vmem:[%s1836 + $0x48] sm:$0xff]
    %v1847 = vld [vmem:[%s1836 + $0x50] sm:$0xff]
    %v1848 = vld [vmem:[%s1836 + $0x58] sm:$0xff]
    %v1849 = vld [vmem:[%s1836 + $0x60] sm:$0xff]
    %v1850 = vld [vmem:[%s1836 + $0x68] sm:$0xff]
    %v1851 = vld [vmem:[%s1836 + $0x70] sm:$0xff]
    %v1852 = vld [vmem:[%s1836 + $0x78] sm:$0xff]
    %v1853 = vld [vmem:[%s1836 + $0x80] sm:$0xff]
    %v1854 = vld [vmem:[%s1836 + $0x88] sm:$0xff]
    %v1855 = vld [vmem:[%s1836 + $0x90] sm:$0xff]
    %v1856 = vld [vmem:[%s1836 + $0x98] sm:$0xff]
    %v1857 = vld [vmem:[%s1836 + $0xa0] sm:$0xff]
    %v1858 = vld [vmem:[%s1836 + $0xa8] sm:$0xff]
    %v1859 = vld [vmem:[%s1836 + $0xb0] sm:$0xff]
    %v1860 = vld [vmem:[%s1836 + $0xb8] sm:$0xff]
    %v1861 = vld [vmem:[%s1836 + $0xc0] sm:$0xff]
    %v1862 = vld [vmem:[%s1836 + $0xc8] sm:$0xff]
    %v1863 = vld [vmem:[%s1836 + $0xd0] sm:$0xff]
    %v1864 = vld [vmem:[%s1836 + $0xd8] sm:$0xff]
    %v1865 = vld [vmem:[%s1836 + $0xe0] sm:$0xff]
    %v1866 = vld [vmem:[%s1836 + $0xe8] sm:$0xff]
    %v1867 = vld [vmem:[%s1836 + $0xf0] sm:$0xff]
    %v1868 = vld [vmem:[%s1836 + $0xf8] sm:$0xff]
    %v1869 = vld [vmem:[%s1836 + $0x100] sm:$0xff]
    %v1870 = vld [vmem:[%s1836 + $0x108] sm:$0xff]
    %v1871 = vld [vmem:[%s1836 + $0x110] sm:$0xff]
    %v1872 = vld [vmem:[%s1836 + $0x118] sm:$0xff]
    %v1873 = vld [vmem:[%s1836 + $0x120] sm:$0xff]
    %v1874 = vld [vmem:[%s1836 + $0x128] sm:$0xff]
    %v1875 = vld [vmem:[%s1836 + $0x130] sm:$0xff]
    %v1876 = vld [vmem:[%s1836 + $0x138] sm:$0xff]
    %v1877 = vld [vmem:[%s1836 + $0x140] sm:$0xff]
    %v1878 = vld [vmem:[%s1836 + $0x148] sm:$0xff]
    %v1879 = vld [vmem:[%s1836 + $0x150] sm:$0xff]
    %v1880 = vld [vmem:[%s1836 + $0x158] sm:$0xff]
    %v1881 = vld [vmem:[%s1836 + $0x160] sm:$0xff]
    %v1882 = vld [vmem:[%s1836 + $0x168] sm:$0xff]
    %v1883 = vld [vmem:[%s1836 + $0x170] sm:$0xff]
    %v1884 = vld [vmem:[%s1836 + $0x178] sm:$0xff]
    %s1885 = scalar_lea.vmem %s3, 3
    %v1886 = vld [vmem:[%s1885] sm:$0x7]
    %s1887 = scalar_lea.vmem %s4, 3
    %v1888 = vld [vmem:[%s1887] sm:$0x7]
    %v1889 = vld [vmem:[%s5] sm:$0xff]
    %v1890 = vld [vmem:[%s5 + $0x8] sm:$0xff]
    %v1891 = vld [vmem:[%s5 + $0x10] sm:$0xff]
    %v1892 = vld [vmem:[%s5 + $0x18] sm:$0xff]
    %v1893 = vld [vmem:[%s5 + $0x20] sm:$0xff]
    %v1894 = vld [vmem:[%s5 + $0x28] sm:$0xff]
    %v1895 = vld [vmem:[%s5 + $0x30] sm:$0xff]
    %v1896 = vld [vmem:[%s5 + $0x38] sm:$0xff]
    %v1898 = vlaneseq
    %v1899 = vshrl.u32 %v1898, 7
    %v1900 = vsub.s32 0, %v1899
    %v1901 = vrot.slane %v1886, %v1900
    %v1902 = vlaneseq
    %v1903 = vshrl.u32 %v1902, 7
    %v1904 = vsub.s32 1, %v1903
    %v1905 = vrot.slane %v1886, %v1904
    %v1906 = vlaneseq
    %v1907 = vshrl.u32 %v1906, 7
    %v1908 = vsub.s32 2, %v1907
    %v1909 = vrot.slane %v1886, %v1908
    %1913 = vmatprep.subr.mxu0 %v1789
    %1914 = vmatpush1.msra.mxu0 %v1788
    %1915 = vmatprep.subr.mxu0 %v1792
    %1916 = vmatpush1.msra.mxu0 %v1791
    %1917 = vmatprep.subr.mxu0 %v1795
    %1918 = vmatpush1.msra.mxu0 %v1794
    %1919 = vmatprep.subr.mxu0 %v1798
    %1920 = vmatpush1.msra.mxu0 %v1797
    %1921 = vmatprep.subr.mxu0 %v1801
    %1922 = vmatpush1.msra.mxu0 %v1800
    %1923 = vmatprep.subr.mxu0 %v1804
    %1924 = vmatpush1.msra.mxu0 %v1803
    %1925 = vmatprep.subr.mxu0 %v1807
    %1926 = vmatpush1.msra.mxu0 %v1806
    %1927 = vmatprep.subr.mxu0 %v1810
    %1928 = vmatpush1.msra.mxu0 %v1809
    %1929 = vmatprep.subr.mxu0 %v1813
    %1930 = vmatpush1.msra.mxu0 %v1812
    %1931 = vmatprep.subr.mxu0 %v1816
    %1932 = vmatpush1.msra.mxu0 %v1815
    %1933 = vmatprep.subr.mxu0 %v1819
    %1934 = vmatpush1.msra.mxu0 %v1818
    %1935 = vmatprep.subr.mxu0 %v1822
    %1936 = vmatpush1.msra.mxu0 %v1821
    %1937 = vmatprep.subr.mxu0 %v1825
    %1938 = vmatpush1.msra.mxu0 %v1824
    %1939 = vmatprep.subr.mxu0 %v1828
    %1940 = vmatpush1.msra.mxu0 %v1827
    %1941 = vmatprep.subr.mxu0 %v1831
    %1942 = vmatpush1.msra.mxu0 %v1830
    %1943 = vmatprep.subr.mxu0 %v1834
    %1944 = vmatpush1.msra.mxu0 %v1833
    %1945 = vmatprep.subr.mxu0 0.0
    %1946 = vmatpush1.msra.mxu0 0.0
    %1947 = vmatprep.subr.mxu0 0.0
    %1948 = vmatpush1.msra.mxu0 0.0
    %1949 = vmatprep.subr.mxu0 0.0
    %1950 = vmatpush1.msra.mxu0 0.0
    %1951 = vmatprep.subr.mxu0 0.0
    %1952 = vmatpush1.msra.mxu0 0.0
    %1953 = vmatprep.subr.mxu0 0.0
    %1954 = vmatpush1.msra.mxu0 0.0
    %1955 = vmatprep.subr.mxu0 0.0
    %1956 = vmatpush1.msra.mxu0 0.0
    %1957 = vmatprep.subr.mxu0 0.0
    %1958 = vmatpush1.msra.mxu0 0.0
    %1959 = vmatprep.subr.mxu0 0.0
    %1960 = vmatpush1.msra.mxu0 0.0
    %1961 = vmatprep.subr.mxu0 0.0
    %1962 = vmatpush1.msra.mxu0 0.0
    %1963 = vmatprep.subr.mxu0 0.0
    %1964 = vmatpush1.msra.mxu0 0.0
    %1965 = vmatprep.subr.mxu0 0.0
    %1966 = vmatpush1.msra.mxu0 0.0
    %1967 = vmatprep.subr.mxu0 0.0
    %1968 = vmatpush1.msra.mxu0 0.0
    %1969 = vmatprep.subr.mxu0 0.0
    %1970 = vmatpush1.msra.mxu0 0.0
    %1971 = vmatprep.subr.mxu0 0.0
    %1972 = vmatpush1.msra.mxu0 0.0
    %1973 = vmatprep.subr.mxu0 0.0
    %1974 = vmatpush1.msra.mxu0 0.0
    %1975 = vmatprep.subr.mxu0 0.0
    %1976 = vmatpush1.msra.mxu0 0.0
    %1977 = vmatprep.mubr.f32.mxu0 0.0
    %1978 = vmatmul.mubr.f32.gmra.mrb[0].mxu0 %v1889
    %v1979 = vpop.f32.mrb[0].mxu0
    %v1980 = vadd.f32 %v1901, %v1979
    %v1981 = vpop.f32.mrb[0].mxu0
    %v1982 = vadd.f32 %v1905, %v1981
    %1983 = vmatprep.mubr.f32.mxu0 0.0
    %1984 = vmatmul.mubr.f32.gmra.mrb[0].mxu0 %v1890
    %v1985 = vpop.f32.mrb[0].mxu0
    %v1986 = vadd.f32 %v1901, %v1985
    %v1987 = vpop.f32.mrb[0].mxu0
    %v1988 = vadd.f32 %v1905, %v1987
    %1989 = vmatprep.mubr.f32.mxu0 0.0
    %1990 = vmatmul.mubr.f32.gmra.mrb[0].mxu0 %v1891
    %v1991 = vpop.f32.mrb[0].mxu0
    %v1992 = vadd.f32 %v1901, %v1991
    %v1993 = vpop.f32.mrb[0].mxu0
    %v1994 = vadd.f32 %v1905, %v1993
    %1995 = vmatprep.mubr.f32.mxu0 0.0
    %1996 = vmatmul.mubr.f32.gmra.mrb[0].mxu0 %v1892
    %v1997 = vpop.f32.mrb[0].mxu0
    %v1998 = vadd.f32 %v1901, %v1997
    %v1999 = vpop.f32.mrb[0].mxu0
    %v2000 = vadd.f32 %v1905, %v1999
    %2001 = vmatprep.mubr.f32.mxu0 0.0
    %2002 = vmatmul.mubr.f32.gmra.mrb[0].mxu0 %v1893
    %v2003 = vpop.f32.mrb[0].mxu0
    %v2004 = vadd.f32 %v1901, %v2003
    %v2005 = vpop.f32.mrb[0].mxu0
    %v2006 = vadd.f32 %v1905, %v2005
    %2007 = vmatprep.mubr.f32.mxu0 0.0
    %2008 = vmatmul.mubr.f32.gmra.mrb[0].mxu0 %v1894
    %v2009 = vpop.f32.mrb[0].mxu0
    %v2010 = vadd.f32 %v1901, %v2009
    %v2011 = vpop.f32.mrb[0].mxu0
    %v2012 = vadd.f32 %v1905, %v2011
    %2013 = vmatprep.mubr.f32.mxu0 0.0
    %2014 = vmatmul.mubr.f32.gmra.mrb[0].mxu0 %v1895
    %v2015 = vpop.f32.mrb[0].mxu0
    %v2016 = vadd.f32 %v1901, %v2015
    %v2017 = vpop.f32.mrb[0].mxu0
    %v2018 = vadd.f32 %v1905, %v2017
    %2019 = vmatprep.mubr.f32.mxu0 0.0
    %2020 = vmatmul.mubr.f32.gmra.mrb[0].mxu0 %v1896
    %v2021 = vpop.f32.mrb[0].mxu0
    %v2022 = vadd.f32 %v1901, %v2021
    %v2023 = vpop.f32.mrb[0].mxu0
    %v2024 = vadd.f32 %v1905, %v2023
    %2025 = vdwg.mxu0
    %2026 = vmatprep.subr.mxu0 0.0
    %2027 = vmatpush1.msra.mxu0 %v1790
    %2028 = vmatprep.subr.mxu0 0.0
    %2029 = vmatpush1.msra.mxu0 %v1793
    %2030 = vmatprep.subr.mxu0 0.0
    %2031 = vmatpush1.msra.mxu0 %v1796
    %2032 = vmatprep.subr.mxu0 0.0
    %2033 = vmatpush1.msra.mxu0 %v1799
    %2034 = vmatprep.subr.mxu0 0.0
    %2035 = vmatpush1.msra.mxu0 %v1802
    %2036 = vmatprep.subr.mxu0 0.0
    %2037 = vmatpush1.msra.mxu0 %v1805
    %2038 = vmatprep.subr.mxu0 0.0
    %2039 = vmatpush1.msra.mxu0 %v1808
    %2040 = vmatprep.subr.mxu0 0.0
    %2041 = vmatpush1.msra.mxu0 %v1811
    %2042 = vmatprep.subr.mxu0 0.0
    %2043 = vmatpush1.msra.mxu0 %v1814
    %2044 = vmatprep.subr.mxu0 0.0
    %2045 = vmatpush1.msra.mxu0 %v1817
    %2046 = vmatprep.subr.mxu0 0.0
    %2047 = vmatpush1.msra.mxu0 %v1820
    %2048 = vmatprep.subr.mxu0 0.0
    %2049 = vmatpush1.msra.mxu0 %v1823
    %2050 = vmatprep.subr.mxu0 0.0
    %2051 = vmatpush1.msra.mxu0 %v1826
    %2052 = vmatprep.subr.mxu0 0.0
    %2053 = vmatpush1.msra.mxu0 %v1829
    %2054 = vmatprep.subr.mxu0 0.0
    %2055 = vmatpush1.msra.mxu0 %v1832
    %2056 = vmatprep.subr.mxu0 0.0
    %2057 = vmatpush1.msra.mxu0 %v1835
    %2058 = vmatprep.subr.mxu0 0.0
    %2059 = vmatpush1.msra.mxu0 0.0
    %2060 = vmatprep.subr.mxu0 0.0
    %2061 = vmatpush1.msra.mxu0 0.0
    %2062 = vmatprep.subr.mxu0 0.0
    %2063 = vmatpush1.msra.mxu0 0.0
    %2064 = vmatprep.subr.mxu0 0.0
    %2065 = vmatpush1.msra.mxu0 0.0
    %2066 = vmatprep.subr.mxu0 0.0
    %2067 = vmatpush1.msra.mxu0 0.0
    %2068 = vmatprep.subr.mxu0 0.0
    %2069 = vmatpush1.msra.mxu0 0.0
    %2070 = vmatprep.subr.mxu0 0.0
    %2071 = vmatpush1.msra.mxu0 0.0
    %2072 = vmatprep.subr.mxu0 0.0
    %2073 = vmatpush1.msra.mxu0 0.0
    %2074 = vmatprep.subr.mxu0 0.0
    %2075 = vmatpush1.msra.mxu0 0.0
    %2076 = vmatprep.subr.mxu0 0.0
    %2077 = vmatpush1.msra.mxu0 0.0
    %2078 = vmatprep.subr.mxu0 0.0
    %2079 = vmatpush1.msra.mxu0 0.0
    %2080 = vmatprep.subr.mxu0 0.0
    %2081 = vmatpush1.msra.mxu0 0.0
    %2082 = vmatprep.subr.mxu0 0.0
    %2083 = vmatpush1.msra.mxu0 0.0
    %2084 = vmatprep.subr.mxu0 0.0
    %2085 = vmatpush1.msra.mxu0 0.0
    %2086 = vmatprep.subr.mxu0 0.0
    %2087 = vmatpush1.msra.mxu0 0.0
    %2088 = vmatprep.subr.mxu0 0.0
    %2089 = vmatpush1.msra.mxu0 0.0
    %2090 = vmatprep.mubr.f32.mxu0 0.0
    %2091 = vmatmul.mubr.f32.gmra.mrb[0].mxu0 %v1889
    %v2092 = vpop.f32.mrb[0].mxu0
    %v2093 = vadd.f32 %v1909, %v2092
    %v2094 = vpop.f32.mrb[0].mxu0
    %2095 = vmatprep.mubr.f32.mxu0 0.0
    %2096 = vmatmul.mubr.f32.gmra.mrb[0].mxu0 %v1890
    %v2097 = vpop.f32.mrb[0].mxu0
    %v2098 = vadd.f32 %v1909, %v2097
    %v2099 = vpop.f32.mrb[0].mxu0
    %2100 = vmatprep.mubr.f32.mxu0 0.0
    %2101 = vmatmul.mubr.f32.gmra.mrb[0].mxu0 %v1891
    %v2102 = vpop.f32.mrb[0].mxu0
    %v2103 = vadd.f32 %v1909, %v2102
    %v2104 = vpop.f32.mrb[0].mxu0
    %2105 = vmatprep.mubr.f32.mxu0 0.0
    %2106 = vmatmul.mubr.f32.gmra.mrb[0].mxu0 %v1892
    %v2107 = vpop.f32.mrb[0].mxu0
    %v2108 = vadd.f32 %v1909, %v2107
    %v2109 = vpop.f32.mrb[0].mxu0
    %2110 = vmatprep.mubr.f32.mxu0 0.0
    %2111 = vmatmul.mubr.f32.gmra.mrb[0].mxu0 %v1893
    %v2112 = vpop.f32.mrb[0].mxu0
    %v2113 = vadd.f32 %v1909, %v2112
    %v2114 = vpop.f32.mrb[0].mxu0
    %2115 = vmatprep.mubr.f32.mxu0 0.0
    %2116 = vmatmul.mubr.f32.gmra.mrb[0].mxu0 %v1894
    %v2117 = vpop.f32.mrb[0].mxu0
    %v2118 = vadd.f32 %v1909, %v2117
    %v2119 = vpop.f32.mrb[0].mxu0
    %2120 = vmatprep.mubr.f32.mxu0 0.0
    %2121 = vmatmul.mubr.f32.gmra.mrb[0].mxu0 %v1895
    %v2122 = vpop.f32.mrb[0].mxu0
    %v2123 = vadd.f32 %v1909, %v2122
    %v2124 = vpop.f32.mrb[0].mxu0
    %2125 = vmatprep.mubr.f32.mxu0 0.0
    %2126 = vmatmul.mubr.f32.gmra.mrb[0].mxu0 %v1896
    %v2127 = vpop.f32.mrb[0].mxu0
    %v2128 = vadd.f32 %v1909, %v2127
    %v2129 = vpop.f32.mrb[0].mxu0
    %2130 = vdwg.mxu0
    %2131 = vst [vmem:[#allocation3] sm:$0xff] %v1980
    %2132 = vst [vmem:[#allocation3 + $0x8] sm:$0xff] %v1982
    %2133 = vst [vmem:[#allocation3 + $0x10] sm:$0xff] %v2093
    %2134 = vst [vmem:[#allocation3 + $0x18] sm:$0xff] %v1986
    %2135 = vst [vmem:[#allocation3 + $0x20] sm:$0xff] %v1988
    %2136 = vst [vmem:[#allocation3 + $0x28] sm:$0xff] %v2098
    %2137 = vst [vmem:[#allocation3 + $0x30] sm:$0xff] %v1992
    %2138 = vst [vmem:[#allocation3 + $0x38] sm:$0xff] %v1994
    %2139 = vst [vmem:[#allocation3 + $0x40] sm:$0xff] %v2103
    %2140 = vst [vmem:[#allocation3 + $0x48] sm:$0xff] %v1998
    %2141 = vst [vmem:[#allocation3 + $0x50] sm:$0xff] %v2000
    %2142 = vst [vmem:[#allocation3 + $0x58] sm:$0xff] %v2108
    %2143 = vst [vmem:[#allocation3 + $0x60] sm:$0xff] %v2004
    %2144 = vst [vmem:[#allocation3 + $0x68] sm:$0xff] %v2006
    %2145 = vst [vmem:[#allocation3 + $0x70] sm:$0xff] %v2113
    %2146 = vst [vmem:[#allocation3 + $0x78] sm:$0xff] %v2010
    %2147 = vst [vmem:[#allocation3 + $0x80] sm:$0xff] %v2012
    %2148 = vst [vmem:[#allocation3 + $0x88] sm:$0xff] %v2118
    %2149 = vst [vmem:[#allocation3 + $0x90] sm:$0xff] %v2016
    %2150 = vst [vmem:[#allocation3 + $0x98] sm:$0xff] %v2018
    %2151 = vst [vmem:[#allocation3 + $0xa0] sm:$0xff] %v2123
    %2152 = vst [vmem:[#allocation3 + $0xa8] sm:$0xff] %v2022
    %2153 = vst [vmem:[#allocation3 + $0xb0] sm:$0xff] %v2024
    %2154 = vst [vmem:[#allocation3 + $0xb8] sm:$0xff] %v2128
    %2155 = vst [vmem:[#allocation2] sm:$0xff] 0.0
    %v2156 = vld [vmem:[#allocation2] sm:$0xff]
    %v2157 = vld [vmem:[#allocation3] sm:$0xff]
    %v2158 = vld [vmem:[#allocation3 + $0x8] sm:$0xff]
    %v2159 = vld [vmem:[#allocation3 + $0x10] sm:$0xff]
    %v2161 = vlaneseq
    %v2162 = vshrl.u32 %v2161, 7
    %v2163 = vsub.s32 0, %v2162
    %v2164 = vrot.slane %v1888, %v2163
    %v2165 = vlaneseq
    %v2166 = vshrl.u32 %v2165, 7
    %v2167 = vsub.s32 1, %v2166
    %v2168 = vrot.slane %v1888, %v2167
    %v2169 = vlaneseq
    %v2170 = vshrl.u32 %v2169, 7
    %v2171 = vsub.s32 2, %v2170
    %v2172 = vrot.slane %v1888, %v2171
    %2176 = vmatprep.subr.mxu0 %v1838
    %2177 = vmatpush1.msra.mxu0 %v1837
    %2178 = vmatprep.subr.mxu0 %v1841
    %2179 = vmatpush1.msra.mxu0 %v1840
    %2180 = vmatprep.subr.mxu0 %v1844
    %2181 = vmatpush1.msra.mxu0 %v1843
    %2182 = vmatprep.subr.mxu0 %v1847
    %2183 = vmatpush1.msra.mxu0 %v1846
    %2184 = vmatprep.subr.mxu0 %v1850
    %2185 = vmatpush1.msra.mxu0 %v1849
    %2186 = vmatprep.subr.mxu0 %v1853
    %2187 = vmatpush1.msra.mxu0 %v1852
    %2188 = vmatprep.subr.mxu0 %v1856
    %2189 = vmatpush1.msra.mxu0 %v1855
    %2190 = vmatprep.subr.mxu0 %v1859
    %2191 = vmatpush1.msra.mxu0 %v1858
    %2192 = vmatprep.subr.mxu0 %v1862
    %2193 = vmatpush1.msra.mxu0 %v1861
    %2194 = vmatprep.subr.mxu0 %v1865
    %2195 = vmatpush1.msra.mxu0 %v1864
    %2196 = vmatprep.subr.mxu0 %v1868
    %2197 = vmatpush1.msra.mxu0 %v1867
    %2198 = vmatprep.subr.mxu0 %v1871
    %2199 = vmatpush1.msra.mxu0 %v1870
    %2200 = vmatprep.subr.mxu0 %v1874
    %2201 = vmatpush1.msra.mxu0 %v1873
    %2202 = vmatprep.subr.mxu0 %v1877
    %2203 = vmatpush1.msra.mxu0 %v1876
    %2204 = vmatprep.subr.mxu0 %v1880
    %2205 = vmatpush1.msra.mxu0 %v1879
    %2206 = vmatprep.subr.mxu0 %v1883
    %2207 = vmatpush1.msra.mxu0 %v1882
    %2208 = vmatprep.subr.mxu0 0.0
    %2209 = vmatpush1.msra.mxu0 0.0
    %2210 = vmatprep.subr.mxu0 0.0
    %2211 = vmatpush1.msra.mxu0 0.0
    %2212 = vmatprep.subr.mxu0 0.0
    %2213 = vmatpush1.msra.mxu0 0.0
    %2214 = vmatprep.subr.mxu0 0.0
    %2215 = vmatpush1.msra.mxu0 0.0
    %2216 = vmatprep.subr.mxu0 0.0
    %2217 = vmatpush1.msra.mxu0 0.0
    %2218 = vmatprep.subr.mxu0 0.0
    %2219 = vmatpush1.msra.mxu0 0.0
    %2220 = vmatprep.subr.mxu0 0.0
    %2221 = vmatpush1.msra.mxu0 0.0
    %2222 = vmatprep.subr.mxu0 0.0
    %2223 = vmatpush1.msra.mxu0 0.0
    %2224 = vmatprep.subr.mxu0 0.0
    %2225 = vmatpush1.msra.mxu0 0.0
    %2226 = vmatprep.subr.mxu0 0.0
    %2227 = vmatpush1.msra.mxu0 0.0
    %2228 = vmatprep.subr.mxu0 0.0
    %2229 = vmatpush1.msra.mxu0 0.0
    %2230 = vmatprep.subr.mxu0 0.0
    %2231 = vmatpush1.msra.mxu0 0.0
    %2232 = vmatprep.subr.mxu0 0.0
    %2233 = vmatpush1.msra.mxu0 0.0
    %2234 = vmatprep.subr.mxu0 0.0
    %2235 = vmatpush1.msra.mxu0 0.0
    %2236 = vmatprep.subr.mxu0 0.0
    %2237 = vmatpush1.msra.mxu0 0.0
    %2238 = vmatprep.subr.mxu0 0.0
    %2239 = vmatpush1.msra.mxu0 0.0
    %2240 = vmatprep.mubr.f32.mxu0 0.0
    %2241 = vmatmul.mubr.f32.gmra.mrb[0].mxu0 %v2156
    %v2242 = vpop.f32.mrb[0].mxu0
    %v2243 = vadd.f32 %v2164, %v2242
    %v2244 = vpop.f32.mrb[0].mxu0
    %v2245 = vadd.f32 %v2168, %v2244
    %2246 = vdwg.mxu0
    %2247 = vmatprep.subr.mxu0 0.0
    %2248 = vmatpush1.msra.mxu0 %v1839
    %2249 = vmatprep.subr.mxu0 0.0
    %2250 = vmatpush1.msra.mxu0 %v1842
    %2251 = vmatprep.subr.mxu0 0.0
    %2252 = vmatpush1.msra.mxu0 %v1845
    %2253 = vmatprep.subr.mxu0 0.0
    %2254 = vmatpush1.msra.mxu0 %v1848
    %2255 = vmatprep.subr.mxu0 0.0
    %2256 = vmatpush1.msra.mxu0 %v1851
    %2257 = vmatprep.subr.mxu0 0.0
    %2258 = vmatpush1.msra.mxu0 %v1854
    %2259 = vmatprep.subr.mxu0 0.0
    %2260 = vmatpush1.msra.mxu0 %v1857
    %2261 = vmatprep.subr.mxu0 0.0
    %2262 = vmatpush1.msra.mxu0 %v1860
    %2263 = vmatprep.subr.mxu0 0.0
    %2264 = vmatpush1.msra.mxu0 %v1863
    %2265 = vmatprep.subr.mxu0 0.0
    %2266 = vmatpush1.msra.mxu0 %v1866
    %2267 = vmatprep.subr.mxu0 0.0
    %2268 = vmatpush1.msra.mxu0 %v1869
    %2269 = vmatprep.subr.mxu0 0.0
    %2270 = vmatpush1.msra.mxu0 %v1872
    %2271 = vmatprep.subr.mxu0 0.0
    %2272 = vmatpush1.msra.mxu0 %v1875
    %2273 = vmatprep.subr.mxu0 0.0
    %2274 = vmatpush1.msra.mxu0 %v1878
    %2275 = vmatprep.subr.mxu0 0.0
    %2276 = vmatpush1.msra.mxu0 %v1881
    %2277 = vmatprep.subr.mxu0 0.0
    %2278 = vmatpush1.msra.mxu0 %v1884
    %2279 = vmatprep.subr.mxu0 0.0
    %2280 = vmatpush1.msra.mxu0 0.0
    %2281 = vmatprep.subr.mxu0 0.0
    %2282 = vmatpush1.msra.mxu0 0.0
    %2283 = vmatprep.subr.mxu0 0.0
    %2284 = vmatpush1.msra.mxu0 0.0
    %2285 = vmatprep.subr.mxu0 0.0
    %2286 = vmatpush1.msra.mxu0 0.0
    %2287 = vmatprep.subr.mxu0 0.0
    %2288 = vmatpush1.msra.mxu0 0.0
    %2289 = vmatprep.subr.mxu0 0.0
    %2290 = vmatpush1.msra.mxu0 0.0
    %2291 = vmatprep.subr.mxu0 0.0
    %2292 = vmatpush1.msra.mxu0 0.0
    %2293 = vmatprep.subr.mxu0 0.0
    %2294 = vmatpush1.msra.mxu0 0.0
    %2295 = vmatprep.subr.mxu0 0.0
    %2296 = vmatpush1.msra.mxu0 0.0
    %2297 = vmatprep.subr.mxu0 0.0
    %2298 = vmatpush1.msra.mxu0 0.0
    %2299 = vmatprep.subr.mxu0 0.0
    %2300 = vmatpush1.msra.mxu0 0.0
    %2301 = vmatprep.subr.mxu0 0.0
    %2302 = vmatpush1.msra.mxu0 0.0
    %2303 = vmatprep.subr.mxu0 0.0
    %2304 = vmatpush1.msra.mxu0 0.0
    %2305 = vmatprep.subr.mxu0 0.0
    %2306 = vmatpush1.msra.mxu0 0.0
    %2307 = vmatprep.subr.mxu0 0.0
    %2308 = vmatpush1.msra.mxu0 0.0
    %2309 = vmatprep.subr.mxu0 0.0
    %2310 = vmatpush1.msra.mxu0 0.0
    %2311 = vmatprep.mubr.f32.mxu0 0.0
    %2312 = vmatmul.mubr.f32.gmra.mrb[0].mxu0 %v2156
    %v2313 = vpop.f32.mrb[0].mxu0
    %v2314 = vadd.f32 %v2172, %v2313
    %v2315 = vpop.f32.mrb[0].mxu0
    %2316 = vdwg.mxu0
    %v2317 = vadd.f32 %v2157, %v2243
    %v2318 = vxor.u32 %v2317, 2147483648
    %v2319 = vmul.f32 %v2318, 1.442695
    %v2320 = vpow.pop %v2319
    %v2321 = vadd.f32 %v2320, 1.0
    %v2322 = vrcp.pop %v2321
    %v2323 = vmul.f32 1.0, %v2322
    %v2324 = vadd.f32 %v2158, %v2245
    %v2325 = vxor.u32 %v2324, 2147483648
    %v2326 = vmul.f32 %v2325, 1.442695
    %v2327 = vpow.pop %v2326
    %v2328 = vadd.f32 %v2327, 1.0
    %v2329 = vrcp.pop %v2328
    %v2330 = vmul.f32 1.0, %v2329
    %v2331 = vmul.f32 %v2323, %v2314
    %v2332 = vadd.f32 %v2159, %v2331
    %v2333 = vtanh.pop %v2332
    %v2334 = vsub.f32 1.0, %v2330
    %v2335 = vmul.f32 %v2334, %v2333
    %v2336 = vmul.f32 %v2330, %v2156
    %v2337 = vadd.f32 %v2335, %v2336
    %2338 = vst [vmem:[#allocation2] sm:$0xff] %v2337
    %2339 = vst [vmem:[%s5] sm:$0xff] %v2337
    %v2340 = vld [vmem:[#allocation2] sm:$0xff]
    %v2341 = vld [vmem:[%s598] sm:$0xff]
    %v2342 = vld [vmem:[%s598 + $0x8] sm:$0xff]
    %v2343 = vld [vmem:[%s598 + $0x10] sm:$0xff]
    %2344 = vmatprep.subr.mxu0 %v1838
    %2345 = vmatpush1.msra.mxu0 %v1837
    %2346 = vmatprep.subr.mxu0 %v1841
    %2347 = vmatpush1.msra.mxu0 %v1840
    %2348 = vmatprep.subr.mxu0 %v1844
    %2349 = vmatpush1.msra.mxu0 %v1843
    %2350 = vmatprep.subr.mxu0 %v1847
    %2351 = vmatpush1.msra.mxu0 %v1846
    %2352 = vmatprep.subr.mxu0 %v1850
    %2353 = vmatpush1.msra.mxu0 %v1849
    %2354 = vmatprep.subr.mxu0 %v1853
    %2355 = vmatpush1.msra.mxu0 %v1852
    %2356 = vmatprep.subr.mxu0 %v1856
    %2357 = vmatpush1.msra.mxu0 %v1855
    %2358 = vmatprep.subr.mxu0 %v1859
    %2359 = vmatpush1.msra.mxu0 %v1858
    %2360 = vmatprep.subr.mxu0 %v1862
    %2361 = vmatpush1.msra.mxu0 %v1861
    %2362 = vmatprep.subr.mxu0 %v1865
    %2363 = vmatpush1.msra.mxu0 %v1864
    %2364 = vmatprep.subr.mxu0 %v1868
    %2365 = vmatpush1.msra.mxu0 %v1867
    %2366 = vmatprep.subr.mxu0 %v1871
    %2367 = vmatpush1.msra.mxu0 %v1870
    %2368 = vmatprep.subr.mxu0 %v1874
    %2369 = vmatpush1.msra.mxu0 %v1873
    %2370 = vmatprep.subr.mxu0 %v1877
    %2371 = vmatpush1.msra.mxu0 %v1876
    %2372 = vmatprep.subr.mxu0 %v1880
    %2373 = vmatpush1.msra.mxu0 %v1879
    %2374 = vmatprep.subr.mxu0 %v1883
    %2375 = vmatpush1.msra.mxu0 %v1882
    %2376 = vmatprep.subr.mxu0 0.0
    %2377 = vmatpush1.msra.mxu0 0.0
    %2378 = vmatprep.subr.mxu0 0.0
    %2379 = vmatpush1.msra.mxu0 0.0
    %2380 = vmatprep.subr.mxu0 0.0
    %2381 = vmatpush1.msra.mxu0 0.0
    %2382 = vmatprep.subr.mxu0 0.0
    %2383 = vmatpush1.msra.mxu0 0.0
    %2384 = vmatprep.subr.mxu0 0.0
    %2385 = vmatpush1.msra.mxu0 0.0
    %2386 = vmatprep.subr.mxu0 0.0
    %2387 = vmatpush1.msra.mxu0 0.0
    %2388 = vmatprep.subr.mxu0 0.0
    %2389 = vmatpush1.msra.mxu0 0.0
    %2390 = vmatprep.subr.mxu0 0.0
    %2391 = vmatpush1.msra.mxu0 0.0
    %2392 = vmatprep.subr.mxu0 0.0
    %2393 = vmatpush1.msra.mxu0 0.0
    %2394 = vmatprep.subr.mxu0 0.0
    %2395 = vmatpush1.msra.mxu0 0.0
    %2396 = vmatprep.subr.mxu0 0.0
    %2397 = vmatpush1.msra.mxu0 0.0
    %2398 = vmatprep.subr.mxu0 0.0
    %2399 = vmatpush1.msra.mxu0 0.0
    %2400 = vmatprep.subr.mxu0 0.0
    %2401 = vmatpush1.msra.mxu0 0.0
    %2402 = vmatprep.subr.mxu0 0.0
    %2403 = vmatpush1.msra.mxu0 0.0
    %2404 = vmatprep.subr.mxu0 0.0
    %2405 = vmatpush1.msra.mxu0 0.0
    %2406 = vmatprep.subr.mxu0 0.0
    %2407 = vmatpush1.msra.mxu0 0.0
    %2408 = vmatprep.mubr.f32.mxu0 0.0
    %2409 = vmatmul.mubr.f32.gmra.mrb[0].mxu0 %v2340
    %v2410 = vpop.f32.mrb[0].mxu0
    %v2411 = vadd.f32 %v2164, %v2410
    %v2412 = vpop.f32.mrb[0].mxu0
    %v2413 = vadd.f32 %v2168, %v2412
    %2414 = vdwg.mxu0
    %2415 = vmatprep.subr.mxu0 0.0
    %2416 = vmatpush1.msra.mxu0 %v1839
    %2417 = vmatprep.subr.mxu0 0.0
    %2418 = vmatpush1.msra.mxu0 %v1842
    %2419 = vmatprep.subr.mxu0 0.0
    %2420 = vmatpush1.msra.mxu0 %v1845
    %2421 = vmatprep.subr.mxu0 0.0
    %2422 = vmatpush1.msra.mxu0 %v1848
    %2423 = vmatprep.subr.mxu0 0.0
    %2424 = vmatpush1.msra.mxu0 %v1851
    %2425 = vmatprep.subr.mxu0 0.0
    %2426 = vmatpush1.msra.mxu0 %v1854
    %2427 = vmatprep.subr.mxu0 0.0
    %2428 = vmatpush1.msra.mxu0 %v1857
    %2429 = vmatprep.subr.mxu0 0.0
    %2430 = vmatpush1.msra.mxu0 %v1860
    %2431 = vmatprep.subr.mxu0 0.0
    %2432 = vmatpush1.msra.mxu0 %v1863
    %2433 = vmatprep.subr.mxu0 0.0
    %2434 = vmatpush1.msra.mxu0 %v1866
    %2435 = vmatprep.subr.mxu0 0.0
    %2436 = vmatpush1.msra.mxu0 %v1869
    %2437 = vmatprep.subr.mxu0 0.0
    %2438 = vmatpush1.msra.mxu0 %v1872
    %2439 = vmatprep.subr.mxu0 0.0
    %2440 = vmatpush1.msra.mxu0 %v1875
    %2441 = vmatprep.subr.mxu0 0.0
    %2442 = vmatpush1.msra.mxu0 %v1878
    %2443 = vmatprep.subr.mxu0 0.0
    %2444 = vmatpush1.msra.mxu0 %v1881
    %2445 = vmatprep.subr.mxu0 0.0
    %2446 = vmatpush1.msra.mxu0 %v1884
    %2447 = vmatprep.subr.mxu0 0.0
    %2448 = vmatpush1.msra.mxu0 0.0
    %2449 = vmatprep.subr.mxu0 0.0
    %2450 = vmatpush1.msra.mxu0 0.0
    %2451 = vmatprep.subr.mxu0 0.0
    %2452 = vmatpush1.msra.mxu0 0.0
    %2453 = vmatprep.subr.mxu0 0.0
    %2454 = vmatpush1.msra.mxu0 0.0
    %2455 = vmatprep.subr.mxu0 0.0
    %2456 = vmatpush1.msra.mxu0 0.0
    %2457 = vmatprep.subr.mxu0 0.0
    %2458 = vmatpush1.msra.mxu0 0.0
    %2459 = vmatprep.subr.mxu0 0.0
    %2460 = vmatpush1.msra.mxu0 0.0
    %2461 = vmatprep.subr.mxu0 0.0
    %2462 = vmatpush1.msra.mxu0 0.0
    %2463 = vmatprep.subr.mxu0 0.0
    %2464 = vmatpush1.msra.mxu0 0.0
    %2465 = vmatprep.subr.mxu0 0.0
    %2466 = vmatpush1.msra.mxu0 0.0
    %2467 = vmatprep.subr.mxu0 0.0
    %2468 = vmatpush1.msra.mxu0 0.0
    %2469 = vmatprep.subr.mxu0 0.0
    %2470 = vmatpush1.msra.mxu0 0.0
    %2471 = vmatprep.subr.mxu0 0.0
    %2472 = vmatpush1.msra.mxu0 0.0
    %2473 = vmatprep.subr.mxu0 0.0
    %2474 = vmatpush1.msra.mxu0 0.0
    %2475 = vmatprep.subr.mxu0 0.0
    %2476 = vmatpush1.msra.mxu0 0.0
    %2477 = vmatprep.subr.mxu0 0.0
    %2478 = vmatpush1.msra.mxu0 0.0
    %2479 = vmatprep.mubr.f32.mxu0 0.0
    %2480 = vmatmul.mubr.f32.gmra.mrb[0].mxu0 %v2340
    %v2481 = vpop.f32.mrb[0].mxu0
    %v2482 = vadd.f32 %v2172, %v2481
    %v2483 = vpop.f32.mrb[0].mxu0
    %2484 = vdwg.mxu0
    %v2485 = vadd.f32 %v2341, %v2411
    %v2486 = vxor.u32 %v2485, 2147483648
    %v2487 = vmul.f32 %v2486, 1.442695
    %v2488 = vpow.pop %v2487
    %v2489 = vadd.f32 %v2488, 1.0
    %v2490 = vrcp.pop %v2489
    %v2491 = vmul.f32 1.0, %v2490
    %v2492 = vadd.f32 %v2342, %v2413
    %v2493 = vxor.u32 %v2492, 2147483648
    %v2494 = vmul.f32 %v2493, 1.442695
    %v2495 = vpow.pop %v2494
    %v2496 = vadd.f32 %v2495, 1.0
    %v2497 = vrcp.pop %v2496
    %v2498 = vmul.f32 1.0, %v2497
    %v2499 = vmul.f32 %v2491, %v2482
    %v2500 = vadd.f32 %v2343, %v2499
    %v2501 = vtanh.pop %v2500
    %v2502 = vsub.f32 1.0, %v2498
    %v2503 = vmul.f32 %v2502, %v2501
    %v2504 = vmul.f32 %v2498, %v2340
    %v2505 = vadd.f32 %v2503, %v2504
    %2506 = vst [vmem:[#allocation2] sm:$0xff] %v2505
    %2507 = vst [vmem:[%s765] sm:$0xff] %v2505
    %v2508 = vld [vmem:[#allocation2] sm:$0xff]
    %v2509 = vld [vmem:[%s768] sm:$0xff]
    %v2510 = vld [vmem:[%s768 + $0x8] sm:$0xff]
    %v2511 = vld [vmem:[%s768 + $0x10] sm:$0xff]
    %2512 = vmatprep.subr.mxu0 %v1838
    %2513 = vmatpush1.msra.mxu0 %v1837
    %2514 = vmatprep.subr.mxu0 %v1841
    %2515 = vmatpush1.msra.mxu0 %v1840
    %2516 = vmatprep.subr.mxu0 %v1844
    %2517 = vmatpush1.msra.mxu0 %v1843
    %2518 = vmatprep.subr.mxu0 %v1847
    %2519 = vmatpush1.msra.mxu0 %v1846
    %2520 = vmatprep.subr.mxu0 %v1850
    %2521 = vmatpush1.msra.mxu0 %v1849
    %2522 = vmatprep.subr.mxu0 %v1853
    %2523 = vmatpush1.msra.mxu0 %v1852
    %2524 = vmatprep.subr.mxu0 %v1856
    %2525 = vmatpush1.msra.mxu0 %v1855
    %2526 = vmatprep.subr.mxu0 %v1859
    %2527 = vmatpush1.msra.mxu0 %v1858
    %2528 = vmatprep.subr.mxu0 %v1862
    %2529 = vmatpush1.msra.mxu0 %v1861
    %2530 = vmatprep.subr.mxu0 %v1865
    %2531 = vmatpush1.msra.mxu0 %v1864
    %2532 = vmatprep.subr.mxu0 %v1868
    %2533 = vmatpush1.msra.mxu0 %v1867
    %2534 = vmatprep.subr.mxu0 %v1871
    %2535 = vmatpush1.msra.mxu0 %v1870
    %2536 = vmatprep.subr.mxu0 %v1874
    %2537 = vmatpush1.msra.mxu0 %v1873
    %2538 = vmatprep.subr.mxu0 %v1877
    %2539 = vmatpush1.msra.mxu0 %v1876
    %2540 = vmatprep.subr.mxu0 %v1880
    %2541 = vmatpush1.msra.mxu0 %v1879
    %2542 = vmatprep.subr.mxu0 %v1883
    %2543 = vmatpush1.msra.mxu0 %v1882
    %2544 = vmatprep.subr.mxu0 0.0
    %2545 = vmatpush1.msra.mxu0 0.0
    %2546 = vmatprep.subr.mxu0 0.0
    %2547 = vmatpush1.msra.mxu0 0.0
    %2548 = vmatprep.subr.mxu0 0.0
    %2549 = vmatpush1.msra.mxu0 0.0
    %2550 = vmatprep.subr.mxu0 0.0
    %2551 = vmatpush1.msra.mxu0 0.0
    %2552 = vmatprep.subr.mxu0 0.0
    %2553 = vmatpush1.msra.mxu0 0.0
    %2554 = vmatprep.subr.mxu0 0.0
    %2555 = vmatpush1.msra.mxu0 0.0
    %2556 = vmatprep.subr.mxu0 0.0
    %2557 = vmatpush1.msra.mxu0 0.0
    %2558 = vmatprep.subr.mxu0 0.0
    %2559 = vmatpush1.msra.mxu0 0.0
    %2560 = vmatprep.subr.mxu0 0.0
    %2561 = vmatpush1.msra.mxu0 0.0
    %2562 = vmatprep.subr.mxu0 0.0
    %2563 = vmatpush1.msra.mxu0 0.0
    %2564 = vmatprep.subr.mxu0 0.0
    %2565 = vmatpush1.msra.mxu0 0.0
    %2566 = vmatprep.subr.mxu0 0.0
    %2567 = vmatpush1.msra.mxu0 0.0
    %2568 = vmatprep.subr.mxu0 0.0
    %2569 = vmatpush1.msra.mxu0 0.0
    %2570 = vmatprep.subr.mxu0 0.0
    %2571 = vmatpush1.msra.mxu0 0.0
    %2572 = vmatprep.subr.mxu0 0.0
    %2573 = vmatpush1.msra.mxu0 0.0
    %2574 = vmatprep.subr.mxu0 0.0
    %2575 = vmatpush1.msra.mxu0 0.0
    %2576 = vmatprep.mubr.f32.mxu0 0.0
    %2577 = vmatmul.mubr.f32.gmra.mrb[0].mxu0 %v2508
    %v2578 = vpop.f32.mrb[0].mxu0
    %v2579 = vadd.f32 %v2164, %v2578
    %v2580 = vpop.f32.mrb[0].mxu0
    %v2581 = vadd.f32 %v2168, %v2580
    %2582 = vdwg.mxu0
    %2583 = vmatprep.subr.mxu0 0.0
    %2584 = vmatpush1.msra.mxu0 %v1839
    %2585 = vmatprep.subr.mxu0 0.0
    %2586 = vmatpush1.msra.mxu0 %v1842
    %2587 = vmatprep.subr.mxu0 0.0
    %2588 = vmatpush1.msra.mxu0 %v1845
    %2589 = vmatprep.subr.mxu0 0.0
    %2590 = vmatpush1.msra.mxu0 %v1848
    %2591 = vmatprep.subr.mxu0 0.0
    %2592 = vmatpush1.msra.mxu0 %v1851
    %2593 = vmatprep.subr.mxu0 0.0
    %2594 = vmatpush1.msra.mxu0 %v1854
    %2595 = vmatprep.subr.mxu0 0.0
    %2596 = vmatpush1.msra.mxu0 %v1857
    %2597 = vmatprep.subr.mxu0 0.0
    %2598 = vmatpush1.msra.mxu0 %v1860
    %2599 = vmatprep.subr.mxu0 0.0
    %2600 = vmatpush1.msra.mxu0 %v1863
    %2601 = vmatprep.subr.mxu0 0.0
    %2602 = vmatpush1.msra.mxu0 %v1866
    %2603 = vmatprep.subr.mxu0 0.0
    %2604 = vmatpush1.msra.mxu0 %v1869
    %2605 = vmatprep.subr.mxu0 0.0
    %2606 = vmatpush1.msra.mxu0 %v1872
    %2607 = vmatprep.subr.mxu0 0.0
    %2608 = vmatpush1.msra.mxu0 %v1875
    %2609 = vmatprep.subr.mxu0 0.0
    %2610 = vmatpush1.msra.mxu0 %v1878
    %2611 = vmatprep.subr.mxu0 0.0
    %2612 = vmatpush1.msra.mxu0 %v1881
    %2613 = vmatprep.subr.mxu0 0.0
    %2614 = vmatpush1.msra.mxu0 %v1884
    %2615 = vmatprep.subr.mxu0 0.0
    %2616 = vmatpush1.msra.mxu0 0.0
    %2617 = vmatprep.subr.mxu0 0.0
    %2618 = vmatpush1.msra.mxu0 0.0
    %2619 = vmatprep.subr.mxu0 0.0
    %2620 = vmatpush1.msra.mxu0 0.0
    %2621 = vmatprep.subr.mxu0 0.0
    %2622 = vmatpush1.msra.mxu0 0.0
    %2623 = vmatprep.subr.mxu0 0.0
    %2624 = vmatpush1.msra.mxu0 0.0
    %2625 = vmatprep.subr.mxu0 0.0
    %2626 = vmatpush1.msra.mxu0 0.0
    %2627 = vmatprep.subr.mxu0 0.0
    %2628 = vmatpush1.msra.mxu0 0.0
    %2629 = vmatprep.subr.mxu0 0.0
    %2630 = vmatpush1.msra.mxu0 0.0
    %2631 = vmatprep.subr.mxu0 0.0
    %2632 = vmatpush1.msra.mxu0 0.0
    %2633 = vmatprep.subr.mxu0 0.0
    %2634 = vmatpush1.msra.mxu0 0.0
    %2635 = vmatprep.subr.mxu0 0.0
    %2636 = vmatpush1.msra.mxu0 0.0
    %2637 = vmatprep.subr.mxu0 0.0
    %2638 = vmatpush1.msra.mxu0 0.0
    %2639 = vmatprep.subr.mxu0 0.0
    %2640 = vmatpush1.msra.mxu0 0.0
    %2641 = vmatprep.subr.mxu0 0.0
    %2642 = vmatpush1.msra.mxu0 0.0
    %2643 = vmatprep.subr.mxu0 0.0
    %2644 = vmatpush1.msra.mxu0 0.0
    %2645 = vmatprep.subr.mxu0 0.0
    %2646 = vmatpush1.msra.mxu0 0.0
    %2647 = vmatprep.mubr.f32.mxu0 0.0
    %2648 = vmatmul.mubr.f32.gmra.mrb[0].mxu0 %v2508
    %v2649 = vpop.f32.mrb[0].mxu0
    %v2650 = vadd.f32 %v2172, %v2649
    %v2651 = vpop.f32.mrb[0].mxu0
    %2652 = vdwg.mxu0
    %v2653 = vadd.f32 %v2509, %v2579
    %v2654 = vxor.u32 %v2653, 2147483648
    %v2655 = vmul.f32 %v2654, 1.442695
    %v2656 = vpow.pop %v2655
    %v2657 = vadd.f32 %v2656, 1.0
    %v2658 = vrcp.pop %v2657
    %v2659 = vmul.f32 1.0, %v2658
    %v2660 = vadd.f32 %v2510, %v2581
    %v2661 = vxor.u32 %v2660, 2147483648
    %v2662 = vmul.f32 %v2661, 1.442695
    %v2663 = vpow.pop %v2662
    %v2664 = vadd.f32 %v2663, 1.0
    %v2665 = vrcp.pop %v2664
    %v2666 = vmul.f32 1.0, %v2665
    %v2667 = vmul.f32 %v2659, %v2650
    %v2668 = vadd.f32 %v2511, %v2667
    %v2669 = vtanh.pop %v2668
    %v2670 = vsub.f32 1.0, %v2666
    %v2671 = vmul.f32 %v2670, %v2669
    %v2672 = vmul.f32 %v2666, %v2508
    %v2673 = vadd.f32 %v2671, %v2672
    %2674 = vst [vmem:[#allocation2] sm:$0xff] %v2673
    %2675 = vst [vmem:[%s935] sm:$0xff] %v2673
    %v2676 = vld [vmem:[#allocation2] sm:$0xff]
    %v2677 = vld [vmem:[%s938] sm:$0xff]
    %v2678 = vld [vmem:[%s938 + $0x8] sm:$0xff]
    %v2679 = vld [vmem:[%s938 + $0x10] sm:$0xff]
    %2680 = vmatprep.subr.mxu0 %v1838
    %2681 = vmatpush1.msra.mxu0 %v1837
    %2682 = vmatprep.subr.mxu0 %v1841
    %2683 = vmatpush1.msra.mxu0 %v1840
    %2684 = vmatprep.subr.mxu0 %v1844
    %2685 = vmatpush1.msra.mxu0 %v1843
    %2686 = vmatprep.subr.mxu0 %v1847
    %2687 = vmatpush1.msra.mxu0 %v1846
    %2688 = vmatprep.subr.mxu0 %v1850
    %2689 = vmatpush1.msra.mxu0 %v1849
    %2690 = vmatprep.subr.mxu0 %v1853
    %2691 = vmatpush1.msra.mxu0 %v1852
    %2692 = vmatprep.subr.mxu0 %v1856
    %2693 = vmatpush1.msra.mxu0 %v1855
    %2694 = vmatprep.subr.mxu0 %v1859
    %2695 = vmatpush1.msra.mxu0 %v1858
    %2696 = vmatprep.subr.mxu0 %v1862
    %2697 = vmatpush1.msra.mxu0 %v1861
    %2698 = vmatprep.subr.mxu0 %v1865
    %2699 = vmatpush1.msra.mxu0 %v1864
    %2700 = vmatprep.subr.mxu0 %v1868
    %2701 = vmatpush1.msra.mxu0 %v1867
    %2702 = vmatprep.subr.mxu0 %v1871
    %2703 = vmatpush1.msra.mxu0 %v1870
    %2704 = vmatprep.subr.mxu0 %v1874
    %2705 = vmatpush1.msra.mxu0 %v1873
    %2706 = vmatprep.subr.mxu0 %v1877
    %2707 = vmatpush1.msra.mxu0 %v1876
    %2708 = vmatprep.subr.mxu0 %v1880
    %2709 = vmatpush1.msra.mxu0 %v1879
    %2710 = vmatprep.subr.mxu0 %v1883
    %2711 = vmatpush1.msra.mxu0 %v1882
    %2712 = vmatprep.subr.mxu0 0.0
    %2713 = vmatpush1.msra.mxu0 0.0
    %2714 = vmatprep.subr.mxu0 0.0
    %2715 = vmatpush1.msra.mxu0 0.0
    %2716 = vmatprep.subr.mxu0 0.0
    %2717 = vmatpush1.msra.mxu0 0.0
    %2718 = vmatprep.subr.mxu0 0.0
    %2719 = vmatpush1.msra.mxu0 0.0
    %2720 = vmatprep.subr.mxu0 0.0
    %2721 = vmatpush1.msra.mxu0 0.0
    %2722 = vmatprep.subr.mxu0 0.0
    %2723 = vmatpush1.msra.mxu0 0.0
    %2724 = vmatprep.subr.mxu0 0.0
    %2725 = vmatpush1.msra.mxu0 0.0
    %2726 = vmatprep.subr.mxu0 0.0
    %2727 = vmatpush1.msra.mxu0 0.0
    %2728 = vmatprep.subr.mxu0 0.0
    %2729 = vmatpush1.msra.mxu0 0.0
    %2730 = vmatprep.subr.mxu0 0.0
    %2731 = vmatpush1.msra.mxu0 0.0
    %2732 = vmatprep.subr.mxu0 0.0
    %2733 = vmatpush1.msra.mxu0 0.0
    %2734 = vmatprep.subr.mxu0 0.0
    %2735 = vmatpush1.msra.mxu0 0.0
    %2736 = vmatprep.subr.mxu0 0.0
    %2737 = vmatpush1.msra.mxu0 0.0
    %2738 = vmatprep.subr.mxu0 0.0
    %2739 = vmatpush1.msra.mxu0 0.0
    %2740 = vmatprep.subr.mxu0 0.0
    %2741 = vmatpush1.msra.mxu0 0.0
    %2742 = vmatprep.subr.mxu0 0.0
    %2743 = vmatpush1.msra.mxu0 0.0
    %2744 = vmatprep.mubr.f32.mxu0 0.0
    %2745 = vmatmul.mubr.f32.gmra.mrb[0].mxu0 %v2676
    %v2746 = vpop.f32.mrb[0].mxu0
    %v2747 = vadd.f32 %v2164, %v2746
    %v2748 = vpop.f32.mrb[0].mxu0
    %v2749 = vadd.f32 %v2168, %v2748
    %2750 = vdwg.mxu0
    %2751 = vmatprep.subr.mxu0 0.0
    %2752 = vmatpush1.msra.mxu0 %v1839
    %2753 = vmatprep.subr.mxu0 0.0
    %2754 = vmatpush1.msra.mxu0 %v1842
    %2755 = vmatprep.subr.mxu0 0.0
    %2756 = vmatpush1.msra.mxu0 %v1845
    %2757 = vmatprep.subr.mxu0 0.0
    %2758 = vmatpush1.msra.mxu0 %v1848
    %2759 = vmatprep.subr.mxu0 0.0
    %2760 = vmatpush1.msra.mxu0 %v1851
    %2761 = vmatprep.subr.mxu0 0.0
    %2762 = vmatpush1.msra.mxu0 %v1854
    %2763 = vmatprep.subr.mxu0 0.0
    %2764 = vmatpush1.msra.mxu0 %v1857
    %2765 = vmatprep.subr.mxu0 0.0
    %2766 = vmatpush1.msra.mxu0 %v1860
    %2767 = vmatprep.subr.mxu0 0.0
    %2768 = vmatpush1.msra.mxu0 %v1863
    %2769 = vmatprep.subr.mxu0 0.0
    %2770 = vmatpush1.msra.mxu0 %v1866
    %2771 = vmatprep.subr.mxu0 0.0
    %2772 = vmatpush1.msra.mxu0 %v1869
    %2773 = vmatprep.subr.mxu0 0.0
    %2774 = vmatpush1.msra.mxu0 %v1872
    %2775 = vmatprep.subr.mxu0 0.0
    %2776 = vmatpush1.msra.mxu0 %v1875
    %2777 = vmatprep.subr.mxu0 0.0
    %2778 = vmatpush1.msra.mxu0 %v1878
    %2779 = vmatprep.subr.mxu0 0.0
    %2780 = vmatpush1.msra.mxu0 %v1881
    %2781 = vmatprep.subr.mxu0 0.0
    %2782 = vmatpush1.msra.mxu0 %v1884
    %2783 = vmatprep.subr.mxu0 0.0
    %2784 = vmatpush1.msra.mxu0 0.0
    %2785 = vmatprep.subr.mxu0 0.0
    %2786 = vmatpush1.msra.mxu0 0.0
    %2787 = vmatprep.subr.mxu0 0.0
    %2788 = vmatpush1.msra.mxu0 0.0
    %2789 = vmatprep.subr.mxu0 0.0
    %2790 = vmatpush1.msra.mxu0 0.0
    %2791 = vmatprep.subr.mxu0 0.0
    %2792 = vmatpush1.msra.mxu0 0.0
    %2793 = vmatprep.subr.mxu0 0.0
    %2794 = vmatpush1.msra.mxu0 0.0
    %2795 = vmatprep.subr.mxu0 0.0
    %2796 = vmatpush1.msra.mxu0 0.0
    %2797 = vmatprep.subr.mxu0 0.0
    %2798 = vmatpush1.msra.mxu0 0.0
    %2799 = vmatprep.subr.mxu0 0.0
    %2800 = vmatpush1.msra.mxu0 0.0
    %2801 = vmatprep.subr.mxu0 0.0
    %2802 = vmatpush1.msra.mxu0 0.0
    %2803 = vmatprep.subr.mxu0 0.0
    %2804 = vmatpush1.msra.mxu0 0.0
    %2805 = vmatprep.subr.mxu0 0.0
    %2806 = vmatpush1.msra.mxu0 0.0
    %2807 = vmatprep.subr.mxu0 0.0
    %2808 = vmatpush1.msra.mxu0 0.0
    %2809 = vmatprep.subr.mxu0 0.0
    %2810 = vmatpush1.msra.mxu0 0.0
    %2811 = vmatprep.subr.mxu0 0.0
    %2812 = vmatpush1.msra.mxu0 0.0
    %2813 = vmatprep.subr.mxu0 0.0
    %2814 = vmatpush1.msra.mxu0 0.0
    %2815 = vmatprep.mubr.f32.mxu0 0.0
    %2816 = vmatmul.mubr.f32.gmra.mrb[0].mxu0 %v2676
    %v2817 = vpop.f32.mrb[0].mxu0
    %v2818 = vadd.f32 %v2172, %v2817
    %v2819 = vpop.f32.mrb[0].mxu0
    %2820 = vdwg.mxu0
    %v2821 = vadd.f32 %v2677, %v2747
    %v2822 = vxor.u32 %v2821, 2147483648
    %v2823 = vmul.f32 %v2822, 1.442695
    %v2824 = vpow.pop %v2823
    %v2825 = vadd.f32 %v2824, 1.0
    %v2826 = vrcp.pop %v2825
    %v2827 = vmul.f32 1.0, %v2826
    %v2828 = vadd.f32 %v2678, %v2749
    %v2829 = vxor.u32 %v2828, 2147483648
    %v2830 = vmul.f32 %v2829, 1.442695
    %v2831 = vpow.pop %v2830
    %v2832 = vadd.f32 %v2831, 1.0
    %v2833 = vrcp.pop %v2832
    %v2834 = vmul.f32 1.0, %v2833
    %v2835 = vmul.f32 %v2827, %v2818
    %v2836 = vadd.f32 %v2679, %v2835
    %v2837 = vtanh.pop %v2836
    %v2838 = vsub.f32 1.0, %v2834
    %v2839 = vmul.f32 %v2838, %v2837
    %v2840 = vmul.f32 %v2834, %v2676
    %v2841 = vadd.f32 %v2839, %v2840
    %2842 = vst [vmem:[#allocation2] sm:$0xff] %v2841
    %2843 = vst [vmem:[%s1105] sm:$0xff] %v2841
    %v2844 = vld [vmem:[#allocation2] sm:$0xff]
    %v2845 = vld [vmem:[%s1108] sm:$0xff]
    %v2846 = vld [vmem:[%s1108 + $0x8] sm:$0xff]
    %v2847 = vld [vmem:[%s1108 + $0x10] sm:$0xff]
    %2848 = vmatprep.subr.mxu0 %v1838
    %2849 = vmatpush1.msra.mxu0 %v1837
    %2850 = vmatprep.subr.mxu0 %v1841
    %2851 = vmatpush1.msra.mxu0 %v1840
    %2852 = vmatprep.subr.mxu0 %v1844
    %2853 = vmatpush1.msra.mxu0 %v1843
    %2854 = vmatprep.subr.mxu0 %v1847
    %2855 = vmatpush1.msra.mxu0 %v1846
    %2856 = vmatprep.subr.mxu0 %v1850
    %2857 = vmatpush1.msra.mxu0 %v1849
    %2858 = vmatprep.subr.mxu0 %v1853
    %2859 = vmatpush1.msra.mxu0 %v1852
    %2860 = vmatprep.subr.mxu0 %v1856
    %2861 = vmatpush1.msra.mxu0 %v1855
    %2862 = vmatprep.subr.mxu0 %v1859
    %2863 = vmatpush1.msra.mxu0 %v1858
    %2864 = vmatprep.subr.mxu0 %v1862
    %2865 = vmatpush1.msra.mxu0 %v1861
    %2866 = vmatprep.subr.mxu0 %v1865
    %2867 = vmatpush1.msra.mxu0 %v1864
    %2868 = vmatprep.subr.mxu0 %v1868
    %2869 = vmatpush1.msra.mxu0 %v1867
    %2870 = vmatprep.subr.mxu0 %v1871
    %2871 = vmatpush1.msra.mxu0 %v1870
    %2872 = vmatprep.subr.mxu0 %v1874
    %2873 = vmatpush1.msra.mxu0 %v1873
    %2874 = vmatprep.subr.mxu0 %v1877
    %2875 = vmatpush1.msra.mxu0 %v1876
    %2876 = vmatprep.subr.mxu0 %v1880
    %2877 = vmatpush1.msra.mxu0 %v1879
    %2878 = vmatprep.subr.mxu0 %v1883
    %2879 = vmatpush1.msra.mxu0 %v1882
    %2880 = vmatprep.subr.mxu0 0.0
    %2881 = vmatpush1.msra.mxu0 0.0
    %2882 = vmatprep.subr.mxu0 0.0
    %2883 = vmatpush1.msra.mxu0 0.0
    %2884 = vmatprep.subr.mxu0 0.0
    %2885 = vmatpush1.msra.mxu0 0.0
    %2886 = vmatprep.subr.mxu0 0.0
    %2887 = vmatpush1.msra.mxu0 0.0
    %2888 = vmatprep.subr.mxu0 0.0
    %2889 = vmatpush1.msra.mxu0 0.0
    %2890 = vmatprep.subr.mxu0 0.0
    %2891 = vmatpush1.msra.mxu0 0.0
    %2892 = vmatprep.subr.mxu0 0.0
    %2893 = vmatpush1.msra.mxu0 0.0
    %2894 = vmatprep.subr.mxu0 0.0
    %2895 = vmatpush1.msra.mxu0 0.0
    %2896 = vmatprep.subr.mxu0 0.0
    %2897 = vmatpush1.msra.mxu0 0.0
    %2898 = vmatprep.subr.mxu0 0.0
    %2899 = vmatpush1.msra.mxu0 0.0
    %2900 = vmatprep.subr.mxu0 0.0
    %2901 = vmatpush1.msra.mxu0 0.0
    %2902 = vmatprep.subr.mxu0 0.0
    %2903 = vmatpush1.msra.mxu0 0.0
    %2904 = vmatprep.subr.mxu0 0.0
    %2905 = vmatpush1.msra.mxu0 0.0
    %2906 = vmatprep.subr.mxu0 0.0
    %2907 = vmatpush1.msra.mxu0 0.0
    %2908 = vmatprep.subr.mxu0 0.0
    %2909 = vmatpush1.msra.mxu0 0.0
    %2910 = vmatprep.subr.mxu0 0.0
    %2911 = vmatpush1.msra.mxu0 0.0
    %2912 = vmatprep.mubr.f32.mxu0 0.0
    %2913 = vmatmul.mubr.f32.gmra.mrb[0].mxu0 %v2844
    %v2914 = vpop.f32.mrb[0].mxu0
    %v2915 = vadd.f32 %v2164, %v2914
    %v2916 = vpop.f32.mrb[0].mxu0
    %v2917 = vadd.f32 %v2168, %v2916
    %2918 = vdwg.mxu0
    %2919 = vmatprep.subr.mxu0 0.0
    %2920 = vmatpush1.msra.mxu0 %v1839
    %2921 = vmatprep.subr.mxu0 0.0
    %2922 = vmatpush1.msra.mxu0 %v1842
    %2923 = vmatprep.subr.mxu0 0.0
    %2924 = vmatpush1.msra.mxu0 %v1845
    %2925 = vmatprep.subr.mxu0 0.0
    %2926 = vmatpush1.msra.mxu0 %v1848
    %2927 = vmatprep.subr.mxu0 0.0
    %2928 = vmatpush1.msra.mxu0 %v1851
    %2929 = vmatprep.subr.mxu0 0.0
    %2930 = vmatpush1.msra.mxu0 %v1854
    %2931 = vmatprep.subr.mxu0 0.0
    %2932 = vmatpush1.msra.mxu0 %v1857
    %2933 = vmatprep.subr.mxu0 0.0
    %2934 = vmatpush1.msra.mxu0 %v1860
    %2935 = vmatprep.subr.mxu0 0.0
    %2936 = vmatpush1.msra.mxu0 %v1863
    %2937 = vmatprep.subr.mxu0 0.0
    %2938 = vmatpush1.msra.mxu0 %v1866
    %2939 = vmatprep.subr.mxu0 0.0
    %2940 = vmatpush1.msra.mxu0 %v1869
    %2941 = vmatprep.subr.mxu0 0.0
    %2942 = vmatpush1.msra.mxu0 %v1872
    %2943 = vmatprep.subr.mxu0 0.0
    %2944 = vmatpush1.msra.mxu0 %v1875
    %2945 = vmatprep.subr.mxu0 0.0
    %2946 = vmatpush1.msra.mxu0 %v1878
    %2947 = vmatprep.subr.mxu0 0.0
    %2948 = vmatpush1.msra.mxu0 %v1881
    %2949 = vmatprep.subr.mxu0 0.0
    %2950 = vmatpush1.msra.mxu0 %v1884
    %2951 = vmatprep.subr.mxu0 0.0
    %2952 = vmatpush1.msra.mxu0 0.0
    %2953 = vmatprep.subr.mxu0 0.0
    %2954 = vmatpush1.msra.mxu0 0.0
    %2955 = vmatprep.subr.mxu0 0.0
    %2956 = vmatpush1.msra.mxu0 0.0
    %2957 = vmatprep.subr.mxu0 0.0
    %2958 = vmatpush1.msra.mxu0 0.0
    %2959 = vmatprep.subr.mxu0 0.0
    %2960 = vmatpush1.msra.mxu0 0.0
    %2961 = vmatprep.subr.mxu0 0.0
    %2962 = vmatpush1.msra.mxu0 0.0
    %2963 = vmatprep.subr.mxu0 0.0
    %2964 = vmatpush1.msra.mxu0 0.0
    %2965 = vmatprep.subr.mxu0 0.0
    %2966 = vmatpush1.msra.mxu0 0.0
    %2967 = vmatprep.subr.mxu0 0.0
    %2968 = vmatpush1.msra.mxu0 0.0
    %2969 = vmatprep.subr.mxu0 0.0
    %2970 = vmatpush1.msra.mxu0 0.0
    %2971 = vmatprep.subr.mxu0 0.0
    %2972 = vmatpush1.msra.mxu0 0.0
    %2973 = vmatprep.subr.mxu0 0.0
    %2974 = vmatpush1.msra.mxu0 0.0
    %2975 = vmatprep.subr.mxu0 0.0
    %2976 = vmatpush1.msra.mxu0 0.0
    %2977 = vmatprep.subr.mxu0 0.0
    %2978 = vmatpush1.msra.mxu0 0.0
    %2979 = vmatprep.subr.mxu0 0.0
    %2980 = vmatpush1.msra.mxu0 0.0
    %2981 = vmatprep.subr.mxu0 0.0
    %2982 = vmatpush1.msra.mxu0 0.0
    %2983 = vmatprep.mubr.f32.mxu0 0.0
    %2984 = vmatmul.mubr.f32.gmra.mrb[0].mxu0 %v2844
    %v2985 = vpop.f32.mrb[0].mxu0
    %v2986 = vadd.f32 %v2172, %v2985
    %v2987 = vpop.f32.mrb[0].mxu0
    %2988 = vdwg.mxu0
    %v2989 = vadd.f32 %v2845, %v2915
    %v2990 = vxor.u32 %v2989, 2147483648
    %v2991 = vmul.f32 %v2990, 1.442695
    %v2992 = vpow.pop %v2991
    %v2993 = vadd.f32 %v2992, 1.0
    %v2994 = vrcp.pop %v2993
    %v2995 = vmul.f32 1.0, %v2994
    %v2996 = vadd.f32 %v2846, %v2917
    %v2997 = vxor.u32 %v2996, 2147483648
    %v2998 = vmul.f32 %v2997, 1.442695
    %v2999 = vpow.pop %v2998
    %v3000 = vadd.f32 %v2999, 1.0
    %v3001 = vrcp.pop %v3000
    %v3002 = vmul.f32 1.0, %v3001
    %v3003 = vmul.f32 %v2995, %v2986
    %v3004 = vadd.f32 %v2847, %v3003
    %v3005 = vtanh.pop %v3004
    %v3006 = vsub.f32 1.0, %v3002
    %v3007 = vmul.f32 %v3006, %v3005
    %v3008 = vmul.f32 %v3002, %v2844
    %v3009 = vadd.f32 %v3007, %v3008
    %3010 = vst [vmem:[#allocation2] sm:$0xff] %v3009
    %3011 = vst [vmem:[%s1275] sm:$0xff] %v3009
    %v3012 = vld [vmem:[#allocation2] sm:$0xff]
    %v3013 = vld [vmem:[%s1278] sm:$0xff]
    %v3014 = vld [vmem:[%s1278 + $0x8] sm:$0xff]
    %v3015 = vld [vmem:[%s1278 + $0x10] sm:$0xff]
    %3016 = vmatprep.subr.mxu0 %v1838
    %3017 = vmatpush1.msra.mxu0 %v1837
    %3018 = vmatprep.subr.mxu0 %v1841
    %3019 = vmatpush1.msra.mxu0 %v1840
    %3020 = vmatprep.subr.mxu0 %v1844
    %3021 = vmatpush1.msra.mxu0 %v1843
    %3022 = vmatprep.subr.mxu0 %v1847
    %3023 = vmatpush1.msra.mxu0 %v1846
    %3024 = vmatprep.subr.mxu0 %v1850
    %3025 = vmatpush1.msra.mxu0 %v1849
    %3026 = vmatprep.subr.mxu0 %v1853
    %3027 = vmatpush1.msra.mxu0 %v1852
    %3028 = vmatprep.subr.mxu0 %v1856
    %3029 = vmatpush1.msra.mxu0 %v1855
    %3030 = vmatprep.subr.mxu0 %v1859
    %3031 = vmatpush1.msra.mxu0 %v1858
    %3032 = vmatprep.subr.mxu0 %v1862
    %3033 = vmatpush1.msra.mxu0 %v1861
    %3034 = vmatprep.subr.mxu0 %v1865
    %3035 = vmatpush1.msra.mxu0 %v1864
    %3036 = vmatprep.subr.mxu0 %v1868
    %3037 = vmatpush1.msra.mxu0 %v1867
    %3038 = vmatprep.subr.mxu0 %v1871
    %3039 = vmatpush1.msra.mxu0 %v1870
    %3040 = vmatprep.subr.mxu0 %v1874
    %3041 = vmatpush1.msra.mxu0 %v1873
    %3042 = vmatprep.subr.mxu0 %v1877
    %3043 = vmatpush1.msra.mxu0 %v1876
    %3044 = vmatprep.subr.mxu0 %v1880
    %3045 = vmatpush1.msra.mxu0 %v1879
    %3046 = vmatprep.subr.mxu0 %v1883
    %3047 = vmatpush1.msra.mxu0 %v1882
    %3048 = vmatprep.subr.mxu0 0.0
    %3049 = vmatpush1.msra.mxu0 0.0
    %3050 = vmatprep.subr.mxu0 0.0
    %3051 = vmatpush1.msra.mxu0 0.0
    %3052 = vmatprep.subr.mxu0 0.0
    %3053 = vmatpush1.msra.mxu0 0.0
    %3054 = vmatprep.subr.mxu0 0.0
    %3055 = vmatpush1.msra.mxu0 0.0
    %3056 = vmatprep.subr.mxu0 0.0
    %3057 = vmatpush1.msra.mxu0 0.0
    %3058 = vmatprep.subr.mxu0 0.0
    %3059 = vmatpush1.msra.mxu0 0.0
    %3060 = vmatprep.subr.mxu0 0.0
    %3061 = vmatpush1.msra.mxu0 0.0
    %3062 = vmatprep.subr.mxu0 0.0
    %3063 = vmatpush1.msra.mxu0 0.0
    %3064 = vmatprep.subr.mxu0 0.0
    %3065 = vmatpush1.msra.mxu0 0.0
    %3066 = vmatprep.subr.mxu0 0.0
    %3067 = vmatpush1.msra.mxu0 0.0
    %3068 = vmatprep.subr.mxu0 0.0
    %3069 = vmatpush1.msra.mxu0 0.0
    %3070 = vmatprep.subr.mxu0 0.0
    %3071 = vmatpush1.msra.mxu0 0.0
    %3072 = vmatprep.subr.mxu0 0.0
    %3073 = vmatpush1.msra.mxu0 0.0
    %3074 = vmatprep.subr.mxu0 0.0
    %3075 = vmatpush1.msra.mxu0 0.0
    %3076 = vmatprep.subr.mxu0 0.0
    %3077 = vmatpush1.msra.mxu0 0.0
    %3078 = vmatprep.subr.mxu0 0.0
    %3079 = vmatpush1.msra.mxu0 0.0
    %3080 = vmatprep.mubr.f32.mxu0 0.0
    %3081 = vmatmul.mubr.f32.gmra.mrb[0].mxu0 %v3012
    %v3082 = vpop.f32.mrb[0].mxu0
    %v3083 = vadd.f32 %v2164, %v3082
    %v3084 = vpop.f32.mrb[0].mxu0
    %v3085 = vadd.f32 %v2168, %v3084
    %3086 = vdwg.mxu0
    %3087 = vmatprep.subr.mxu0 0.0
    %3088 = vmatpush1.msra.mxu0 %v1839
    %3089 = vmatprep.subr.mxu0 0.0
    %3090 = vmatpush1.msra.mxu0 %v1842
    %3091 = vmatprep.subr.mxu0 0.0
    %3092 = vmatpush1.msra.mxu0 %v1845
    %3093 = vmatprep.subr.mxu0 0.0
    %3094 = vmatpush1.msra.mxu0 %v1848
    %3095 = vmatprep.subr.mxu0 0.0
    %3096 = vmatpush1.msra.mxu0 %v1851
    %3097 = vmatprep.subr.mxu0 0.0
    %3098 = vmatpush1.msra.mxu0 %v1854
    %3099 = vmatprep.subr.mxu0 0.0
    %3100 = vmatpush1.msra.mxu0 %v1857
    %3101 = vmatprep.subr.mxu0 0.0
    %3102 = vmatpush1.msra.mxu0 %v1860
    %3103 = vmatprep.subr.mxu0 0.0
    %3104 = vmatpush1.msra.mxu0 %v1863
    %3105 = vmatprep.subr.mxu0 0.0
    %3106 = vmatpush1.msra.mxu0 %v1866
    %3107 = vmatprep.subr.mxu0 0.0
    %3108 = vmatpush1.msra.mxu0 %v1869
    %3109 = vmatprep.subr.mxu0 0.0
    %3110 = vmatpush1.msra.mxu0 %v1872
    %3111 = vmatprep.subr.mxu0 0.0
    %3112 = vmatpush1.msra.mxu0 %v1875
    %3113 = vmatprep.subr.mxu0 0.0
    %3114 = vmatpush1.msra.mxu0 %v1878
    %3115 = vmatprep.subr.mxu0 0.0
    %3116 = vmatpush1.msra.mxu0 %v1881
    %3117 = vmatprep.subr.mxu0 0.0
    %3118 = vmatpush1.msra.mxu0 %v1884
    %3119 = vmatprep.subr.mxu0 0.0
    %3120 = vmatpush1.msra.mxu0 0.0
    %3121 = vmatprep.subr.mxu0 0.0
    %3122 = vmatpush1.msra.mxu0 0.0
    %3123 = vmatprep.subr.mxu0 0.0
    %3124 = vmatpush1.msra.mxu0 0.0
    %3125 = vmatprep.subr.mxu0 0.0
    %3126 = vmatpush1.msra.mxu0 0.0
    %3127 = vmatprep.subr.mxu0 0.0
    %3128 = vmatpush1.msra.mxu0 0.0
    %3129 = vmatprep.subr.mxu0 0.0
    %3130 = vmatpush1.msra.mxu0 0.0
    %3131 = vmatprep.subr.mxu0 0.0
    %3132 = vmatpush1.msra.mxu0 0.0
    %3133 = vmatprep.subr.mxu0 0.0
    %3134 = vmatpush1.msra.mxu0 0.0
    %3135 = vmatprep.subr.mxu0 0.0
    %3136 = vmatpush1.msra.mxu0 0.0
    %3137 = vmatprep.subr.mxu0 0.0
    %3138 = vmatpush1.msra.mxu0 0.0
    %3139 = vmatprep.subr.mxu0 0.0
    %3140 = vmatpush1.msra.mxu0 0.0
    %3141 = vmatprep.subr.mxu0 0.0
    %3142 = vmatpush1.msra.mxu0 0.0
    %3143 = vmatprep.subr.mxu0 0.0
    %3144 = vmatpush1.msra.mxu0 0.0
    %3145 = vmatprep.subr.mxu0 0.0
    %3146 = vmatpush1.msra.mxu0 0.0
    %3147 = vmatprep.subr.mxu0 0.0
    %3148 = vmatpush1.msra.mxu0 0.0
    %3149 = vmatprep.subr.mxu0 0.0
    %3150 = vmatpush1.msra.mxu0 0.0
    %3151 = vmatprep.mubr.f32.mxu0 0.0
    %3152 = vmatmul.mubr.f32.gmra.mrb[0].mxu0 %v3012
    %v3153 = vpop.f32.mrb[0].mxu0
    %v3154 = vadd.f32 %v2172, %v3153
    %v3155 = vpop.f32.mrb[0].mxu0
    %3156 = vdwg.mxu0
    %v3157 = vadd.f32 %v3013, %v3083
    %v3158 = vxor.u32 %v3157, 2147483648
    %v3159 = vmul.f32 %v3158, 1.442695
    %v3160 = vpow.pop %v3159
    %v3161 = vadd.f32 %v3160, 1.0
    %v3162 = vrcp.pop %v3161
    %v3163 = vmul.f32 1.0, %v3162
    %v3164 = vadd.f32 %v3014, %v3085
    %v3165 = vxor.u32 %v3164, 2147483648
    %v3166 = vmul.f32 %v3165, 1.442695
    %v3167 = vpow.pop %v3166
    %v3168 = vadd.f32 %v3167, 1.0
    %v3169 = vrcp.pop %v3168
    %v3170 = vmul.f32 1.0, %v3169
    %v3171 = vmul.f32 %v3163, %v3154
    %v3172 = vadd.f32 %v3015, %v3171
    %v3173 = vtanh.pop %v3172
    %v3174 = vsub.f32 1.0, %v3170
    %v3175 = vmul.f32 %v3174, %v3173
    %v3176 = vmul.f32 %v3170, %v3012
    %v3177 = vadd.f32 %v3175, %v3176
    %3178 = vst [vmem:[#allocation2] sm:$0xff] %v3177
    %3179 = vst [vmem:[%s1445] sm:$0xff] %v3177
    %v3180 = vld [vmem:[#allocation2] sm:$0xff]
    %v3181 = vld [vmem:[%s1448] sm:$0xff]
    %v3182 = vld [vmem:[%s1448 + $0x8] sm:$0xff]
    %v3183 = vld [vmem:[%s1448 + $0x10] sm:$0xff]
    %3184 = vmatprep.subr.mxu0 %v1838
    %3185 = vmatpush1.msra.mxu0 %v1837
    %3186 = vmatprep.subr.mxu0 %v1841
    %3187 = vmatpush1.msra.mxu0 %v1840
    %3188 = vmatprep.subr.mxu0 %v1844
    %3189 = vmatpush1.msra.mxu0 %v1843
    %3190 = vmatprep.subr.mxu0 %v1847
    %3191 = vmatpush1.msra.mxu0 %v1846
    %3192 = vmatprep.subr.mxu0 %v1850
    %3193 = vmatpush1.msra.mxu0 %v1849
    %3194 = vmatprep.subr.mxu0 %v1853
    %3195 = vmatpush1.msra.mxu0 %v1852
    %3196 = vmatprep.subr.mxu0 %v1856
    %3197 = vmatpush1.msra.mxu0 %v1855
    %3198 = vmatprep.subr.mxu0 %v1859
    %3199 = vmatpush1.msra.mxu0 %v1858
    %3200 = vmatprep.subr.mxu0 %v1862
    %3201 = vmatpush1.msra.mxu0 %v1861
    %3202 = vmatprep.subr.mxu0 %v1865
    %3203 = vmatpush1.msra.mxu0 %v1864
    %3204 = vmatprep.subr.mxu0 %v1868
    %3205 = vmatpush1.msra.mxu0 %v1867
    %3206 = vmatprep.subr.mxu0 %v1871
    %3207 = vmatpush1.msra.mxu0 %v1870
    %3208 = vmatprep.subr.mxu0 %v1874
    %3209 = vmatpush1.msra.mxu0 %v1873
    %3210 = vmatprep.subr.mxu0 %v1877
    %3211 = vmatpush1.msra.mxu0 %v1876
    %3212 = vmatprep.subr.mxu0 %v1880
    %3213 = vmatpush1.msra.mxu0 %v1879
    %3214 = vmatprep.subr.mxu0 %v1883
    %3215 = vmatpush1.msra.mxu0 %v1882
    %3216 = vmatprep.subr.mxu0 0.0
    %3217 = vmatpush1.msra.mxu0 0.0
    %3218 = vmatprep.subr.mxu0 0.0
    %3219 = vmatpush1.msra.mxu0 0.0
    %3220 = vmatprep.subr.mxu0 0.0
    %3221 = vmatpush1.msra.mxu0 0.0
    %3222 = vmatprep.subr.mxu0 0.0
    %3223 = vmatpush1.msra.mxu0 0.0
    %3224 = vmatprep.subr.mxu0 0.0
    %3225 = vmatpush1.msra.mxu0 0.0
    %3226 = vmatprep.subr.mxu0 0.0
    %3227 = vmatpush1.msra.mxu0 0.0
    %3228 = vmatprep.subr.mxu0 0.0
    %3229 = vmatpush1.msra.mxu0 0.0
    %3230 = vmatprep.subr.mxu0 0.0
    %3231 = vmatpush1.msra.mxu0 0.0
    %3232 = vmatprep.subr.mxu0 0.0
    %3233 = vmatpush1.msra.mxu0 0.0
    %3234 = vmatprep.subr.mxu0 0.0
    %3235 = vmatpush1.msra.mxu0 0.0
    %3236 = vmatprep.subr.mxu0 0.0
    %3237 = vmatpush1.msra.mxu0 0.0
    %3238 = vmatprep.subr.mxu0 0.0
    %3239 = vmatpush1.msra.mxu0 0.0
    %3240 = vmatprep.subr.mxu0 0.0
    %3241 = vmatpush1.msra.mxu0 0.0
    %3242 = vmatprep.subr.mxu0 0.0
    %3243 = vmatpush1.msra.mxu0 0.0
    %3244 = vmatprep.subr.mxu0 0.0
    %3245 = vmatpush1.msra.mxu0 0.0
    %3246 = vmatprep.subr.mxu0 0.0
    %3247 = vmatpush1.msra.mxu0 0.0
    %3248 = vmatprep.mubr.f32.mxu0 0.0
    %3249 = vmatmul.mubr.f32.gmra.mrb[0].mxu0 %v3180
    %v3250 = vpop.f32.mrb[0].mxu0
    %v3251 = vadd.f32 %v2164, %v3250
    %v3252 = vpop.f32.mrb[0].mxu0
    %v3253 = vadd.f32 %v2168, %v3252
    %3254 = vdwg.mxu0
    %3255 = vmatprep.subr.mxu0 0.0
    %3256 = vmatpush1.msra.mxu0 %v1839
    %3257 = vmatprep.subr.mxu0 0.0
    %3258 = vmatpush1.msra.mxu0 %v1842
    %3259 = vmatprep.subr.mxu0 0.0
    %3260 = vmatpush1.msra.mxu0 %v1845
    %3261 = vmatprep.subr.mxu0 0.0
    %3262 = vmatpush1.msra.mxu0 %v1848
    %3263 = vmatprep.subr.mxu0 0.0
    %3264 = vmatpush1.msra.mxu0 %v1851
    %3265 = vmatprep.subr.mxu0 0.0
    %3266 = vmatpush1.msra.mxu0 %v1854
    %3267 = vmatprep.subr.mxu0 0.0
    %3268 = vmatpush1.msra.mxu0 %v1857
    %3269 = vmatprep.subr.mxu0 0.0
    %3270 = vmatpush1.msra.mxu0 %v1860
    %3271 = vmatprep.subr.mxu0 0.0
    %3272 = vmatpush1.msra.mxu0 %v1863
    %3273 = vmatprep.subr.mxu0 0.0
    %3274 = vmatpush1.msra.mxu0 %v1866
    %3275 = vmatprep.subr.mxu0 0.0
    %3276 = vmatpush1.msra.mxu0 %v1869
    %3277 = vmatprep.subr.mxu0 0.0
    %3278 = vmatpush1.msra.mxu0 %v1872
    %3279 = vmatprep.subr.mxu0 0.0
    %3280 = vmatpush1.msra.mxu0 %v1875
    %3281 = vmatprep.subr.mxu0 0.0
    %3282 = vmatpush1.msra.mxu0 %v1878
    %3283 = vmatprep.subr.mxu0 0.0
    %3284 = vmatpush1.msra.mxu0 %v1881
    %3285 = vmatprep.subr.mxu0 0.0
    %3286 = vmatpush1.msra.mxu0 %v1884
    %3287 = vmatprep.subr.mxu0 0.0
    %3288 = vmatpush1.msra.mxu0 0.0
    %3289 = vmatprep.subr.mxu0 0.0
    %3290 = vmatpush1.msra.mxu0 0.0
    %3291 = vmatprep.subr.mxu0 0.0
    %3292 = vmatpush1.msra.mxu0 0.0
    %3293 = vmatprep.subr.mxu0 0.0
    %3294 = vmatpush1.msra.mxu0 0.0
    %3295 = vmatprep.subr.mxu0 0.0
    %3296 = vmatpush1.msra.mxu0 0.0
    %3297 = vmatprep.subr.mxu0 0.0
    %3298 = vmatpush1.msra.mxu0 0.0
    %3299 = vmatprep.subr.mxu0 0.0
    %3300 = vmatpush1.msra.mxu0 0.0
    %3301 = vmatprep.subr.mxu0 0.0
    %3302 = vmatpush1.msra.mxu0 0.0
    %3303 = vmatprep.subr.mxu0 0.0
    %3304 = vmatpush1.msra.mxu0 0.0
    %3305 = vmatprep.subr.mxu0 0.0
    %3306 = vmatpush1.msra.mxu0 0.0
    %3307 = vmatprep.subr.mxu0 0.0
    %3308 = vmatpush1.msra.mxu0 0.0
    %3309 = vmatprep.subr.mxu0 0.0
    %3310 = vmatpush1.msra.mxu0 0.0
    %3311 = vmatprep.subr.mxu0 0.0
    %3312 = vmatpush1.msra.mxu0 0.0
    %3313 = vmatprep.subr.mxu0 0.0
    %3314 = vmatpush1.msra.mxu0 0.0
    %3315 = vmatprep.subr.mxu0 0.0
    %3316 = vmatpush1.msra.mxu0 0.0
    %3317 = vmatprep.subr.mxu0 0.0
    %3318 = vmatpush1.msra.mxu0 0.0
    %3319 = vmatprep.mubr.f32.mxu0 0.0
    %3320 = vmatmul.mubr.f32.gmra.mrb[0].mxu0 %v3180
    %v3321 = vpop.f32.mrb[0].mxu0
    %v3322 = vadd.f32 %v2172, %v3321
    %v3323 = vpop.f32.mrb[0].mxu0
    %3324 = vdwg.mxu0
    %v3325 = vadd.f32 %v3181, %v3251
    %v3326 = vxor.u32 %v3325, 2147483648
    %v3327 = vmul.f32 %v3326, 1.442695
    %v3328 = vpow.pop %v3327
    %v3329 = vadd.f32 %v3328, 1.0
    %v3330 = vrcp.pop %v3329
    %v3331 = vmul.f32 1.0, %v3330
    %v3332 = vadd.f32 %v3182, %v3253
    %v3333 = vxor.u32 %v3332, 2147483648
    %v3334 = vmul.f32 %v3333, 1.442695
    %v3335 = vpow.pop %v3334
    %v3336 = vadd.f32 %v3335, 1.0
    %v3337 = vrcp.pop %v3336
    %v3338 = vmul.f32 1.0, %v3337
    %v3339 = vmul.f32 %v3331, %v3322
    %v3340 = vadd.f32 %v3183, %v3339
    %v3341 = vtanh.pop %v3340
    %v3342 = vsub.f32 1.0, %v3338
    %v3343 = vmul.f32 %v3342, %v3341
    %v3344 = vmul.f32 %v3338, %v3180
    %v3345 = vadd.f32 %v3343, %v3344
    %3346 = vst [vmem:[#allocation2] sm:$0xff] %v3345
    %3347 = vst [vmem:[%s1615] sm:$0xff] %v3345
    %v3348 = vld [vmem:[#allocation2] sm:$0xff]
    %v3349 = vld [vmem:[%s1618] sm:$0xff]
    %v3350 = vld [vmem:[%s1618 + $0x8] sm:$0xff]
    %v3351 = vld [vmem:[%s1618 + $0x10] sm:$0xff]
    %3352 = vmatprep.subr.mxu0 %v1838
    %3353 = vmatpush1.msra.mxu0 %v1837
    %3354 = vmatprep.subr.mxu0 %v1841
    %3355 = vmatpush1.msra.mxu0 %v1840
    %3356 = vmatprep.subr.mxu0 %v1844
    %3357 = vmatpush1.msra.mxu0 %v1843
    %3358 = vmatprep.subr.mxu0 %v1847
    %3359 = vmatpush1.msra.mxu0 %v1846
    %3360 = vmatprep.subr.mxu0 %v1850
    %3361 = vmatpush1.msra.mxu0 %v1849
    %3362 = vmatprep.subr.mxu0 %v1853
    %3363 = vmatpush1.msra.mxu0 %v1852
    %3364 = vmatprep.subr.mxu0 %v1856
    %3365 = vmatpush1.msra.mxu0 %v1855
    %3366 = vmatprep.subr.mxu0 %v1859
    %3367 = vmatpush1.msra.mxu0 %v1858
    %3368 = vmatprep.subr.mxu0 %v1862
    %3369 = vmatpush1.msra.mxu0 %v1861
    %3370 = vmatprep.subr.mxu0 %v1865
    %3371 = vmatpush1.msra.mxu0 %v1864
    %3372 = vmatprep.subr.mxu0 %v1868
    %3373 = vmatpush1.msra.mxu0 %v1867
    %3374 = vmatprep.subr.mxu0 %v1871
    %3375 = vmatpush1.msra.mxu0 %v1870
    %3376 = vmatprep.subr.mxu0 %v1874
    %3377 = vmatpush1.msra.mxu0 %v1873
    %3378 = vmatprep.subr.mxu0 %v1877
    %3379 = vmatpush1.msra.mxu0 %v1876
    %3380 = vmatprep.subr.mxu0 %v1880
    %3381 = vmatpush1.msra.mxu0 %v1879
    %3382 = vmatprep.subr.mxu0 %v1883
    %3383 = vmatpush1.msra.mxu0 %v1882
    %3384 = vmatprep.subr.mxu0 0.0
    %3385 = vmatpush1.msra.mxu0 0.0
    %3386 = vmatprep.subr.mxu0 0.0
    %3387 = vmatpush1.msra.mxu0 0.0
    %3388 = vmatprep.subr.mxu0 0.0
    %3389 = vmatpush1.msra.mxu0 0.0
    %3390 = vmatprep.subr.mxu0 0.0
    %3391 = vmatpush1.msra.mxu0 0.0
    %3392 = vmatprep.subr.mxu0 0.0
    %3393 = vmatpush1.msra.mxu0 0.0
    %3394 = vmatprep.subr.mxu0 0.0
    %3395 = vmatpush1.msra.mxu0 0.0
    %3396 = vmatprep.subr.mxu0 0.0
    %3397 = vmatpush1.msra.mxu0 0.0
    %3398 = vmatprep.subr.mxu0 0.0
    %3399 = vmatpush1.msra.mxu0 0.0
    %3400 = vmatprep.subr.mxu0 0.0
    %3401 = vmatpush1.msra.mxu0 0.0
    %3402 = vmatprep.subr.mxu0 0.0
    %3403 = vmatpush1.msra.mxu0 0.0
    %3404 = vmatprep.subr.mxu0 0.0
    %3405 = vmatpush1.msra.mxu0 0.0
    %3406 = vmatprep.subr.mxu0 0.0
    %3407 = vmatpush1.msra.mxu0 0.0
    %3408 = vmatprep.subr.mxu0 0.0
    %3409 = vmatpush1.msra.mxu0 0.0
    %3410 = vmatprep.subr.mxu0 0.0
    %3411 = vmatpush1.msra.mxu0 0.0
    %3412 = vmatprep.subr.mxu0 0.0
    %3413 = vmatpush1.msra.mxu0 0.0
    %3414 = vmatprep.subr.mxu0 0.0
    %3415 = vmatpush1.msra.mxu0 0.0
    %3416 = vmatprep.mubr.f32.mxu0 0.0
    %3417 = vmatmul.mubr.f32.gmra.mrb[0].mxu0 %v3348
    %v3418 = vpop.f32.mrb[0].mxu0
    %v3419 = vadd.f32 %v2164, %v3418
    %v3420 = vpop.f32.mrb[0].mxu0
    %v3421 = vadd.f32 %v2168, %v3420
    %3422 = vdwg.mxu0
    %3423 = vmatprep.subr.mxu0 0.0
    %3424 = vmatpush1.msra.mxu0 %v1839
    %3425 = vmatprep.subr.mxu0 0.0
    %3426 = vmatpush1.msra.mxu0 %v1842
    %3427 = vmatprep.subr.mxu0 0.0
    %3428 = vmatpush1.msra.mxu0 %v1845
    %3429 = vmatprep.subr.mxu0 0.0
    %3430 = vmatpush1.msra.mxu0 %v1848
    %3431 = vmatprep.subr.mxu0 0.0
    %3432 = vmatpush1.msra.mxu0 %v1851
    %3433 = vmatprep.subr.mxu0 0.0
    %3434 = vmatpush1.msra.mxu0 %v1854
    %3435 = vmatprep.subr.mxu0 0.0
    %3436 = vmatpush1.msra.mxu0 %v1857
    %3437 = vmatprep.subr.mxu0 0.0
    %3438 = vmatpush1.msra.mxu0 %v1860
    %3439 = vmatprep.subr.mxu0 0.0
    %3440 = vmatpush1.msra.mxu0 %v1863
    %3441 = vmatprep.subr.mxu0 0.0
    %3442 = vmatpush1.msra.mxu0 %v1866
    %3443 = vmatprep.subr.mxu0 0.0
    %3444 = vmatpush1.msra.mxu0 %v1869
    %3445 = vmatprep.subr.mxu0 0.0
    %3446 = vmatpush1.msra.mxu0 %v1872
    %3447 = vmatprep.subr.mxu0 0.0
    %3448 = vmatpush1.msra.mxu0 %v1875
    %3449 = vmatprep.subr.mxu0 0.0
    %3450 = vmatpush1.msra.mxu0 %v1878
    %3451 = vmatprep.subr.mxu0 0.0
    %3452 = vmatpush1.msra.mxu0 %v1881
    %3453 = vmatprep.subr.mxu0 0.0
    %3454 = vmatpush1.msra.mxu0 %v1884
    %3455 = vmatprep.subr.mxu0 0.0
    %3456 = vmatpush1.msra.mxu0 0.0
    %3457 = vmatprep.subr.mxu0 0.0
    %3458 = vmatpush1.msra.mxu0 0.0
    %3459 = vmatprep.subr.mxu0 0.0
    %3460 = vmatpush1.msra.mxu0 0.0
    %3461 = vmatprep.subr.mxu0 0.0
    %3462 = vmatpush1.msra.mxu0 0.0
    %3463 = vmatprep.subr.mxu0 0.0
    %3464 = vmatpush1.msra.mxu0 0.0
    %3465 = vmatprep.subr.mxu0 0.0
    %3466 = vmatpush1.msra.mxu0 0.0
    %3467 = vmatprep.subr.mxu0 0.0
    %3468 = vmatpush1.msra.mxu0 0.0
    %3469 = vmatprep.subr.mxu0 0.0
    %3470 = vmatpush1.msra.mxu0 0.0
    %3471 = vmatprep.subr.mxu0 0.0
    %3472 = vmatpush1.msra.mxu0 0.0
    %3473 = vmatprep.subr.mxu0 0.0
    %3474 = vmatpush1.msra.mxu0 0.0
    %3475 = vmatprep.subr.mxu0 0.0
    %3476 = vmatpush1.msra.mxu0 0.0
    %3477 = vmatprep.subr.mxu0 0.0
    %3478 = vmatpush1.msra.mxu0 0.0
    %3479 = vmatprep.subr.mxu0 0.0
    %3480 = vmatpush1.msra.mxu0 0.0
    %3481 = vmatprep.subr.mxu0 0.0
    %3482 = vmatpush1.msra.mxu0 0.0
    %3483 = vmatprep.subr.mxu0 0.0
    %3484 = vmatpush1.msra.mxu0 0.0
    %3485 = vmatprep.subr.mxu0 0.0
    %3486 = vmatpush1.msra.mxu0 0.0
    %3487 = vmatprep.mubr.f32.mxu0 0.0
    %3488 = vmatmul.mubr.f32.gmra.mrb[0].mxu0 %v3348
    %v3489 = vpop.f32.mrb[0].mxu0
    %v3490 = vadd.f32 %v2172, %v3489
    %v3491 = vpop.f32.mrb[0].mxu0
    %3492 = vdwg.mxu0
    %v3493 = vadd.f32 %v3349, %v3419
    %v3494 = vxor.u32 %v3493, 2147483648
    %v3495 = vmul.f32 %v3494, 1.442695
    %v3496 = vpow.pop %v3495
    %v3497 = vadd.f32 %v3496, 1.0
    %v3498 = vrcp.pop %v3497
    %v3499 = vmul.f32 1.0, %v3498
    %v3500 = vadd.f32 %v3350, %v3421
    %v3501 = vxor.u32 %v3500, 2147483648
    %v3502 = vmul.f32 %v3501, 1.442695
    %v3503 = vpow.pop %v3502
    %v3504 = vadd.f32 %v3503, 1.0
    %v3505 = vrcp.pop %v3504
    %v3506 = vmul.f32 1.0, %v3505
    %v3507 = vmul.f32 %v3499, %v3490
    %v3508 = vadd.f32 %v3351, %v3507
    %v3509 = vtanh.pop %v3508
    %v3510 = vsub.f32 1.0, %v3506
    %v3511 = vmul.f32 %v3510, %v3509
    %v3512 = vmul.f32 %v3506, %v3348
    %v3513 = vadd.f32 %v3511, %v3512
    %3514 = vst [vmem:[#allocation2] sm:$0xff] %v3513
    %3515 = vst [vmem:[%s1785] sm:$0xff] %v3513
    // Predicated region
    $region30: #{_gru_apply.1} parent=1 // pred_check
      _
    $region31: #{_gru_apply.1} parent=1 // pred_check_branch
      %3517 = sbr.rel (0) target = $region33
    $region32: #{_gru_apply.1} parent=1 // pred_region
      _
    $region33: #{_gru_apply.1} parent=1 // pred_fallthru
      _
    // Predicated region
    $region34: #{_gru_apply.1} parent=1 // pred_check
      _
    $region35: #{_gru_apply.1} parent=1 // pred_check_branch
      %3519 = sbr.rel (0) target = $region37
    $region36: #{_gru_apply.1} parent=1 // pred_region
      _
    $region37: #{_gru_apply.1} parent=1 // pred_fallthru
      _
    %3520 = vsyncpa [#allocation5], 1
    %3521 = vsyncpa [#allocation7], 1

</llo_original>
